<compile_context>
chip_gen: v6e
topology: v6e:2x2x1
jax: 0.10.0
libtpu: 0.0.40
codegen_flags: <defaults>
</compile_context>

<pallas_src>
import functools

import jax
import jax.numpy as jnp
from jax.experimental import pallas as pl
from jax.experimental.pallas import tpu as pltpu


# ----------------------------------------------------------------------------
# Fused full-stack encoder kernel: all layers, one grid step per batch block
# ----------------------------------------------------------------------------
def _layernorm(v, g, b, eps):
    mu = jnp.mean(v, axis=-1, keepdims=True)
    var = jnp.mean(jnp.square(v - mu), axis=-1, keepdims=True)
    return (v - mu) * jax.lax.rsqrt(var + eps) * g + b


def _stack_kernel(x_ref, wqkv_ref, bqkv_ref, wo_ref, bo_ref,
                  g1_ref, b1_ref, w1_ref, bf1_ref, w2_ref, bf2_ref,
                  g2_ref, b2_ref, o_ref, *, num_layers, nhead, seq_len, eps):
    S = seq_len
    M, D = x_ref.shape                       # M = Bb * S rows (lane-dense, D = 128)
    Bb = M // S
    Dh = D // nhead

    x = x_ref[...].astype(jnp.float32)       # residual stream stays f32 in-register

    for li in range(num_layers):             # static loop over stacked layer weights
        wqkv = wqkv_ref[li]                  # (D, 3D) bf16; 1/sqrt(Dh) folded into Q cols
        wo = wo_ref[li]                      # (D, D)  bf16

        # --- self-attention block (post-norm) ---
        qkv = jnp.dot(x.astype(jnp.bfloat16), wqkv,
                      preferred_element_type=jnp.float32) + bqkv_ref[li]    # (M, 3D) f32

        attn = None
        for h in range(nhead):               # H small, static loop
            c0 = h * Dh
            ctx_rows = []
            for b in range(Bb):              # attention is per batch element
                r0 = b * S
                q = qkv[r0:r0 + S, c0:c0 + Dh].astype(jnp.bfloat16)          # (S, Dh)
                k = qkv[r0:r0 + S, D + c0:D + c0 + Dh].astype(jnp.bfloat16)
                v = qkv[r0:r0 + S, 2 * D + c0:2 * D + c0 + Dh].astype(jnp.bfloat16)
                # q @ k^T without an explicit transpose (contract last dims)
                s = jax.lax.dot_general(q, k, (((1,), (1,)), ((), ())),
                                        preferred_element_type=jnp.float32)  # (S, S)
                s = s - jnp.max(s, axis=-1, keepdims=True)
                p = jnp.exp(s)
                p = p / jnp.sum(p, axis=-1, keepdims=True)                   # exact softmax
                ctx_rows.append(jnp.dot(p.astype(jnp.bfloat16), v,
                                        preferred_element_type=jnp.float32))  # (S, Dh)
            ctx = ctx_rows[0] if Bb == 1 else jnp.concatenate(ctx_rows, axis=0)  # (M, Dh)
            # head merge via out_proj accumulation: no lane-wise concat of 32-lane pieces
            contrib = jnp.dot(ctx.astype(jnp.bfloat16), wo[c0:c0 + Dh, :],
                              preferred_element_type=jnp.float32)             # (M, D)
            attn = contrib if attn is None else attn + contrib
        attn = attn + bo_ref[li]
        h1 = _layernorm(x + attn, g1_ref[li], b1_ref[li], eps)               # (M, D)

        # --- feed-forward block (post-norm, ReLU) ---
        ff = jnp.dot(h1.astype(jnp.bfloat16), w1_ref[li],
                     preferred_element_type=jnp.float32) + bf1_ref[li]
        ff = jnp.maximum(ff, 0.0)
        ff = jnp.dot(ff.astype(jnp.bfloat16), w2_ref[li],
                     preferred_element_type=jnp.float32) + bf2_ref[li]
        x = _layernorm(h1 + ff, g2_ref[li], b2_ref[li], eps)

    o_ref[...] = x.astype(o_ref.dtype)       # bf16 write (halves HBM traffic to lm_head)


def _pick_block_batch(B, S, *, target_rows=256, min_grid=2):
    """Block Bb batch elements so Bb*S approaches the MXU row count, but keep at
    least `min_grid` grid steps (when B allows) so both v7x TensorCores get work."""
    bb = max(1, min(B, max(1, target_rows // max(S, 1))))
    while bb > 1 and (B // bb) < min_grid:
        bb -= 1
    while B % bb:
        bb -= 1
    return bb


def transformer_stack(x2d, stacked, *, nhead, seq_len, block_batch, eps=1e-5):
    """All encoder layers fused.  x2d: (B*S, D) f32 -> (B*S, D) bf16."""
    BS, D = x2d.shape
    Mblk = block_batch * seq_len
    L = stacked["wqkv"].shape[0]

    def full(arr):
        shp = arr.shape
        return pl.BlockSpec(shp, lambda i, _s=shp: (0,) * len(_s))

    row = pl.BlockSpec((Mblk, D), lambda i: (i, 0))

    # VMEM budget from actual block sizes (weights double-buffered by default).
    # TODO(synk): at realistic D/dff sizes, mark the constant-index weight specs with
    # pipeline_mode=pl.Buffered(1) to single-buffer them (matters on v7x's 64 MiB VMEM).
    keys = ("wqkv", "bqkv", "wo", "bo", "g1", "b1", "w1", "bf1", "w2", "bf2", "g2", "b2")
    w_bytes = sum(int(stacked[k].size) * stacked[k].dtype.itemsize for k in keys)
    act_bytes = 2 * (Mblk * D * 4 + Mblk * D * 2)          # double-buffered in/out blocks
    vmem = int(min(96 * 1024 * 1024,
                   max(16 * 1024 * 1024, 2 * w_bytes + act_bytes + (8 << 20))))

    kernel = functools.partial(_stack_kernel, num_layers=L, nhead=nhead,
                               seq_len=seq_len, eps=eps)
    return pl.pallas_call(
        kernel,
        out_shape=jax.ShapeDtypeStruct((BS, D), jnp.bfloat16),
        grid=(BS // Mblk,),
        in_specs=[row] + [full(stacked[k]) for k in keys],
        out_specs=row,
        compiler_params=pltpu.CompilerParams(
            dimension_semantics=("parallel",),
            vmem_limit_bytes=vmem),
    )(x2d, *[stacked[k] for k in keys])


# ----------------------------------------------------------------------------
# Tiled lm_head: grid over (row tiles, vocab tiles), vocab innermost, bf16 MXU
# ----------------------------------------------------------------------------
def _lm_head_kernel(x_ref, w_ref, b_ref, o_ref):
    y = jnp.dot(x_ref[...].astype(jnp.bfloat16), w_ref[...],
                preferred_element_type=jnp.float32) + b_ref[...]
    o_ref[...] = y.astype(o_ref.dtype)


def _pick_tile(n, pref, align):
    if n <= pref:
        return n
    t = pref - (pref % align)
    while t >= align and n % t:
        t -= align
    return t if t >= align and n % t == 0 else n


def lm_head(x, w, b, *, tm=512, tn=2048):
    """logits = x @ w + b.  x:(M,D) bf16/f32, w:(D,V) bf16, b:(V,) f32 -> (M,V) f32."""
    M, K = x.shape
    N = w.shape[1]
    tm = _pick_tile(M, tm, 8)
    tn = _pick_tile(N, tn, 128)
    blk_bytes = (tm * K * x.dtype.itemsize + K * tn * w.dtype.itemsize
                 + tn * 4 + tm * tn * 4)
    vmem = int(min(96 * 1024 * 1024, max(16 * 1024 * 1024, 2 * blk_bytes + (4 << 20))))
    return pl.pallas_call(
        _lm_head_kernel,
        out_shape=jax.ShapeDtypeStruct((M, N), jnp.float32),
        grid=(M // tm, N // tn),   # vocab axis innermost: x block stays resident in VMEM
        in_specs=[
            pl.BlockSpec((tm, K), lambda i, j: (i, 0)),
            pl.BlockSpec((K, tn), lambda i, j: (0, j)),
            pl.BlockSpec((1, tn), lambda i, j: (0, j)),
        ],
        out_specs=pl.BlockSpec((tm, tn), lambda i, j: (i, j)),
        compiler_params=pltpu.CompilerParams(
            dimension_semantics=("parallel", "parallel"),
            vmem_limit_bytes=vmem),
    )(x, w, b.reshape(1, N))


# ----------------------------------------------------------------------------
# Model: parameters + forward
# ----------------------------------------------------------------------------
def init_params(key, d_model, nhead, num_layers, vocab_size, max_seq_len, dff):
    def nrm(k, shape, dtype=jnp.float32):
        return (0.02 * jax.random.normal(k, shape, dtype=jnp.float32)).astype(dtype)

    keys = jax.random.split(key, 3 + num_layers)
    params = {
        "token_emb": nrm(keys[0], (vocab_size, d_model)),
        "pos_emb": nrm(keys[1], (max_seq_len, d_model)),
        # matmul weights stored in bf16 (MXU inputs); biases / LN params stay f32
        "head_w": nrm(keys[2], (d_model, vocab_size), jnp.bfloat16),
        "head_b": jnp.zeros((vocab_size,), jnp.float32),
        "layers": [],
    }
    for li in range(num_layers):
        lk = jax.random.split(keys[3 + li], 4)
        params["layers"].append({
            "in_proj_w": nrm(lk[0], (d_model, 3 * d_model), jnp.bfloat16),
            "in_proj_b": jnp.zeros((3 * d_model,), jnp.float32),
            "out_proj_w": nrm(lk[1], (d_model, d_model), jnp.bfloat16),
            "out_proj_b": jnp.zeros((d_model,), jnp.float32),
            "ln1_g": jnp.ones((d_model,), jnp.float32),
            "ln1_b": jnp.zeros((d_model,), jnp.float32),
            "lin1_w": nrm(lk[2], (d_model, dff), jnp.bfloat16),
            "lin1_b": jnp.zeros((dff,), jnp.float32),
            "lin2_w": nrm(lk[3], (dff, d_model), jnp.bfloat16),
            "lin2_b": jnp.zeros((d_model,), jnp.float32),
            "ln2_g": jnp.ones((d_model,), jnp.float32),
            "ln2_b": jnp.zeros((d_model,), jnp.float32),
        })
    return params


def _prepare_stacked(params, cfg):
    """Stack per-layer weights along a leading L axis and fold 1/sqrt(Dh) into Q."""
    D = cfg["d_model"]
    Dh = D // cfg["nhead"]
    scale = 1.0 / (Dh ** 0.5)
    layers = params["layers"]

    def stack(k):
        return jnp.stack([l[k] for l in layers], axis=0)

    wqkv = stack("in_proj_w").astype(jnp.float32)
    bqkv = stack("in_proj_b").astype(jnp.float32)
    wqkv = wqkv.at[:, :, :D].multiply(scale)        # fold attention scale into Q cols
    bqkv = bqkv.at[:, :D].multiply(scale)
    return {
        "wqkv": wqkv.astype(jnp.bfloat16),          # (L, D, 3D)
        "bqkv": bqkv[:, None, :],                   # (L, 1, 3D) f32
        "wo": stack("out_proj_w"),                  # (L, D, D) bf16
        "bo": stack("out_proj_b")[:, None, :],
        "g1": stack("ln1_g")[:, None, :],
        "b1": stack("ln1_b")[:, None, :],
        "w1": stack("lin1_w"),                      # (L, D, dff) bf16
        "bf1": stack("lin1_b")[:, None, :],
        "w2": stack("lin2_w"),                      # (L, dff, D) bf16
        "bf2": stack("lin2_b")[:, None, :],
        "g2": stack("ln2_g")[:, None, :],
        "b2": stack("ln2_b")[:, None, :],
    }


def simple_transformer_forward(input_ids, params, cfg, kv_cache=None):
    B, S = input_ids.shape
    D = cfg["d_model"]
    H = cfg["nhead"]

    # embeddings (gather = glue, stays in plain JAX)
    positions = jnp.arange(S)
    x = jnp.take(params["token_emb"], input_ids, axis=0) \
        + jnp.take(params["pos_emb"], positions, axis=0)[None, :, :]      # (B, S, D) f32

    # nn.TransformerEncoder (post-norm layers); transpose(0,1) is a layout no-op here.
    stacked = _prepare_stacked(params, cfg)
    bb = _pick_block_batch(B, S)
    y = transformer_stack(x.reshape(B * S, D), stacked,
                          nhead=H, seq_len=S, block_batch=bb)             # (B*S, D) bf16

    logits = lm_head(y, params["head_w"], params["head_b"])               # (B*S, V) f32
    logits = logits.reshape(B, S, cfg["vocab_size"])
    return logits, kv_cache


# ----------------------------------------------------------------------------
# main
# ----------------------------------------------------------------------------
if __name__ == "__main__":
    cfg = dict(d_model=128, nhead=4, num_layers=2,
               vocab_size=256, max_seq_len=16, dff=256)
    B, S = 2, 8

    key = jax.random.PRNGKey(0)
    pkey, ikey = jax.random.split(key)
    params = init_params(pkey, **cfg)
    input_ids = jax.random.randint(ikey, (B, S), 0, cfg["vocab_size"], dtype=jnp.int32)

    logits, kv_cache = simple_transformer_forward(input_ids, params, cfg, kv_cache=None)
    jax.block_until_ready(logits)
    assert logits.shape == (B, S, cfg["vocab_size"])
    assert kv_cache is None
    print("KERNEL_OK")
</pallas_src>

<mosaic_0001>
module attributes {stable_mosaic.version = 11 : i64} {
  func.func @_stack_kernel(%arg0: i32, %arg1: memref<8x128xf32, #tpu.memory_space<vmem>>, %arg2: memref<2x128x384xbf16, #tpu.memory_space<vmem>>, %arg3: memref<2x1x384xf32, #tpu.memory_space<vmem>>, %arg4: memref<2x128x128xbf16, #tpu.memory_space<vmem>>, %arg5: memref<2x1x128xf32, #tpu.memory_space<vmem>>, %arg6: memref<2x1x128xf32, #tpu.memory_space<vmem>>, %arg7: memref<2x1x128xf32, #tpu.memory_space<vmem>>, %arg8: memref<2x128x256xbf16, #tpu.memory_space<vmem>>, %arg9: memref<2x1x256xf32, #tpu.memory_space<vmem>>, %arg10: memref<2x256x128xbf16, #tpu.memory_space<vmem>>, %arg11: memref<2x1x128xf32, #tpu.memory_space<vmem>>, %arg12: memref<2x1x128xf32, #tpu.memory_space<vmem>>, %arg13: memref<2x1x128xf32, #tpu.memory_space<vmem>>, %arg14: memref<8x128xbf16, #tpu.memory_space<vmem>>) attributes {dimension_semantics = [#tpu.dimension_semantics<parallel>], iteration_bounds = array<i64: 2>, scalar_prefetch = 0 : i64, scratch_operands = 0 : i64, tpu.core_type = #tpu.core_type<tc>, window_params = [{transform_indices = @transform_0, window_bounds = array<i64: 8, 128>}, {pipeline_mode = #tpu.pipeline_mode<synchronous>, transform_indices = @transform_1, window_bounds = array<i64: 2, 128, 384>}, {pipeline_mode = #tpu.pipeline_mode<synchronous>, transform_indices = @transform_2, window_bounds = array<i64: 2, 1, 384>}, {pipeline_mode = #tpu.pipeline_mode<synchronous>, transform_indices = @transform_3, window_bounds = array<i64: 2, 128, 128>}, {pipeline_mode = #tpu.pipeline_mode<synchronous>, transform_indices = @transform_4, window_bounds = array<i64: 2, 1, 128>}, {pipeline_mode = #tpu.pipeline_mode<synchronous>, transform_indices = @transform_5, window_bounds = array<i64: 2, 1, 128>}, {pipeline_mode = #tpu.pipeline_mode<synchronous>, transform_indices = @transform_6, window_bounds = array<i64: 2, 1, 128>}, {pipeline_mode = #tpu.pipeline_mode<synchronous>, transform_indices = @transform_7, window_bounds = array<i64: 2, 128, 256>}, {pipeline_mode = #tpu.pipeline_mode<synchronous>, transform_indices = @transform_8, window_bounds = array<i64: 2, 1, 256>}, {pipeline_mode = #tpu.pipeline_mode<synchronous>, transform_indices = @transform_9, window_bounds = array<i64: 2, 256, 128>}, {pipeline_mode = #tpu.pipeline_mode<synchronous>, transform_indices = @transform_10, window_bounds = array<i64: 2, 1, 128>}, {pipeline_mode = #tpu.pipeline_mode<synchronous>, transform_indices = @transform_11, window_bounds = array<i64: 2, 1, 128>}, {pipeline_mode = #tpu.pipeline_mode<synchronous>, transform_indices = @transform_12, window_bounds = array<i64: 2, 1, 128>}, {transform_indices = @transform_13, window_bounds = array<i64: 8, 128>}]} {
    %c0 = arith.constant 0 : index
    %c0_0 = arith.constant 0 : index
    %0 = vector.load %arg1[%c0, %c0_0] : memref<8x128xf32, #tpu.memory_space<vmem>>, vector<8x128xf32>
    %c0_1 = arith.constant 0 : index
    %c0_2 = arith.constant 0 : index
    %c0_3 = arith.constant 0 : index
    %1 = vector.load %arg2[%c0_1, %c0_2, %c0_3] : memref<2x128x384xbf16, #tpu.memory_space<vmem>>, vector<1x128x384xbf16>
    %2 = vector.shape_cast %1 : vector<1x128x384xbf16> to vector<128x384xbf16>
    %c0_4 = arith.constant 0 : index
    %c0_5 = arith.constant 0 : index
    %c0_6 = arith.constant 0 : index
    %3 = vector.load %arg4[%c0_4, %c0_5, %c0_6] : memref<2x128x128xbf16, #tpu.memory_space<vmem>>, vector<1x128x128xbf16>
    %4 = vector.shape_cast %3 : vector<1x128x128xbf16> to vector<128x128xbf16>
    %5 = arith.truncf %0 : vector<8x128xf32> to vector<8x128xbf16>
    %cst = arith.constant dense<0.000000e+00> : vector<8x384xf32>
    %6 = tpu.matmul %5, %2, %cst {dimension_numbers = #tpu.dot_dimension_numbers<[1], [0], [0], [1], [0, 0, 1, 1], [], []>} : vector<8x128xbf16>, vector<128x384xbf16>, vector<8x384xf32> -> vector<8x384xf32>
    %c0_7 = arith.constant 0 : index
    %c0_8 = arith.constant 0 : index
    %c0_9 = arith.constant 0 : index
    %7 = vector.load %arg3[%c0_7, %c0_8, %c0_9] : memref<2x1x384xf32, #tpu.memory_space<vmem>>, vector<1x1x384xf32>
    %8 = vector.shape_cast %7 : vector<1x1x384xf32> to vector<1x384xf32>
    %9 = vector.broadcast %8 : vector<1x384xf32> to vector<8x384xf32>
    %10 = arith.addf %6, %9 : vector<8x384xf32>
    %11 = vector.extract_strided_slice %10 {offsets = [0, 0], sizes = [8, 32], strides = [1, 1]} : vector<8x384xf32> to vector<8x32xf32>
    %12 = arith.truncf %11 : vector<8x32xf32> to vector<8x32xbf16>
    %13 = vector.extract_strided_slice %10 {offsets = [0, 128], sizes = [8, 32], strides = [1, 1]} : vector<8x384xf32> to vector<8x32xf32>
    %14 = arith.truncf %13 : vector<8x32xf32> to vector<8x32xbf16>
    %15 = vector.extract_strided_slice %10 {offsets = [0, 256], sizes = [8, 32], strides = [1, 1]} : vector<8x384xf32> to vector<8x32xf32>
    %16 = arith.truncf %15 : vector<8x32xf32> to vector<8x32xbf16>
    %cst_10 = arith.constant dense<0.000000e+00> : vector<8x8xf32>
    %17 = tpu.matmul %12, %14, %cst_10 {dimension_numbers = #tpu.dot_dimension_numbers<[1], [1], [0], [0], [0, 0, 1, 0], [], []>} : vector<8x32xbf16>, vector<8x32xbf16>, vector<8x8xf32> -> vector<8x8xf32>
    %cst_11 = arith.constant dense<0xFF800000> : vector<8xf32>
    %18 = vector.multi_reduction <maximumf>, %17, %cst_11 [1] : vector<8x8xf32> to vector<8xf32>
    %19 = vector.shape_cast %18 : vector<8xf32> to vector<8x1xf32>
    %20 = vector.broadcast %19 : vector<8x1xf32> to vector<8x8xf32>
    %21 = arith.subf %17, %20 : vector<8x8xf32>
    %22 = math.exp %21 : vector<8x8xf32>
    %cst_12 = arith.constant dense<0.000000e+00> : vector<8xf32>
    %23 = vector.multi_reduction <add>, %22, %cst_12 [1] : vector<8x8xf32> to vector<8xf32>
    %24 = vector.shape_cast %23 : vector<8xf32> to vector<8x1xf32>
    %25 = vector.broadcast %24 : vector<8x1xf32> to vector<8x8xf32>
    %26 = arith.divf %22, %25 : vector<8x8xf32>
    %27 = arith.truncf %26 : vector<8x8xf32> to vector<8x8xbf16>
    %cst_13 = arith.constant dense<0.000000e+00> : vector<8x32xf32>
    %28 = tpu.matmul %27, %16, %cst_13 {dimension_numbers = #tpu.dot_dimension_numbers<[1], [0], [0], [1], [0, 0, 1, 1], [], []>} : vector<8x8xbf16>, vector<8x32xbf16>, vector<8x32xf32> -> vector<8x32xf32>
    %29 = arith.truncf %28 : vector<8x32xf32> to vector<8x32xbf16>
    %30 = vector.extract_strided_slice %4 {offsets = [0, 0], sizes = [32, 128], strides = [1, 1]} : vector<128x128xbf16> to vector<32x128xbf16>
    %cst_14 = arith.constant dense<0.000000e+00> : vector<8x128xf32>
    %31 = tpu.matmul %29, %30, %cst_14 {dimension_numbers = #tpu.dot_dimension_numbers<[1], [0], [0], [1], [0, 0, 1, 1], [], []>} : vector<8x32xbf16>, vector<32x128xbf16>, vector<8x128xf32> -> vector<8x128xf32>
    %32 = vector.extract_strided_slice %10 {offsets = [0, 32], sizes = [8, 32], strides = [1, 1]} : vector<8x384xf32> to vector<8x32xf32>
    %33 = arith.truncf %32 : vector<8x32xf32> to vector<8x32xbf16>
    %34 = vector.extract_strided_slice %10 {offsets = [0, 160], sizes = [8, 32], strides = [1, 1]} : vector<8x384xf32> to vector<8x32xf32>
    %35 = arith.truncf %34 : vector<8x32xf32> to vector<8x32xbf16>
    %36 = vector.extract_strided_slice %10 {offsets = [0, 288], sizes = [8, 32], strides = [1, 1]} : vector<8x384xf32> to vector<8x32xf32>
    %37 = arith.truncf %36 : vector<8x32xf32> to vector<8x32xbf16>
    %cst_15 = arith.constant dense<0.000000e+00> : vector<8x8xf32>
    %38 = tpu.matmul %33, %35, %cst_15 {dimension_numbers = #tpu.dot_dimension_numbers<[1], [1], [0], [0], [0, 0, 1, 0], [], []>} : vector<8x32xbf16>, vector<8x32xbf16>, vector<8x8xf32> -> vector<8x8xf32>
    %cst_16 = arith.constant dense<0xFF800000> : vector<8xf32>
    %39 = vector.multi_reduction <maximumf>, %38, %cst_16 [1] : vector<8x8xf32> to vector<8xf32>
    %40 = vector.shape_cast %39 : vector<8xf32> to vector<8x1xf32>
    %41 = vector.broadcast %40 : vector<8x1xf32> to vector<8x8xf32>
    %42 = arith.subf %38, %41 : vector<8x8xf32>
    %43 = math.exp %42 : vector<8x8xf32>
    %cst_17 = arith.constant dense<0.000000e+00> : vector<8xf32>
    %44 = vector.multi_reduction <add>, %43, %cst_17 [1] : vector<8x8xf32> to vector<8xf32>
    %45 = vector.shape_cast %44 : vector<8xf32> to vector<8x1xf32>
    %46 = vector.broadcast %45 : vector<8x1xf32> to vector<8x8xf32>
    %47 = arith.divf %43, %46 : vector<8x8xf32>
    %48 = arith.truncf %47 : vector<8x8xf32> to vector<8x8xbf16>
    %cst_18 = arith.constant dense<0.000000e+00> : vector<8x32xf32>
    %49 = tpu.matmul %48, %37, %cst_18 {dimension_numbers = #tpu.dot_dimension_numbers<[1], [0], [0], [1], [0, 0, 1, 1], [], []>} : vector<8x8xbf16>, vector<8x32xbf16>, vector<8x32xf32> -> vector<8x32xf32>
    %50 = arith.truncf %49 : vector<8x32xf32> to vector<8x32xbf16>
    %51 = vector.extract_strided_slice %4 {offsets = [32, 0], sizes = [32, 128], strides = [1, 1]} : vector<128x128xbf16> to vector<32x128xbf16>
    %cst_19 = arith.constant dense<0.000000e+00> : vector<8x128xf32>
    %52 = tpu.matmul %50, %51, %cst_19 {dimension_numbers = #tpu.dot_dimension_numbers<[1], [0], [0], [1], [0, 0, 1, 1], [], []>} : vector<8x32xbf16>, vector<32x128xbf16>, vector<8x128xf32> -> vector<8x128xf32>
    %53 = arith.addf %31, %52 : vector<8x128xf32>
    %54 = vector.extract_strided_slice %10 {offsets = [0, 64], sizes = [8, 32], strides = [1, 1]} : vector<8x384xf32> to vector<8x32xf32>
    %55 = arith.truncf %54 : vector<8x32xf32> to vector<8x32xbf16>
    %56 = vector.extract_strided_slice %10 {offsets = [0, 192], sizes = [8, 32], strides = [1, 1]} : vector<8x384xf32> to vector<8x32xf32>
    %57 = arith.truncf %56 : vector<8x32xf32> to vector<8x32xbf16>
    %58 = vector.extract_strided_slice %10 {offsets = [0, 320], sizes = [8, 32], strides = [1, 1]} : vector<8x384xf32> to vector<8x32xf32>
    %59 = arith.truncf %58 : vector<8x32xf32> to vector<8x32xbf16>
    %cst_20 = arith.constant dense<0.000000e+00> : vector<8x8xf32>
    %60 = tpu.matmul %55, %57, %cst_20 {dimension_numbers = #tpu.dot_dimension_numbers<[1], [1], [0], [0], [0, 0, 1, 0], [], []>} : vector<8x32xbf16>, vector<8x32xbf16>, vector<8x8xf32> -> vector<8x8xf32>
    %cst_21 = arith.constant dense<0xFF800000> : vector<8xf32>
    %61 = vector.multi_reduction <maximumf>, %60, %cst_21 [1] : vector<8x8xf32> to vector<8xf32>
    %62 = vector.shape_cast %61 : vector<8xf32> to vector<8x1xf32>
    %63 = vector.broadcast %62 : vector<8x1xf32> to vector<8x8xf32>
    %64 = arith.subf %60, %63 : vector<8x8xf32>
    %65 = math.exp %64 : vector<8x8xf32>
    %cst_22 = arith.constant dense<0.000000e+00> : vector<8xf32>
    %66 = vector.multi_reduction <add>, %65, %cst_22 [1] : vector<8x8xf32> to vector<8xf32>
    %67 = vector.shape_cast %66 : vector<8xf32> to vector<8x1xf32>
    %68 = vector.broadcast %67 : vector<8x1xf32> to vector<8x8xf32>
    %69 = arith.divf %65, %68 : vector<8x8xf32>
    %70 = arith.truncf %69 : vector<8x8xf32> to vector<8x8xbf16>
    %cst_23 = arith.constant dense<0.000000e+00> : vector<8x32xf32>
    %71 = tpu.matmul %70, %59, %cst_23 {dimension_numbers = #tpu.dot_dimension_numbers<[1], [0], [0], [1], [0, 0, 1, 1], [], []>} : vector<8x8xbf16>, vector<8x32xbf16>, vector<8x32xf32> -> vector<8x32xf32>
    %72 = arith.truncf %71 : vector<8x32xf32> to vector<8x32xbf16>
    %73 = vector.extract_strided_slice %4 {offsets = [64, 0], sizes = [32, 128], strides = [1, 1]} : vector<128x128xbf16> to vector<32x128xbf16>
    %cst_24 = arith.constant dense<0.000000e+00> : vector<8x128xf32>
    %74 = tpu.matmul %72, %73, %cst_24 {dimension_numbers = #tpu.dot_dimension_numbers<[1], [0], [0], [1], [0, 0, 1, 1], [], []>} : vector<8x32xbf16>, vector<32x128xbf16>, vector<8x128xf32> -> vector<8x128xf32>
    %75 = arith.addf %53, %74 : vector<8x128xf32>
    %76 = vector.extract_strided_slice %10 {offsets = [0, 96], sizes = [8, 32], strides = [1, 1]} : vector<8x384xf32> to vector<8x32xf32>
    %77 = arith.truncf %76 : vector<8x32xf32> to vector<8x32xbf16>
    %78 = vector.extract_strided_slice %10 {offsets = [0, 224], sizes = [8, 32], strides = [1, 1]} : vector<8x384xf32> to vector<8x32xf32>
    %79 = arith.truncf %78 : vector<8x32xf32> to vector<8x32xbf16>
    %80 = vector.extract_strided_slice %10 {offsets = [0, 352], sizes = [8, 32], strides = [1, 1]} : vector<8x384xf32> to vector<8x32xf32>
    %81 = arith.truncf %80 : vector<8x32xf32> to vector<8x32xbf16>
    %cst_25 = arith.constant dense<0.000000e+00> : vector<8x8xf32>
    %82 = tpu.matmul %77, %79, %cst_25 {dimension_numbers = #tpu.dot_dimension_numbers<[1], [1], [0], [0], [0, 0, 1, 0], [], []>} : vector<8x32xbf16>, vector<8x32xbf16>, vector<8x8xf32> -> vector<8x8xf32>
    %cst_26 = arith.constant dense<0xFF800000> : vector<8xf32>
    %83 = vector.multi_reduction <maximumf>, %82, %cst_26 [1] : vector<8x8xf32> to vector<8xf32>
    %84 = vector.shape_cast %83 : vector<8xf32> to vector<8x1xf32>
    %85 = vector.broadcast %84 : vector<8x1xf32> to vector<8x8xf32>
    %86 = arith.subf %82, %85 : vector<8x8xf32>
    %87 = math.exp %86 : vector<8x8xf32>
    %cst_27 = arith.constant dense<0.000000e+00> : vector<8xf32>
    %88 = vector.multi_reduction <add>, %87, %cst_27 [1] : vector<8x8xf32> to vector<8xf32>
    %89 = vector.shape_cast %88 : vector<8xf32> to vector<8x1xf32>
    %90 = vector.broadcast %89 : vector<8x1xf32> to vector<8x8xf32>
    %91 = arith.divf %87, %90 : vector<8x8xf32>
    %92 = arith.truncf %91 : vector<8x8xf32> to vector<8x8xbf16>
    %cst_28 = arith.constant dense<0.000000e+00> : vector<8x32xf32>
    %93 = tpu.matmul %92, %81, %cst_28 {dimension_numbers = #tpu.dot_dimension_numbers<[1], [0], [0], [1], [0, 0, 1, 1], [], []>} : vector<8x8xbf16>, vector<8x32xbf16>, vector<8x32xf32> -> vector<8x32xf32>
    %94 = arith.truncf %93 : vector<8x32xf32> to vector<8x32xbf16>
    %95 = vector.extract_strided_slice %4 {offsets = [96, 0], sizes = [32, 128], strides = [1, 1]} : vector<128x128xbf16> to vector<32x128xbf16>
    %cst_29 = arith.constant dense<0.000000e+00> : vector<8x128xf32>
    %96 = tpu.matmul %94, %95, %cst_29 {dimension_numbers = #tpu.dot_dimension_numbers<[1], [0], [0], [1], [0, 0, 1, 1], [], []>} : vector<8x32xbf16>, vector<32x128xbf16>, vector<8x128xf32> -> vector<8x128xf32>
    %97 = arith.addf %75, %96 : vector<8x128xf32>
    %c0_30 = arith.constant 0 : index
    %c0_31 = arith.constant 0 : index
    %c0_32 = arith.constant 0 : index
    %98 = vector.load %arg5[%c0_30, %c0_31, %c0_32] : memref<2x1x128xf32, #tpu.memory_space<vmem>>, vector<1x1x128xf32>
    %99 = vector.shape_cast %98 : vector<1x1x128xf32> to vector<1x128xf32>
    %100 = vector.broadcast %99 : vector<1x128xf32> to vector<8x128xf32>
    %101 = arith.addf %97, %100 : vector<8x128xf32>
    %102 = arith.addf %0, %101 : vector<8x128xf32>
    %c0_33 = arith.constant 0 : index
    %c0_34 = arith.constant 0 : index
    %c0_35 = arith.constant 0 : index
    %103 = vector.load %arg6[%c0_33, %c0_34, %c0_35] : memref<2x1x128xf32, #tpu.memory_space<vmem>>, vector<1x1x128xf32>
    %104 = vector.shape_cast %103 : vector<1x1x128xf32> to vector<1x128xf32>
    %c0_36 = arith.constant 0 : index
    %c0_37 = arith.constant 0 : index
    %c0_38 = arith.constant 0 : index
    %105 = vector.load %arg7[%c0_36, %c0_37, %c0_38] : memref<2x1x128xf32, #tpu.memory_space<vmem>>, vector<1x1x128xf32>
    %106 = vector.shape_cast %105 : vector<1x1x128xf32> to vector<1x128xf32>
    %cst_39 = arith.constant dense<0.000000e+00> : vector<8xf32>
    %107 = vector.multi_reduction <add>, %102, %cst_39 [1] : vector<8x128xf32> to vector<8xf32>
    %108 = vector.shape_cast %107 : vector<8xf32> to vector<8x1xf32>
    %cst_40 = arith.constant 1.280000e+02 : f32
    %109 = vector.broadcast %cst_40 : f32 to vector<8x1xf32>
    %110 = arith.divf %108, %109 : vector<8x1xf32>
    %111 = vector.broadcast %110 : vector<8x1xf32> to vector<8x128xf32>
    %112 = arith.subf %102, %111 : vector<8x128xf32>
    %113 = arith.mulf %112, %112 : vector<8x128xf32>
    %cst_41 = arith.constant dense<0.000000e+00> : vector<8xf32>
    %114 = vector.multi_reduction <add>, %113, %cst_41 [1] : vector<8x128xf32> to vector<8xf32>
    %115 = vector.shape_cast %114 : vector<8xf32> to vector<8x1xf32>
    %cst_42 = arith.constant 1.280000e+02 : f32
    %116 = vector.broadcast %cst_42 : f32 to vector<8x1xf32>
    %117 = arith.divf %115, %116 : vector<8x1xf32>
    %118 = vector.broadcast %110 : vector<8x1xf32> to vector<8x128xf32>
    %119 = arith.subf %102, %118 : vector<8x128xf32>
    %cst_43 = arith.constant 9.99999974E-6 : f32
    %120 = vector.broadcast %cst_43 : f32 to vector<8x1xf32>
    %121 = arith.addf %117, %120 : vector<8x1xf32>
    %122 = math.rsqrt %121 : vector<8x1xf32>
    %123 = vector.broadcast %122 : vector<8x1xf32> to vector<8x128xf32>
    %124 = arith.mulf %119, %123 : vector<8x128xf32>
    %125 = vector.broadcast %104 : vector<1x128xf32> to vector<8x128xf32>
    %126 = arith.mulf %124, %125 : vector<8x128xf32>
    %127 = vector.broadcast %106 : vector<1x128xf32> to vector<8x128xf32>
    %128 = arith.addf %126, %127 : vector<8x128xf32>
    %129 = arith.truncf %128 : vector<8x128xf32> to vector<8x128xbf16>
    %c0_44 = arith.constant 0 : index
    %c0_45 = arith.constant 0 : index
    %c0_46 = arith.constant 0 : index
    %130 = vector.load %arg8[%c0_44, %c0_45, %c0_46] : memref<2x128x256xbf16, #tpu.memory_space<vmem>>, vector<1x128x256xbf16>
    %131 = vector.shape_cast %130 : vector<1x128x256xbf16> to vector<128x256xbf16>
    %cst_47 = arith.constant dense<0.000000e+00> : vector<8x256xf32>
    %132 = tpu.matmul %129, %131, %cst_47 {dimension_numbers = #tpu.dot_dimension_numbers<[1], [0], [0], [1], [0, 0, 1, 1], [], []>} : vector<8x128xbf16>, vector<128x256xbf16>, vector<8x256xf32> -> vector<8x256xf32>
    %c0_48 = arith.constant 0 : index
    %c0_49 = arith.constant 0 : index
    %c0_50 = arith.constant 0 : index
    %133 = vector.load %arg9[%c0_48, %c0_49, %c0_50] : memref<2x1x256xf32, #tpu.memory_space<vmem>>, vector<1x1x256xf32>
    %134 = vector.shape_cast %133 : vector<1x1x256xf32> to vector<1x256xf32>
    %135 = vector.broadcast %134 : vector<1x256xf32> to vector<8x256xf32>
    %136 = arith.addf %132, %135 : vector<8x256xf32>
    %cst_51 = arith.constant 0.000000e+00 : f32
    %137 = vector.broadcast %cst_51 : f32 to vector<8x256xf32>
    %138 = arith.maximumf %136, %137 : vector<8x256xf32>
    %139 = arith.truncf %138 : vector<8x256xf32> to vector<8x256xbf16>
    %c0_52 = arith.constant 0 : index
    %c0_53 = arith.constant 0 : index
    %c0_54 = arith.constant 0 : index
    %140 = vector.load %arg10[%c0_52, %c0_53, %c0_54] : memref<2x256x128xbf16, #tpu.memory_space<vmem>>, vector<1x256x128xbf16>
    %141 = vector.shape_cast %140 : vector<1x256x128xbf16> to vector<256x128xbf16>
    %cst_55 = arith.constant dense<0.000000e+00> : vector<8x128xf32>
    %142 = tpu.matmul %139, %141, %cst_55 {dimension_numbers = #tpu.dot_dimension_numbers<[1], [0], [0], [1], [0, 0, 1, 1], [], []>} : vector<8x256xbf16>, vector<256x128xbf16>, vector<8x128xf32> -> vector<8x128xf32>
    %c0_56 = arith.constant 0 : index
    %c0_57 = arith.constant 0 : index
    %c0_58 = arith.constant 0 : index
    %143 = vector.load %arg11[%c0_56, %c0_57, %c0_58] : memref<2x1x128xf32, #tpu.memory_space<vmem>>, vector<1x1x128xf32>
    %144 = vector.shape_cast %143 : vector<1x1x128xf32> to vector<1x128xf32>
    %145 = vector.broadcast %144 : vector<1x128xf32> to vector<8x128xf32>
    %146 = arith.addf %142, %145 : vector<8x128xf32>
    %147 = arith.addf %128, %146 : vector<8x128xf32>
    %c0_59 = arith.constant 0 : index
    %c0_60 = arith.constant 0 : index
    %c0_61 = arith.constant 0 : index
    %148 = vector.load %arg12[%c0_59, %c0_60, %c0_61] : memref<2x1x128xf32, #tpu.memory_space<vmem>>, vector<1x1x128xf32>
    %149 = vector.shape_cast %148 : vector<1x1x128xf32> to vector<1x128xf32>
    %c0_62 = arith.constant 0 : index
    %c0_63 = arith.constant 0 : index
    %c0_64 = arith.constant 0 : index
    %150 = vector.load %arg13[%c0_62, %c0_63, %c0_64] : memref<2x1x128xf32, #tpu.memory_space<vmem>>, vector<1x1x128xf32>
    %151 = vector.shape_cast %150 : vector<1x1x128xf32> to vector<1x128xf32>
    %cst_65 = arith.constant dense<0.000000e+00> : vector<8xf32>
    %152 = vector.multi_reduction <add>, %147, %cst_65 [1] : vector<8x128xf32> to vector<8xf32>
    %153 = vector.shape_cast %152 : vector<8xf32> to vector<8x1xf32>
    %cst_66 = arith.constant 1.280000e+02 : f32
    %154 = vector.broadcast %cst_66 : f32 to vector<8x1xf32>
    %155 = arith.divf %153, %154 : vector<8x1xf32>
    %156 = vector.broadcast %155 : vector<8x1xf32> to vector<8x128xf32>
    %157 = arith.subf %147, %156 : vector<8x128xf32>
    %158 = arith.mulf %157, %157 : vector<8x128xf32>
    %cst_67 = arith.constant dense<0.000000e+00> : vector<8xf32>
    %159 = vector.multi_reduction <add>, %158, %cst_67 [1] : vector<8x128xf32> to vector<8xf32>
    %160 = vector.shape_cast %159 : vector<8xf32> to vector<8x1xf32>
    %cst_68 = arith.constant 1.280000e+02 : f32
    %161 = vector.broadcast %cst_68 : f32 to vector<8x1xf32>
    %162 = arith.divf %160, %161 : vector<8x1xf32>
    %163 = vector.broadcast %155 : vector<8x1xf32> to vector<8x128xf32>
    %164 = arith.subf %147, %163 : vector<8x128xf32>
    %cst_69 = arith.constant 9.99999974E-6 : f32
    %165 = vector.broadcast %cst_69 : f32 to vector<8x1xf32>
    %166 = arith.addf %162, %165 : vector<8x1xf32>
    %167 = math.rsqrt %166 : vector<8x1xf32>
    %168 = vector.broadcast %167 : vector<8x1xf32> to vector<8x128xf32>
    %169 = arith.mulf %164, %168 : vector<8x128xf32>
    %170 = vector.broadcast %149 : vector<1x128xf32> to vector<8x128xf32>
    %171 = arith.mulf %169, %170 : vector<8x128xf32>
    %172 = vector.broadcast %151 : vector<1x128xf32> to vector<8x128xf32>
    %173 = arith.addf %171, %172 : vector<8x128xf32>
    %c1 = arith.constant 1 : index
    %c0_70 = arith.constant 0 : index
    %c0_71 = arith.constant 0 : index
    %174 = vector.load %arg2[%c1, %c0_70, %c0_71] : memref<2x128x384xbf16, #tpu.memory_space<vmem>>, vector<1x128x384xbf16>
    %175 = vector.shape_cast %174 : vector<1x128x384xbf16> to vector<128x384xbf16>
    %c1_72 = arith.constant 1 : index
    %c0_73 = arith.constant 0 : index
    %c0_74 = arith.constant 0 : index
    %176 = vector.load %arg4[%c1_72, %c0_73, %c0_74] : memref<2x128x128xbf16, #tpu.memory_space<vmem>>, vector<1x128x128xbf16>
    %177 = vector.shape_cast %176 : vector<1x128x128xbf16> to vector<128x128xbf16>
    %178 = arith.truncf %173 : vector<8x128xf32> to vector<8x128xbf16>
    %cst_75 = arith.constant dense<0.000000e+00> : vector<8x384xf32>
    %179 = tpu.matmul %178, %175, %cst_75 {dimension_numbers = #tpu.dot_dimension_numbers<[1], [0], [0], [1], [0, 0, 1, 1], [], []>} : vector<8x128xbf16>, vector<128x384xbf16>, vector<8x384xf32> -> vector<8x384xf32>
    %c1_76 = arith.constant 1 : index
    %c0_77 = arith.constant 0 : index
    %c0_78 = arith.constant 0 : index
    %180 = vector.load %arg3[%c1_76, %c0_77, %c0_78] : memref<2x1x384xf32, #tpu.memory_space<vmem>>, vector<1x1x384xf32>
    %181 = vector.shape_cast %180 : vector<1x1x384xf32> to vector<1x384xf32>
    %182 = vector.broadcast %181 : vector<1x384xf32> to vector<8x384xf32>
    %183 = arith.addf %179, %182 : vector<8x384xf32>
    %184 = vector.extract_strided_slice %183 {offsets = [0, 0], sizes = [8, 32], strides = [1, 1]} : vector<8x384xf32> to vector<8x32xf32>
    %185 = arith.truncf %184 : vector<8x32xf32> to vector<8x32xbf16>
    %186 = vector.extract_strided_slice %183 {offsets = [0, 128], sizes = [8, 32], strides = [1, 1]} : vector<8x384xf32> to vector<8x32xf32>
    %187 = arith.truncf %186 : vector<8x32xf32> to vector<8x32xbf16>
    %188 = vector.extract_strided_slice %183 {offsets = [0, 256], sizes = [8, 32], strides = [1, 1]} : vector<8x384xf32> to vector<8x32xf32>
    %189 = arith.truncf %188 : vector<8x32xf32> to vector<8x32xbf16>
    %cst_79 = arith.constant dense<0.000000e+00> : vector<8x8xf32>
    %190 = tpu.matmul %185, %187, %cst_79 {dimension_numbers = #tpu.dot_dimension_numbers<[1], [1], [0], [0], [0, 0, 1, 0], [], []>} : vector<8x32xbf16>, vector<8x32xbf16>, vector<8x8xf32> -> vector<8x8xf32>
    %cst_80 = arith.constant dense<0xFF800000> : vector<8xf32>
    %191 = vector.multi_reduction <maximumf>, %190, %cst_80 [1] : vector<8x8xf32> to vector<8xf32>
    %192 = vector.shape_cast %191 : vector<8xf32> to vector<8x1xf32>
    %193 = vector.broadcast %192 : vector<8x1xf32> to vector<8x8xf32>
    %194 = arith.subf %190, %193 : vector<8x8xf32>
    %195 = math.exp %194 : vector<8x8xf32>
    %cst_81 = arith.constant dense<0.000000e+00> : vector<8xf32>
    %196 = vector.multi_reduction <add>, %195, %cst_81 [1] : vector<8x8xf32> to vector<8xf32>
    %197 = vector.shape_cast %196 : vector<8xf32> to vector<8x1xf32>
    %198 = vector.broadcast %197 : vector<8x1xf32> to vector<8x8xf32>
    %199 = arith.divf %195, %198 : vector<8x8xf32>
    %200 = arith.truncf %199 : vector<8x8xf32> to vector<8x8xbf16>
    %cst_82 = arith.constant dense<0.000000e+00> : vector<8x32xf32>
    %201 = tpu.matmul %200, %189, %cst_82 {dimension_numbers = #tpu.dot_dimension_numbers<[1], [0], [0], [1], [0, 0, 1, 1], [], []>} : vector<8x8xbf16>, vector<8x32xbf16>, vector<8x32xf32> -> vector<8x32xf32>
    %202 = arith.truncf %201 : vector<8x32xf32> to vector<8x32xbf16>
    %203 = vector.extract_strided_slice %177 {offsets = [0, 0], sizes = [32, 128], strides = [1, 1]} : vector<128x128xbf16> to vector<32x128xbf16>
    %cst_83 = arith.constant dense<0.000000e+00> : vector<8x128xf32>
    %204 = tpu.matmul %202, %203, %cst_83 {dimension_numbers = #tpu.dot_dimension_numbers<[1], [0], [0], [1], [0, 0, 1, 1], [], []>} : vector<8x32xbf16>, vector<32x128xbf16>, vector<8x128xf32> -> vector<8x128xf32>
    %205 = vector.extract_strided_slice %183 {offsets = [0, 32], sizes = [8, 32], strides = [1, 1]} : vector<8x384xf32> to vector<8x32xf32>
    %206 = arith.truncf %205 : vector<8x32xf32> to vector<8x32xbf16>
    %207 = vector.extract_strided_slice %183 {offsets = [0, 160], sizes = [8, 32], strides = [1, 1]} : vector<8x384xf32> to vector<8x32xf32>
    %208 = arith.truncf %207 : vector<8x32xf32> to vector<8x32xbf16>
    %209 = vector.extract_strided_slice %183 {offsets = [0, 288], sizes = [8, 32], strides = [1, 1]} : vector<8x384xf32> to vector<8x32xf32>
    %210 = arith.truncf %209 : vector<8x32xf32> to vector<8x32xbf16>
    %cst_84 = arith.constant dense<0.000000e+00> : vector<8x8xf32>
    %211 = tpu.matmul %206, %208, %cst_84 {dimension_numbers = #tpu.dot_dimension_numbers<[1], [1], [0], [0], [0, 0, 1, 0], [], []>} : vector<8x32xbf16>, vector<8x32xbf16>, vector<8x8xf32> -> vector<8x8xf32>
    %cst_85 = arith.constant dense<0xFF800000> : vector<8xf32>
    %212 = vector.multi_reduction <maximumf>, %211, %cst_85 [1] : vector<8x8xf32> to vector<8xf32>
    %213 = vector.shape_cast %212 : vector<8xf32> to vector<8x1xf32>
    %214 = vector.broadcast %213 : vector<8x1xf32> to vector<8x8xf32>
    %215 = arith.subf %211, %214 : vector<8x8xf32>
    %216 = math.exp %215 : vector<8x8xf32>
    %cst_86 = arith.constant dense<0.000000e+00> : vector<8xf32>
    %217 = vector.multi_reduction <add>, %216, %cst_86 [1] : vector<8x8xf32> to vector<8xf32>
    %218 = vector.shape_cast %217 : vector<8xf32> to vector<8x1xf32>
    %219 = vector.broadcast %218 : vector<8x1xf32> to vector<8x8xf32>
    %220 = arith.divf %216, %219 : vector<8x8xf32>
    %221 = arith.truncf %220 : vector<8x8xf32> to vector<8x8xbf16>
    %cst_87 = arith.constant dense<0.000000e+00> : vector<8x32xf32>
    %222 = tpu.matmul %221, %210, %cst_87 {dimension_numbers = #tpu.dot_dimension_numbers<[1], [0], [0], [1], [0, 0, 1, 1], [], []>} : vector<8x8xbf16>, vector<8x32xbf16>, vector<8x32xf32> -> vector<8x32xf32>
    %223 = arith.truncf %222 : vector<8x32xf32> to vector<8x32xbf16>
    %224 = vector.extract_strided_slice %177 {offsets = [32, 0], sizes = [32, 128], strides = [1, 1]} : vector<128x128xbf16> to vector<32x128xbf16>
    %cst_88 = arith.constant dense<0.000000e+00> : vector<8x128xf32>
    %225 = tpu.matmul %223, %224, %cst_88 {dimension_numbers = #tpu.dot_dimension_numbers<[1], [0], [0], [1], [0, 0, 1, 1], [], []>} : vector<8x32xbf16>, vector<32x128xbf16>, vector<8x128xf32> -> vector<8x128xf32>
    %226 = arith.addf %204, %225 : vector<8x128xf32>
    %227 = vector.extract_strided_slice %183 {offsets = [0, 64], sizes = [8, 32], strides = [1, 1]} : vector<8x384xf32> to vector<8x32xf32>
    %228 = arith.truncf %227 : vector<8x32xf32> to vector<8x32xbf16>
    %229 = vector.extract_strided_slice %183 {offsets = [0, 192], sizes = [8, 32], strides = [1, 1]} : vector<8x384xf32> to vector<8x32xf32>
    %230 = arith.truncf %229 : vector<8x32xf32> to vector<8x32xbf16>
    %231 = vector.extract_strided_slice %183 {offsets = [0, 320], sizes = [8, 32], strides = [1, 1]} : vector<8x384xf32> to vector<8x32xf32>
    %232 = arith.truncf %231 : vector<8x32xf32> to vector<8x32xbf16>
    %cst_89 = arith.constant dense<0.000000e+00> : vector<8x8xf32>
    %233 = tpu.matmul %228, %230, %cst_89 {dimension_numbers = #tpu.dot_dimension_numbers<[1], [1], [0], [0], [0, 0, 1, 0], [], []>} : vector<8x32xbf16>, vector<8x32xbf16>, vector<8x8xf32> -> vector<8x8xf32>
    %cst_90 = arith.constant dense<0xFF800000> : vector<8xf32>
    %234 = vector.multi_reduction <maximumf>, %233, %cst_90 [1] : vector<8x8xf32> to vector<8xf32>
    %235 = vector.shape_cast %234 : vector<8xf32> to vector<8x1xf32>
    %236 = vector.broadcast %235 : vector<8x1xf32> to vector<8x8xf32>
    %237 = arith.subf %233, %236 : vector<8x8xf32>
    %238 = math.exp %237 : vector<8x8xf32>
    %cst_91 = arith.constant dense<0.000000e+00> : vector<8xf32>
    %239 = vector.multi_reduction <add>, %238, %cst_91 [1] : vector<8x8xf32> to vector<8xf32>
    %240 = vector.shape_cast %239 : vector<8xf32> to vector<8x1xf32>
    %241 = vector.broadcast %240 : vector<8x1xf32> to vector<8x8xf32>
    %242 = arith.divf %238, %241 : vector<8x8xf32>
    %243 = arith.truncf %242 : vector<8x8xf32> to vector<8x8xbf16>
    %cst_92 = arith.constant dense<0.000000e+00> : vector<8x32xf32>
    %244 = tpu.matmul %243, %232, %cst_92 {dimension_numbers = #tpu.dot_dimension_numbers<[1], [0], [0], [1], [0, 0, 1, 1], [], []>} : vector<8x8xbf16>, vector<8x32xbf16>, vector<8x32xf32> -> vector<8x32xf32>
    %245 = arith.truncf %244 : vector<8x32xf32> to vector<8x32xbf16>
    %246 = vector.extract_strided_slice %177 {offsets = [64, 0], sizes = [32, 128], strides = [1, 1]} : vector<128x128xbf16> to vector<32x128xbf16>
    %cst_93 = arith.constant dense<0.000000e+00> : vector<8x128xf32>
    %247 = tpu.matmul %245, %246, %cst_93 {dimension_numbers = #tpu.dot_dimension_numbers<[1], [0], [0], [1], [0, 0, 1, 1], [], []>} : vector<8x32xbf16>, vector<32x128xbf16>, vector<8x128xf32> -> vector<8x128xf32>
    %248 = arith.addf %226, %247 : vector<8x128xf32>
    %249 = vector.extract_strided_slice %183 {offsets = [0, 96], sizes = [8, 32], strides = [1, 1]} : vector<8x384xf32> to vector<8x32xf32>
    %250 = arith.truncf %249 : vector<8x32xf32> to vector<8x32xbf16>
    %251 = vector.extract_strided_slice %183 {offsets = [0, 224], sizes = [8, 32], strides = [1, 1]} : vector<8x384xf32> to vector<8x32xf32>
    %252 = arith.truncf %251 : vector<8x32xf32> to vector<8x32xbf16>
    %253 = vector.extract_strided_slice %183 {offsets = [0, 352], sizes = [8, 32], strides = [1, 1]} : vector<8x384xf32> to vector<8x32xf32>
    %254 = arith.truncf %253 : vector<8x32xf32> to vector<8x32xbf16>
    %cst_94 = arith.constant dense<0.000000e+00> : vector<8x8xf32>
    %255 = tpu.matmul %250, %252, %cst_94 {dimension_numbers = #tpu.dot_dimension_numbers<[1], [1], [0], [0], [0, 0, 1, 0], [], []>} : vector<8x32xbf16>, vector<8x32xbf16>, vector<8x8xf32> -> vector<8x8xf32>
    %cst_95 = arith.constant dense<0xFF800000> : vector<8xf32>
    %256 = vector.multi_reduction <maximumf>, %255, %cst_95 [1] : vector<8x8xf32> to vector<8xf32>
    %257 = vector.shape_cast %256 : vector<8xf32> to vector<8x1xf32>
    %258 = vector.broadcast %257 : vector<8x1xf32> to vector<8x8xf32>
    %259 = arith.subf %255, %258 : vector<8x8xf32>
    %260 = math.exp %259 : vector<8x8xf32>
    %cst_96 = arith.constant dense<0.000000e+00> : vector<8xf32>
    %261 = vector.multi_reduction <add>, %260, %cst_96 [1] : vector<8x8xf32> to vector<8xf32>
    %262 = vector.shape_cast %261 : vector<8xf32> to vector<8x1xf32>
    %263 = vector.broadcast %262 : vector<8x1xf32> to vector<8x8xf32>
    %264 = arith.divf %260, %263 : vector<8x8xf32>
    %265 = arith.truncf %264 : vector<8x8xf32> to vector<8x8xbf16>
    %cst_97 = arith.constant dense<0.000000e+00> : vector<8x32xf32>
    %266 = tpu.matmul %265, %254, %cst_97 {dimension_numbers = #tpu.dot_dimension_numbers<[1], [0], [0], [1], [0, 0, 1, 1], [], []>} : vector<8x8xbf16>, vector<8x32xbf16>, vector<8x32xf32> -> vector<8x32xf32>
    %267 = arith.truncf %266 : vector<8x32xf32> to vector<8x32xbf16>
    %268 = vector.extract_strided_slice %177 {offsets = [96, 0], sizes = [32, 128], strides = [1, 1]} : vector<128x128xbf16> to vector<32x128xbf16>
    %cst_98 = arith.constant dense<0.000000e+00> : vector<8x128xf32>
    %269 = tpu.matmul %267, %268, %cst_98 {dimension_numbers = #tpu.dot_dimension_numbers<[1], [0], [0], [1], [0, 0, 1, 1], [], []>} : vector<8x32xbf16>, vector<32x128xbf16>, vector<8x128xf32> -> vector<8x128xf32>
    %270 = arith.addf %248, %269 : vector<8x128xf32>
    %c1_99 = arith.constant 1 : index
    %c0_100 = arith.constant 0 : index
    %c0_101 = arith.constant 0 : index
    %271 = vector.load %arg5[%c1_99, %c0_100, %c0_101] : memref<2x1x128xf32, #tpu.memory_space<vmem>>, vector<1x1x128xf32>
    %272 = vector.shape_cast %271 : vector<1x1x128xf32> to vector<1x128xf32>
    %273 = vector.broadcast %272 : vector<1x128xf32> to vector<8x128xf32>
    %274 = arith.addf %270, %273 : vector<8x128xf32>
    %275 = arith.addf %173, %274 : vector<8x128xf32>
    %c1_102 = arith.constant 1 : index
    %c0_103 = arith.constant 0 : index
    %c0_104 = arith.constant 0 : index
    %276 = vector.load %arg6[%c1_102, %c0_103, %c0_104] : memref<2x1x128xf32, #tpu.memory_space<vmem>>, vector<1x1x128xf32>
    %277 = vector.shape_cast %276 : vector<1x1x128xf32> to vector<1x128xf32>
    %c1_105 = arith.constant 1 : index
    %c0_106 = arith.constant 0 : index
    %c0_107 = arith.constant 0 : index
    %278 = vector.load %arg7[%c1_105, %c0_106, %c0_107] : memref<2x1x128xf32, #tpu.memory_space<vmem>>, vector<1x1x128xf32>
    %279 = vector.shape_cast %278 : vector<1x1x128xf32> to vector<1x128xf32>
    %cst_108 = arith.constant dense<0.000000e+00> : vector<8xf32>
    %280 = vector.multi_reduction <add>, %275, %cst_108 [1] : vector<8x128xf32> to vector<8xf32>
    %281 = vector.shape_cast %280 : vector<8xf32> to vector<8x1xf32>
    %cst_109 = arith.constant 1.280000e+02 : f32
    %282 = vector.broadcast %cst_109 : f32 to vector<8x1xf32>
    %283 = arith.divf %281, %282 : vector<8x1xf32>
    %284 = vector.broadcast %283 : vector<8x1xf32> to vector<8x128xf32>
    %285 = arith.subf %275, %284 : vector<8x128xf32>
    %286 = arith.mulf %285, %285 : vector<8x128xf32>
    %cst_110 = arith.constant dense<0.000000e+00> : vector<8xf32>
    %287 = vector.multi_reduction <add>, %286, %cst_110 [1] : vector<8x128xf32> to vector<8xf32>
    %288 = vector.shape_cast %287 : vector<8xf32> to vector<8x1xf32>
    %cst_111 = arith.constant 1.280000e+02 : f32
    %289 = vector.broadcast %cst_111 : f32 to vector<8x1xf32>
    %290 = arith.divf %288, %289 : vector<8x1xf32>
    %291 = vector.broadcast %283 : vector<8x1xf32> to vector<8x128xf32>
    %292 = arith.subf %275, %291 : vector<8x128xf32>
    %cst_112 = arith.constant 9.99999974E-6 : f32
    %293 = vector.broadcast %cst_112 : f32 to vector<8x1xf32>
    %294 = arith.addf %290, %293 : vector<8x1xf32>
    %295 = math.rsqrt %294 : vector<8x1xf32>
    %296 = vector.broadcast %295 : vector<8x1xf32> to vector<8x128xf32>
    %297 = arith.mulf %292, %296 : vector<8x128xf32>
    %298 = vector.broadcast %277 : vector<1x128xf32> to vector<8x128xf32>
    %299 = arith.mulf %297, %298 : vector<8x128xf32>
    %300 = vector.broadcast %279 : vector<1x128xf32> to vector<8x128xf32>
    %301 = arith.addf %299, %300 : vector<8x128xf32>
    %302 = arith.truncf %301 : vector<8x128xf32> to vector<8x128xbf16>
    %c1_113 = arith.constant 1 : index
    %c0_114 = arith.constant 0 : index
    %c0_115 = arith.constant 0 : index
    %303 = vector.load %arg8[%c1_113, %c0_114, %c0_115] : memref<2x128x256xbf16, #tpu.memory_space<vmem>>, vector<1x128x256xbf16>
    %304 = vector.shape_cast %303 : vector<1x128x256xbf16> to vector<128x256xbf16>
    %cst_116 = arith.constant dense<0.000000e+00> : vector<8x256xf32>
    %305 = tpu.matmul %302, %304, %cst_116 {dimension_numbers = #tpu.dot_dimension_numbers<[1], [0], [0], [1], [0, 0, 1, 1], [], []>} : vector<8x128xbf16>, vector<128x256xbf16>, vector<8x256xf32> -> vector<8x256xf32>
    %c1_117 = arith.constant 1 : index
    %c0_118 = arith.constant 0 : index
    %c0_119 = arith.constant 0 : index
    %306 = vector.load %arg9[%c1_117, %c0_118, %c0_119] : memref<2x1x256xf32, #tpu.memory_space<vmem>>, vector<1x1x256xf32>
    %307 = vector.shape_cast %306 : vector<1x1x256xf32> to vector<1x256xf32>
    %308 = vector.broadcast %307 : vector<1x256xf32> to vector<8x256xf32>
    %309 = arith.addf %305, %308 : vector<8x256xf32>
    %cst_120 = arith.constant 0.000000e+00 : f32
    %310 = vector.broadcast %cst_120 : f32 to vector<8x256xf32>
    %311 = arith.maximumf %309, %310 : vector<8x256xf32>
    %312 = arith.truncf %311 : vector<8x256xf32> to vector<8x256xbf16>
    %c1_121 = arith.constant 1 : index
    %c0_122 = arith.constant 0 : index
    %c0_123 = arith.constant 0 : index
    %313 = vector.load %arg10[%c1_121, %c0_122, %c0_123] : memref<2x256x128xbf16, #tpu.memory_space<vmem>>, vector<1x256x128xbf16>
    %314 = vector.shape_cast %313 : vector<1x256x128xbf16> to vector<256x128xbf16>
    %cst_124 = arith.constant dense<0.000000e+00> : vector<8x128xf32>
    %315 = tpu.matmul %312, %314, %cst_124 {dimension_numbers = #tpu.dot_dimension_numbers<[1], [0], [0], [1], [0, 0, 1, 1], [], []>} : vector<8x256xbf16>, vector<256x128xbf16>, vector<8x128xf32> -> vector<8x128xf32>
    %c1_125 = arith.constant 1 : index
    %c0_126 = arith.constant 0 : index
    %c0_127 = arith.constant 0 : index
    %316 = vector.load %arg11[%c1_125, %c0_126, %c0_127] : memref<2x1x128xf32, #tpu.memory_space<vmem>>, vector<1x1x128xf32>
    %317 = vector.shape_cast %316 : vector<1x1x128xf32> to vector<1x128xf32>
    %318 = vector.broadcast %317 : vector<1x128xf32> to vector<8x128xf32>
    %319 = arith.addf %315, %318 : vector<8x128xf32>
    %320 = arith.addf %301, %319 : vector<8x128xf32>
    %c1_128 = arith.constant 1 : index
    %c0_129 = arith.constant 0 : index
    %c0_130 = arith.constant 0 : index
    %321 = vector.load %arg12[%c1_128, %c0_129, %c0_130] : memref<2x1x128xf32, #tpu.memory_space<vmem>>, vector<1x1x128xf32>
    %322 = vector.shape_cast %321 : vector<1x1x128xf32> to vector<1x128xf32>
    %c1_131 = arith.constant 1 : index
    %c0_132 = arith.constant 0 : index
    %c0_133 = arith.constant 0 : index
    %323 = vector.load %arg13[%c1_131, %c0_132, %c0_133] : memref<2x1x128xf32, #tpu.memory_space<vmem>>, vector<1x1x128xf32>
    %324 = vector.shape_cast %323 : vector<1x1x128xf32> to vector<1x128xf32>
    %cst_134 = arith.constant dense<0.000000e+00> : vector<8xf32>
    %325 = vector.multi_reduction <add>, %320, %cst_134 [1] : vector<8x128xf32> to vector<8xf32>
    %326 = vector.shape_cast %325 : vector<8xf32> to vector<8x1xf32>
    %cst_135 = arith.constant 1.280000e+02 : f32
    %327 = vector.broadcast %cst_135 : f32 to vector<8x1xf32>
    %328 = arith.divf %326, %327 : vector<8x1xf32>
    %329 = vector.broadcast %328 : vector<8x1xf32> to vector<8x128xf32>
    %330 = arith.subf %320, %329 : vector<8x128xf32>
    %331 = arith.mulf %330, %330 : vector<8x128xf32>
    %cst_136 = arith.constant dense<0.000000e+00> : vector<8xf32>
    %332 = vector.multi_reduction <add>, %331, %cst_136 [1] : vector<8x128xf32> to vector<8xf32>
    %333 = vector.shape_cast %332 : vector<8xf32> to vector<8x1xf32>
    %cst_137 = arith.constant 1.280000e+02 : f32
    %334 = vector.broadcast %cst_137 : f32 to vector<8x1xf32>
    %335 = arith.divf %333, %334 : vector<8x1xf32>
    %336 = vector.broadcast %328 : vector<8x1xf32> to vector<8x128xf32>
    %337 = arith.subf %320, %336 : vector<8x128xf32>
    %cst_138 = arith.constant 9.99999974E-6 : f32
    %338 = vector.broadcast %cst_138 : f32 to vector<8x1xf32>
    %339 = arith.addf %335, %338 : vector<8x1xf32>
    %340 = math.rsqrt %339 : vector<8x1xf32>
    %341 = vector.broadcast %340 : vector<8x1xf32> to vector<8x128xf32>
    %342 = arith.mulf %337, %341 : vector<8x128xf32>
    %343 = vector.broadcast %322 : vector<1x128xf32> to vector<8x128xf32>
    %344 = arith.mulf %342, %343 : vector<8x128xf32>
    %345 = vector.broadcast %324 : vector<1x128xf32> to vector<8x128xf32>
    %346 = arith.addf %344, %345 : vector<8x128xf32>
    %347 = arith.truncf %346 : vector<8x128xf32> to vector<8x128xbf16>
    %c0_139 = arith.constant 0 : index
    %c0_140 = arith.constant 0 : index
    %348 = vector.load %arg14[%c0_139, %c0_140] : memref<8x128xbf16, #tpu.memory_space<vmem>>, vector<8x128xbf16>
    tpu.vector_store %arg14[%c0_139, %c0_140], %347 {strides = array<i32>} : memref<8x128xbf16, #tpu.memory_space<vmem>>, vector<8x128xbf16>,
    return
  }
  func.func @transform_0(%arg0: i32) -> (i32, i32) {
    %c0_i32 = arith.constant 0 : i32
    %c0_i32_0 = arith.constant 0 : i32
    return %arg0, %c0_i32 : i32, i32
  }
  func.func @transform_1(%arg0: i32) -> (i32, i32, i32) {
    %c0_i32 = arith.constant 0 : i32
    %c0_i32_0 = arith.constant 0 : i32
    %c0_i32_1 = arith.constant 0 : i32
    %c0_i32_2 = arith.constant 0 : i32
    return %c0_i32, %c0_i32_0, %c0_i32_1 : i32, i32, i32
  }
  func.func @transform_2(%arg0: i32) -> (i32, i32, i32) {
    %c0_i32 = arith.constant 0 : i32
    %c0_i32_0 = arith.constant 0 : i32
    %c0_i32_1 = arith.constant 0 : i32
    %c0_i32_2 = arith.constant 0 : i32
    return %c0_i32, %c0_i32_0, %c0_i32_1 : i32, i32, i32
  }
  func.func @transform_3(%arg0: i32) -> (i32, i32, i32) {
    %c0_i32 = arith.constant 0 : i32
    %c0_i32_0 = arith.constant 0 : i32
    %c0_i32_1 = arith.constant 0 : i32
    %c0_i32_2 = arith.constant 0 : i32
    return %c0_i32, %c0_i32_0, %c0_i32_1 : i32, i32, i32
  }
  func.func @transform_4(%arg0: i32) -> (i32, i32, i32) {
    %c0_i32 = arith.constant 0 : i32
    %c0_i32_0 = arith.constant 0 : i32
    %c0_i32_1 = arith.constant 0 : i32
    %c0_i32_2 = arith.constant 0 : i32
    return %c0_i32, %c0_i32_0, %c0_i32_1 : i32, i32, i32
  }
  func.func @transform_5(%arg0: i32) -> (i32, i32, i32) {
    %c0_i32 = arith.constant 0 : i32
    %c0_i32_0 = arith.constant 0 : i32
    %c0_i32_1 = arith.constant 0 : i32
    %c0_i32_2 = arith.constant 0 : i32
    return %c0_i32, %c0_i32_0, %c0_i32_1 : i32, i32, i32
  }
  func.func @transform_6(%arg0: i32) -> (i32, i32, i32) {
    %c0_i32 = arith.constant 0 : i32
    %c0_i32_0 = arith.constant 0 : i32
    %c0_i32_1 = arith.constant 0 : i32
    %c0_i32_2 = arith.constant 0 : i32
    return %c0_i32, %c0_i32_0, %c0_i32_1 : i32, i32, i32
  }
  func.func @transform_7(%arg0: i32) -> (i32, i32, i32) {
    %c0_i32 = arith.constant 0 : i32
    %c0_i32_0 = arith.constant 0 : i32
    %c0_i32_1 = arith.constant 0 : i32
    %c0_i32_2 = arith.constant 0 : i32
    return %c0_i32, %c0_i32_0, %c0_i32_1 : i32, i32, i32
  }
  func.func @transform_8(%arg0: i32) -> (i32, i32, i32) {
    %c0_i32 = arith.constant 0 : i32
    %c0_i32_0 = arith.constant 0 : i32
    %c0_i32_1 = arith.constant 0 : i32
    %c0_i32_2 = arith.constant 0 : i32
    return %c0_i32, %c0_i32_0, %c0_i32_1 : i32, i32, i32
  }
  func.func @transform_9(%arg0: i32) -> (i32, i32, i32) {
    %c0_i32 = arith.constant 0 : i32
    %c0_i32_0 = arith.constant 0 : i32
    %c0_i32_1 = arith.constant 0 : i32
    %c0_i32_2 = arith.constant 0 : i32
    return %c0_i32, %c0_i32_0, %c0_i32_1 : i32, i32, i32
  }
  func.func @transform_10(%arg0: i32) -> (i32, i32, i32) {
    %c0_i32 = arith.constant 0 : i32
    %c0_i32_0 = arith.constant 0 : i32
    %c0_i32_1 = arith.constant 0 : i32
    %c0_i32_2 = arith.constant 0 : i32
    return %c0_i32, %c0_i32_0, %c0_i32_1 : i32, i32, i32
  }
  func.func @transform_11(%arg0: i32) -> (i32, i32, i32) {
    %c0_i32 = arith.constant 0 : i32
    %c0_i32_0 = arith.constant 0 : i32
    %c0_i32_1 = arith.constant 0 : i32
    %c0_i32_2 = arith.constant 0 : i32
    return %c0_i32, %c0_i32_0, %c0_i32_1 : i32, i32, i32
  }
  func.func @transform_12(%arg0: i32) -> (i32, i32, i32) {
    %c0_i32 = arith.constant 0 : i32
    %c0_i32_0 = arith.constant 0 : i32
    %c0_i32_1 = arith.constant 0 : i32
    %c0_i32_2 = arith.constant 0 : i32
    return %c0_i32, %c0_i32_0, %c0_i32_1 : i32, i32, i32
  }
  func.func @transform_13(%arg0: i32) -> (i32, i32) {
    %c0_i32 = arith.constant 0 : i32
    %c0_i32_0 = arith.constant 0 : i32
    return %arg0, %c0_i32 : i32, i32
  }
}

</mosaic_0001>

<llo_original>
// kernel: tpu_custom_call.1
$region0: #{tpu_custom_call.1}
  #allocation0 [shape = 'u32[]', space=smem, size = 0x4, offset = 0x4, fixed_abs, tag = 'smem constant byte address 0x4 - core index']
  #allocation1 [shape = 'u32[144,128]{1,0:T(1,128)}', space=vmem, size = 0x12000, scoped, tag = 'internal scratch']
  %s0 = inlined_call_operand.hbm [shape: f32[16,128], index: 0, kind: input, shape index: {}]
  %s1 = inlined_call_operand.hbm [shape: bf16[2,128,384], index: 1, kind: input, shape index: {}]
  %s2 = inlined_call_operand.hbm [shape: f32[2,1,384], index: 2, kind: input, shape index: {}]
  %s3 = inlined_call_operand.hbm [shape: bf16[2,128,128], index: 3, kind: input, shape index: {}]
  %s4 = inlined_call_operand.vmem [shape: f32[2,1,128], index: 4, kind: input, shape index: {}]
  %s5 = inlined_call_operand.vmem [shape: f32[2,1,128], index: 5, kind: input, shape index: {}]
  %s6 = inlined_call_operand.vmem [shape: f32[2,1,128], index: 6, kind: input, shape index: {}]
  %s7 = inlined_call_operand.hbm [shape: bf16[2,128,256], index: 7, kind: input, shape index: {}]
  %s8 = inlined_call_operand.vmem [shape: f32[2,1,256], index: 8, kind: input, shape index: {}]
  %s9 = inlined_call_operand.hbm [shape: bf16[2,256,128], index: 9, kind: input, shape index: {}]
  %s10 = inlined_call_operand.vmem [shape: f32[2,1,128], index: 10, kind: input, shape index: {}]
  %s11 = inlined_call_operand.vmem [shape: f32[2,1,128], index: 11, kind: input, shape index: {}]
  %s12 = inlined_call_operand.vmem [shape: f32[2,1,128], index: 12, kind: input, shape index: {}]
  %s13 = inlined_call_operand.hbm [shape: bf16[16,128], index: 13, kind: output, shape index: {}]
  %s14 = sld [smem:[#allocation0]]
  $region109: #{tpu_custom_call.1} parent=0
    _
  %s16 = ssub.s32 1, %s14
  %s17 = scalar_select 0, %s16, %s14
  $region1: #{tpu_custom_call.1} parent=0
    #allocation2 [shape = 'u8[8192]{0}', space=vmem, size = 0x2000, scoped, tag = 'input window, operand 0']
    #allocation3 [shape = 's32[2]{0}', space=sflag, size = 0x8, scoped, tag = 'scoped memory for tpu_custom_call.1']
    #allocation4 [shape = 's32[2]{0}', space=sflag, size = 0x8, scoped, tag = 'scoped memory for tpu_custom_call.1']
    #allocation5 [shape = 'u8[196608]{0}', space=vmem, size = 0x30000, scoped, tag = 'input window, operand 1, single buffered']
    #allocation6 [shape = 's32[1]{0}', space=sflag, size = 0x4, scoped, tag = 'scoped memory for tpu_custom_call.1']
    #allocation7 [shape = 'u8[3072]{0}', space=vmem, size = 0xc00, scoped, tag = 'input window, operand 2, single buffered']
    #allocation8 [shape = 'u8[65536]{0}', space=vmem, size = 0x10000, scoped, tag = 'input window, operand 3, single buffered']
    #allocation9 [shape = 's32[1]{0}', space=sflag, size = 0x4, scoped, tag = 'scoped memory for tpu_custom_call.1']
    #allocation10 [shape = 'u8[131072]{0}', space=vmem, size = 0x20000, scoped, tag = 'input window, operand 7, single buffered']
    #allocation11 [shape = 'u8[131072]{0}', space=vmem, size = 0x20000, scoped, tag = 'input window, operand 9, single buffered']
    #allocation12 [shape = 's32[1]{0}', space=sflag, size = 0x4, scoped, tag = 'scoped memory for tpu_custom_call.1']
    #allocation13 [shape = 'u8[4096]{0}', space=vmem, size = 0x1000, scoped, tag = 'output window, operand 0']
    %18 = vsyncpa [#allocation3], 0
    %s19 = scalar_lea.sflag [#allocation3], 1
    %20 = vsyncpa %s19, 0
    %21 = vsyncpa [#allocation6], 0
    %22 = vsyncpa [#allocation9], 0
    %23 = vsyncpa [#allocation12], 0
    %24 = vsyncpa [#allocation4], 0
    %s25 = scalar_lea.sflag [#allocation4], 1
    %26 = vsyncpa %s25, 0
    loop: start=0, step=1, limit=4
    $region2: #{tpu_custom_call.1} parent=1 // loop_pre_header
      _
    $region3: #{tpu_custom_call.1} parent=1 // loop_header
      %s28 = sphi 0, %s32
      %p29 = scmp.ge.s32.totalorder %s28, 4
      %s38 = sphi 0, %s40
      %s41 = sphi 0, %s38
      %s42 = sphi 0, %s41
      %s58 = sphi 0, %s42
      %s62 = sphi 0, %s62
      %s64 = sphi 0, %s62
      %s65 = sphi 0, %s64
      %s79 = sphi 0, %s65
      %s83 = sphi 0, %s83
      %s85 = sphi 0, %s83
      %s86 = sphi 0, %s85
      %s100 = sphi 0, %s86
      %s104 = sphi 0, %s104
      %s106 = sphi 0, %s104
      %s107 = sphi 0, %s106
      %s121 = sphi 0, %s107
      %s125 = sphi 0, %s125
      %s127 = sphi 0, %s125
      %s128 = sphi 0, %s127
      %s142 = sphi 0, %s128
      %s146 = sphi 0, %s146
      %s148 = sphi 0, %s146
      %s149 = sphi 0, %s148
      %s163 = sphi 0, %s149
      %s167 = sphi 0, %s167
      %s169 = sphi 0, %s167
      %s170 = sphi 0, %s169
      %s184 = sphi 0, %s170
      %s188 = sphi 0, %s188
      %s190 = sphi 0, %s188
      %s191 = sphi 0, %s190
      %s205 = sphi 0, %s191
      %s209 = sphi 0, %s209
      %s211 = sphi 0, %s209
      %s212 = sphi 0, %s211
      %s226 = sphi 0, %s212
      %s230 = sphi 0, %s230
      %s232 = sphi 0, %s230
      %s233 = sphi 0, %s232
      %s247 = sphi 0, %s233
      %s251 = sphi 0, %s251
      %s253 = sphi 0, %s251
      %s254 = sphi 0, %s253
      %s268 = sphi 0, %s254
      %s272 = sphi 0, %s272
      %s274 = sphi 0, %s272
      %s275 = sphi 0, %s274
      %s289 = sphi 0, %s275
      %s293 = sphi 0, %s293
      %s295 = sphi 0, %s293
      %s296 = sphi 0, %s295
      %s310 = sphi 0, %s296
      %s316 = sphi 0, %s318
      %s319 = sphi 0, %s316
      %s320 = sphi 0, %s319
      %s336 = sphi 0, %s320
    $region4: #{tpu_custom_call.1} parent=1 // loop_header_branch
      %31 = sbr.rel (%p29) target = $region8
    $region5: #{tpu_custom_call.1} parent=1 // loop_body
      %s33 = ssub.s32 %s28, 1
      %s34 = ssub.s32 %s28, 2
      %s35 = sadd.s32 %s28, 1
      %s36 = ssub.s32 %s28, %s35
      %p37 = scmp.eq.s32.totalorder %s36, 0
      %s39 = sadd.s32 %s38, 1
      %s40 = scalar_select %p37, %s38, %s39
      %p43 = pneg %p37
      %p44 = scmp.eq.s32.totalorder %s28, 1
      %p45 = por %p43, %p44
      %p46 = scmp.ne.s32.totalorder %s38, %s41
      %p47 = scmp.eq.s32.totalorder %s28, 0
      %p48 = por %p46, %p47
      %p49 = scmp.ne.s32.totalorder %s38, %s41
      %p50 = scmp.eq.s32.totalorder %s33, 1
      %p51 = por %p49, %p50
      %p52 = scmp.ne.s32.totalorder %s41, %s42
      %p53 = scmp.eq.s32.totalorder %s33, 0
      %p54 = por %p52, %p53
      %p55 = scmp.ne.s32.totalorder %s41, %s42
      %p56 = scmp.eq.s32.totalorder %s34, 1
      %p57 = por %p55, %p56
      %p59 = scmp.ne.s32.totalorder %s42, %s58
      %p60 = scmp.eq.s32.totalorder %s34, 0
      %p61 = por %p59, %p60
      %s63 = sadd.s32 %s62, 1
      %p66 = scmp.eq.s32.totalorder %s28, 1
      %p67 = scmp.ne.s32.totalorder %s62, %s64
      %p68 = scmp.eq.s32.totalorder %s28, 0
      %p69 = por %p67, %p68
      %p70 = scmp.ne.s32.totalorder %s62, %s64
      %p71 = scmp.eq.s32.totalorder %s33, 1
      %p72 = por %p70, %p71
      %p73 = scmp.ne.s32.totalorder %s64, %s65
      %p74 = scmp.eq.s32.totalorder %s33, 0
      %p75 = por %p73, %p74
      %p76 = scmp.ne.s32.totalorder %s64, %s65
      %p77 = scmp.eq.s32.totalorder %s34, 1
      %p78 = por %p76, %p77
      %p80 = scmp.ne.s32.totalorder %s65, %s79
      %p81 = scmp.eq.s32.totalorder %s34, 0
      %p82 = por %p80, %p81
      %s84 = sadd.s32 %s83, 1
      %p87 = scmp.eq.s32.totalorder %s28, 1
      %p88 = scmp.ne.s32.totalorder %s83, %s85
      %p89 = scmp.eq.s32.totalorder %s28, 0
      %p90 = por %p88, %p89
      %p91 = scmp.ne.s32.totalorder %s83, %s85
      %p92 = scmp.eq.s32.totalorder %s33, 1
      %p93 = por %p91, %p92
      %p94 = scmp.ne.s32.totalorder %s85, %s86
      %p95 = scmp.eq.s32.totalorder %s33, 0
      %p96 = por %p94, %p95
      %p97 = scmp.ne.s32.totalorder %s85, %s86
      %p98 = scmp.eq.s32.totalorder %s34, 1
      %p99 = por %p97, %p98
      %p101 = scmp.ne.s32.totalorder %s86, %s100
      %p102 = scmp.eq.s32.totalorder %s34, 0
      %p103 = por %p101, %p102
      %s105 = sadd.s32 %s104, 1
      %p108 = scmp.eq.s32.totalorder %s28, 1
      %p109 = scmp.ne.s32.totalorder %s104, %s106
      %p110 = scmp.eq.s32.totalorder %s28, 0
      %p111 = por %p109, %p110
      %p112 = scmp.ne.s32.totalorder %s104, %s106
      %p113 = scmp.eq.s32.totalorder %s33, 1
      %p114 = por %p112, %p113
      %p115 = scmp.ne.s32.totalorder %s106, %s107
      %p116 = scmp.eq.s32.totalorder %s33, 0
      %p117 = por %p115, %p116
      %p118 = scmp.ne.s32.totalorder %s106, %s107
      %p119 = scmp.eq.s32.totalorder %s34, 1
      %p120 = por %p118, %p119
      %p122 = scmp.ne.s32.totalorder %s107, %s121
      %p123 = scmp.eq.s32.totalorder %s34, 0
      %p124 = por %p122, %p123
      %s126 = sadd.s32 %s125, 1
      %p129 = scmp.eq.s32.totalorder %s28, 1
      %p130 = scmp.ne.s32.totalorder %s125, %s127
      %p131 = scmp.eq.s32.totalorder %s28, 0
      %p132 = por %p130, %p131
      %p133 = scmp.ne.s32.totalorder %s125, %s127
      %p134 = scmp.eq.s32.totalorder %s33, 1
      %p135 = por %p133, %p134
      %p136 = scmp.ne.s32.totalorder %s127, %s128
      %p137 = scmp.eq.s32.totalorder %s33, 0
      %p138 = por %p136, %p137
      %p139 = scmp.ne.s32.totalorder %s127, %s128
      %p140 = scmp.eq.s32.totalorder %s34, 1
      %p141 = por %p139, %p140
      %p143 = scmp.ne.s32.totalorder %s128, %s142
      %p144 = scmp.eq.s32.totalorder %s34, 0
      %p145 = por %p143, %p144
      %s147 = sadd.s32 %s146, 1
      %p150 = scmp.eq.s32.totalorder %s28, 1
      %p151 = scmp.ne.s32.totalorder %s146, %s148
      %p152 = scmp.eq.s32.totalorder %s28, 0
      %p153 = por %p151, %p152
      %p154 = scmp.ne.s32.totalorder %s146, %s148
      %p155 = scmp.eq.s32.totalorder %s33, 1
      %p156 = por %p154, %p155
      %p157 = scmp.ne.s32.totalorder %s148, %s149
      %p158 = scmp.eq.s32.totalorder %s33, 0
      %p159 = por %p157, %p158
      %p160 = scmp.ne.s32.totalorder %s148, %s149
      %p161 = scmp.eq.s32.totalorder %s34, 1
      %p162 = por %p160, %p161
      %p164 = scmp.ne.s32.totalorder %s149, %s163
      %p165 = scmp.eq.s32.totalorder %s34, 0
      %p166 = por %p164, %p165
      %s168 = sadd.s32 %s167, 1
      %p171 = scmp.eq.s32.totalorder %s28, 1
      %p172 = scmp.ne.s32.totalorder %s167, %s169
      %p173 = scmp.eq.s32.totalorder %s28, 0
      %p174 = por %p172, %p173
      %p175 = scmp.ne.s32.totalorder %s167, %s169
      %p176 = scmp.eq.s32.totalorder %s33, 1
      %p177 = por %p175, %p176
      %p178 = scmp.ne.s32.totalorder %s169, %s170
      %p179 = scmp.eq.s32.totalorder %s33, 0
      %p180 = por %p178, %p179
      %p181 = scmp.ne.s32.totalorder %s169, %s170
      %p182 = scmp.eq.s32.totalorder %s34, 1
      %p183 = por %p181, %p182
      %p185 = scmp.ne.s32.totalorder %s170, %s184
      %p186 = scmp.eq.s32.totalorder %s34, 0
      %p187 = por %p185, %p186
      %s189 = sadd.s32 %s188, 1
      %p192 = scmp.eq.s32.totalorder %s28, 1
      %p193 = scmp.ne.s32.totalorder %s188, %s190
      %p194 = scmp.eq.s32.totalorder %s28, 0
      %p195 = por %p193, %p194
      %p196 = scmp.ne.s32.totalorder %s188, %s190
      %p197 = scmp.eq.s32.totalorder %s33, 1
      %p198 = por %p196, %p197
      %p199 = scmp.ne.s32.totalorder %s190, %s191
      %p200 = scmp.eq.s32.totalorder %s33, 0
      %p201 = por %p199, %p200
      %p202 = scmp.ne.s32.totalorder %s190, %s191
      %p203 = scmp.eq.s32.totalorder %s34, 1
      %p204 = por %p202, %p203
      %p206 = scmp.ne.s32.totalorder %s191, %s205
      %p207 = scmp.eq.s32.totalorder %s34, 0
      %p208 = por %p206, %p207
      %s210 = sadd.s32 %s209, 1
      %p213 = scmp.eq.s32.totalorder %s28, 1
      %p214 = scmp.ne.s32.totalorder %s209, %s211
      %p215 = scmp.eq.s32.totalorder %s28, 0
      %p216 = por %p214, %p215
      %p217 = scmp.ne.s32.totalorder %s209, %s211
      %p218 = scmp.eq.s32.totalorder %s33, 1
      %p219 = por %p217, %p218
      %p220 = scmp.ne.s32.totalorder %s211, %s212
      %p221 = scmp.eq.s32.totalorder %s33, 0
      %p222 = por %p220, %p221
      %p223 = scmp.ne.s32.totalorder %s211, %s212
      %p224 = scmp.eq.s32.totalorder %s34, 1
      %p225 = por %p223, %p224
      %p227 = scmp.ne.s32.totalorder %s212, %s226
      %p228 = scmp.eq.s32.totalorder %s34, 0
      %p229 = por %p227, %p228
      %s231 = sadd.s32 %s230, 1
      %p234 = scmp.eq.s32.totalorder %s28, 1
      %p235 = scmp.ne.s32.totalorder %s230, %s232
      %p236 = scmp.eq.s32.totalorder %s28, 0
      %p237 = por %p235, %p236
      %p238 = scmp.ne.s32.totalorder %s230, %s232
      %p239 = scmp.eq.s32.totalorder %s33, 1
      %p240 = por %p238, %p239
      %p241 = scmp.ne.s32.totalorder %s232, %s233
      %p242 = scmp.eq.s32.totalorder %s33, 0
      %p243 = por %p241, %p242
      %p244 = scmp.ne.s32.totalorder %s232, %s233
      %p245 = scmp.eq.s32.totalorder %s34, 1
      %p246 = por %p244, %p245
      %p248 = scmp.ne.s32.totalorder %s233, %s247
      %p249 = scmp.eq.s32.totalorder %s34, 0
      %p250 = por %p248, %p249
      %s252 = sadd.s32 %s251, 1
      %p255 = scmp.eq.s32.totalorder %s28, 1
      %p256 = scmp.ne.s32.totalorder %s251, %s253
      %p257 = scmp.eq.s32.totalorder %s28, 0
      %p258 = por %p256, %p257
      %p259 = scmp.ne.s32.totalorder %s251, %s253
      %p260 = scmp.eq.s32.totalorder %s33, 1
      %p261 = por %p259, %p260
      %p262 = scmp.ne.s32.totalorder %s253, %s254
      %p263 = scmp.eq.s32.totalorder %s33, 0
      %p264 = por %p262, %p263
      %p265 = scmp.ne.s32.totalorder %s253, %s254
      %p266 = scmp.eq.s32.totalorder %s34, 1
      %p267 = por %p265, %p266
      %p269 = scmp.ne.s32.totalorder %s254, %s268
      %p270 = scmp.eq.s32.totalorder %s34, 0
      %p271 = por %p269, %p270
      %s273 = sadd.s32 %s272, 1
      %p276 = scmp.eq.s32.totalorder %s28, 1
      %p277 = scmp.ne.s32.totalorder %s272, %s274
      %p278 = scmp.eq.s32.totalorder %s28, 0
      %p279 = por %p277, %p278
      %p280 = scmp.ne.s32.totalorder %s272, %s274
      %p281 = scmp.eq.s32.totalorder %s33, 1
      %p282 = por %p280, %p281
      %p283 = scmp.ne.s32.totalorder %s274, %s275
      %p284 = scmp.eq.s32.totalorder %s33, 0
      %p285 = por %p283, %p284
      %p286 = scmp.ne.s32.totalorder %s274, %s275
      %p287 = scmp.eq.s32.totalorder %s34, 1
      %p288 = por %p286, %p287
      %p290 = scmp.ne.s32.totalorder %s275, %s289
      %p291 = scmp.eq.s32.totalorder %s34, 0
      %p292 = por %p290, %p291
      %s294 = sadd.s32 %s293, 1
      %p297 = scmp.eq.s32.totalorder %s28, 1
      %p298 = scmp.ne.s32.totalorder %s293, %s295
      %p299 = scmp.eq.s32.totalorder %s28, 0
      %p300 = por %p298, %p299
      %p301 = scmp.ne.s32.totalorder %s293, %s295
      %p302 = scmp.eq.s32.totalorder %s33, 1
      %p303 = por %p301, %p302
      %p304 = scmp.ne.s32.totalorder %s295, %s296
      %p305 = scmp.eq.s32.totalorder %s33, 0
      %p306 = por %p304, %p305
      %p307 = scmp.ne.s32.totalorder %s295, %s296
      %p308 = scmp.eq.s32.totalorder %s34, 1
      %p309 = por %p307, %p308
      %p311 = scmp.ne.s32.totalorder %s296, %s310
      %p312 = scmp.eq.s32.totalorder %s34, 0
      %p313 = por %p311, %p312
      %s314 = ssub.s32 %s28, %s35
      %p315 = scmp.eq.s32.totalorder %s314, 0
      %s317 = sadd.s32 %s316, 1
      %s318 = scalar_select %p315, %s316, %s317
      %p321 = pneg %p315
      %p322 = scmp.eq.s32.totalorder %s28, 1
      %p323 = por %p321, %p322
      %p324 = scmp.ne.s32.totalorder %s316, %s319
      %p325 = scmp.eq.s32.totalorder %s28, 0
      %p326 = por %p324, %p325
      %p327 = scmp.ne.s32.totalorder %s316, %s319
      %p328 = scmp.eq.s32.totalorder %s33, 1
      %p329 = por %p327, %p328
      %p330 = scmp.ne.s32.totalorder %s319, %s320
      %p331 = scmp.eq.s32.totalorder %s33, 0
      %p332 = por %p330, %p331
      %p333 = scmp.ne.s32.totalorder %s319, %s320
      %p334 = scmp.eq.s32.totalorder %s34, 1
      %p335 = por %p333, %p334
      %p337 = scmp.ne.s32.totalorder %s320, %s336
      %p338 = scmp.eq.s32.totalorder %s34, 0
      %p339 = por %p337, %p338
      %p340 = scmp.le.s32.totalorder 1, %s28
      %p341 = scmp.lt.s32.totalorder %s28, 3
      %p342 = pnand %p340, %p341
      %p343 = pneg %p342
      // Predicated region
      $region9: #{tpu_custom_call.1} parent=5 // pred_check
        _
      $region10: #{tpu_custom_call.1} parent=5 // pred_check_branch
        %345 = sbr.rel (%p342) target = $region12
      $region11: #{tpu_custom_call.1} parent=5 // pred_region
        %s346 = ssub.s32 %s28, 1
        // Predicated region
        $region13: #{tpu_custom_call.1} parent=11 // pred_check
          %p347 = pneg %p75
        $region14: #{tpu_custom_call.1} parent=11 // pred_check_branch
          %349 = sbr.rel (%p347) target = $region16
        $region15: #{tpu_custom_call.1} parent=11 // pred_region
          %s351 = ssub.s32 6144, 6144
          %352 = vsyncadd [#allocation6], %s351
          %s353 = sshll.u32 [#allocation5], 4
          %s354 = int_to_ptr.vmem [resolvable:$true] %s353
          %359 = dma.hbm_to_vmem [thread:$0]  %s1, 6144, %s354, [#allocation6], 192, 192, 12
        $region16: #{tpu_custom_call.1} parent=11 // pred_fallthru
          _
        // Predicated region
        $region17: #{tpu_custom_call.1} parent=11 // pred_check
          %p360 = pneg %p96
        $region18: #{tpu_custom_call.1} parent=11 // pred_check_branch
          %362 = sbr.rel (%p360) target = $region20
        $region19: #{tpu_custom_call.1} parent=11 // pred_region
          %s364 = ssub.s32 96, 96
          %365 = vsyncadd [#allocation6], %s364
          %s366 = sshll.u32 [#allocation7], 4
          %s367 = int_to_ptr.vmem [resolvable:$true] %s366
          %372 = dma.hbm_to_vmem [thread:$0]  %s2, 96, %s367, [#allocation6], 48, 48, 3
        $region20: #{tpu_custom_call.1} parent=11 // pred_fallthru
          _
        // Predicated region
        $region21: #{tpu_custom_call.1} parent=11 // pred_check
          %p373 = pneg %p117
        $region22: #{tpu_custom_call.1} parent=11 // pred_check_branch
          %375 = sbr.rel (%p373) target = $region24
        $region23: #{tpu_custom_call.1} parent=11 // pred_region
          %s377 = ssub.s32 2048, 2048
          %378 = vsyncadd [#allocation9], %s377
          %s379 = sshll.u32 [#allocation8], 4
          %s380 = int_to_ptr.vmem [resolvable:$true] %s379
          %385 = dma.hbm_to_vmem [thread:$0]  %s3, 2048, %s380, [#allocation9], 64, 64, 4
        $region24: #{tpu_custom_call.1} parent=11 // pred_fallthru
          _
        // Predicated region
        $region25: #{tpu_custom_call.1} parent=11 // pred_check
          %p386 = pneg %p138
        $region26: #{tpu_custom_call.1} parent=11 // pred_check_branch
          %388 = sbr.rel (%p386) target = $region28
        $region27: #{tpu_custom_call.1} parent=11 // pred_region
          _
        $region28: #{tpu_custom_call.1} parent=11 // pred_fallthru
          _
        // Predicated region
        $region29: #{tpu_custom_call.1} parent=11 // pred_check
          %p389 = pneg %p159
        $region30: #{tpu_custom_call.1} parent=11 // pred_check_branch
          %391 = sbr.rel (%p389) target = $region32
        $region31: #{tpu_custom_call.1} parent=11 // pred_region
          _
        $region32: #{tpu_custom_call.1} parent=11 // pred_fallthru
          _
        // Predicated region
        $region33: #{tpu_custom_call.1} parent=11 // pred_check
          %p392 = pneg %p180
        $region34: #{tpu_custom_call.1} parent=11 // pred_check_branch
          %394 = sbr.rel (%p392) target = $region36
        $region35: #{tpu_custom_call.1} parent=11 // pred_region
          _
        $region36: #{tpu_custom_call.1} parent=11 // pred_fallthru
          _
        // Predicated region
        $region37: #{tpu_custom_call.1} parent=11 // pred_check
          %p395 = pneg %p201
        $region38: #{tpu_custom_call.1} parent=11 // pred_check_branch
          %397 = sbr.rel (%p395) target = $region40
        $region39: #{tpu_custom_call.1} parent=11 // pred_region
          %s399 = ssub.s32 4096, 4096
          %400 = vsyncadd [#allocation9], %s399
          %s401 = sshll.u32 [#allocation10], 4
          %s402 = int_to_ptr.vmem [resolvable:$true] %s401
          %407 = dma.hbm_to_vmem [thread:$0]  %s7, 4096, %s402, [#allocation9], 128, 128, 8
        $region40: #{tpu_custom_call.1} parent=11 // pred_fallthru
          _
        // Predicated region
        $region41: #{tpu_custom_call.1} parent=11 // pred_check
          %p408 = pneg %p222
        $region42: #{tpu_custom_call.1} parent=11 // pred_check_branch
          %410 = sbr.rel (%p408) target = $region44
        $region43: #{tpu_custom_call.1} parent=11 // pred_region
          _
        $region44: #{tpu_custom_call.1} parent=11 // pred_fallthru
          _
        // Predicated region
        $region45: #{tpu_custom_call.1} parent=11 // pred_check
          %p411 = pneg %p243
        $region46: #{tpu_custom_call.1} parent=11 // pred_check_branch
          %413 = sbr.rel (%p411) target = $region48
        $region47: #{tpu_custom_call.1} parent=11 // pred_region
          %s415 = ssub.s32 4096, 4096
          %416 = vsyncadd [#allocation12], %s415
          %s417 = sshll.u32 [#allocation11], 4
          %s418 = int_to_ptr.vmem [resolvable:$true] %s417
          %423 = dma.hbm_to_vmem [thread:$0]  %s9, 4096, %s418, [#allocation12], 64, 64, 4
        $region48: #{tpu_custom_call.1} parent=11 // pred_fallthru
          _
        // Predicated region
        $region49: #{tpu_custom_call.1} parent=11 // pred_check
          %p424 = pneg %p264
        $region50: #{tpu_custom_call.1} parent=11 // pred_check_branch
          %426 = sbr.rel (%p424) target = $region52
        $region51: #{tpu_custom_call.1} parent=11 // pred_region
          _
        $region52: #{tpu_custom_call.1} parent=11 // pred_fallthru
          _
        // Predicated region
        $region53: #{tpu_custom_call.1} parent=11 // pred_check
          %p427 = pneg %p285
        $region54: #{tpu_custom_call.1} parent=11 // pred_check_branch
          %429 = sbr.rel (%p427) target = $region56
        $region55: #{tpu_custom_call.1} parent=11 // pred_region
          _
        $region56: #{tpu_custom_call.1} parent=11 // pred_fallthru
          _
        // Predicated region
        $region57: #{tpu_custom_call.1} parent=11 // pred_check
          %p430 = pneg %p306
        $region58: #{tpu_custom_call.1} parent=11 // pred_check_branch
          %432 = sbr.rel (%p430) target = $region60
        $region59: #{tpu_custom_call.1} parent=11 // pred_region
          _
        $region60: #{tpu_custom_call.1} parent=11 // pred_fallthru
          _
      $region12: #{tpu_custom_call.1} parent=5 // pred_fallthru
        _
      %p433 = scmp.lt.s32.totalorder %s28, 2
      // Predicated region
      $region61: #{tpu_custom_call.1} parent=5 // pred_check
        %p434 = pneg %p433
      $region62: #{tpu_custom_call.1} parent=5 // pred_check_branch
        %436 = sbr.rel (%p434) target = $region64
      $region63: #{tpu_custom_call.1} parent=5 // pred_region
        // Predicated region
        $region65: #{tpu_custom_call.1} parent=63 // pred_check
          %p437 = pneg %p48
        $region66: #{tpu_custom_call.1} parent=63 // pred_check_branch
          %439 = sbr.rel (%p437) target = $region68
        $region67: #{tpu_custom_call.1} parent=63 // pred_region
          %s440 = sand.u32 %s38, 1
          %s441 = scalar_lea.sflag [#allocation3], %s440
          %s442 = sand.u32 %s38, 1
          %s443 = smul.addr %s442, 8
          %s444 = scalar_lea.vmem [#allocation2], %s443
          %s446 = ssub.s32 128, 128
          %447 = vsyncadd %s441, %s446
          %s448 = smul.addr %s28, 128
          %s449 = scalar_lea.hbm %s0, %s448
          %s451 = sshll.u32 %s444, 4
          %s452 = int_to_ptr.vmem [resolvable:$true] %s451
          %454 = dma.hbm_to_vmem [thread:$0]  %s449, 128, %s452, %s441
        $region68: #{tpu_custom_call.1} parent=63 // pred_fallthru
          _
      $region64: #{tpu_custom_call.1} parent=5 // pred_fallthru
        _
      %p455 = scmp.le.s32.totalorder 1, %s28
      %p456 = scmp.lt.s32.totalorder %s28, 3
      %p457 = pnand %p455, %p456
      %p458 = pneg %p457
      // Predicated region
      $region69: #{tpu_custom_call.1} parent=5 // pred_check
        _
      $region70: #{tpu_custom_call.1} parent=5 // pred_check_branch
        %460 = sbr.rel (%p457) target = $region72
      $region71: #{tpu_custom_call.1} parent=5 // pred_region
        %s461 = ssub.s32 %s28, 1
        %s462 = sand.u32 %s41, 1
        %s463 = scalar_lea.sflag [#allocation3], %s462
        %s464 = sand.u32 %s41, 1
        %s465 = smul.addr %s464, 8
        %s466 = scalar_lea.vmem [#allocation2], %s465
        // Predicated region
        $region73: #{tpu_custom_call.1} parent=71 // pred_check
          %p467 = pneg %p54
        $region74: #{tpu_custom_call.1} parent=71 // pred_check_branch
          %469 = sbr.rel (%p467) target = $region76
        $region75: #{tpu_custom_call.1} parent=71 // pred_region
          %470 = dma.done %s463, 128
        $region76: #{tpu_custom_call.1} parent=71 // pred_fallthru
          _
        // Predicated region
        $region77: #{tpu_custom_call.1} parent=71 // pred_check
          %p471 = pneg %p75
        $region78: #{tpu_custom_call.1} parent=71 // pred_check_branch
          %473 = sbr.rel (%p471) target = $region80
        $region79: #{tpu_custom_call.1} parent=71 // pred_region
          %474 = dma.done [#allocation6], 6144
        $region80: #{tpu_custom_call.1} parent=71 // pred_fallthru
          _
        // Predicated region
        $region81: #{tpu_custom_call.1} parent=71 // pred_check
          %p475 = pneg %p96
        $region82: #{tpu_custom_call.1} parent=71 // pred_check_branch
          %477 = sbr.rel (%p475) target = $region84
        $region83: #{tpu_custom_call.1} parent=71 // pred_region
          %478 = dma.done [#allocation6], 96
        $region84: #{tpu_custom_call.1} parent=71 // pred_fallthru
          _
        // Predicated region
        $region85: #{tpu_custom_call.1} parent=71 // pred_check
          %p479 = pneg %p117
        $region86: #{tpu_custom_call.1} parent=71 // pred_check_branch
          %481 = sbr.rel (%p479) target = $region88
        $region87: #{tpu_custom_call.1} parent=71 // pred_region
          %482 = dma.done [#allocation9], 2048
        $region88: #{tpu_custom_call.1} parent=71 // pred_fallthru
          _
        // Predicated region
        $region89: #{tpu_custom_call.1} parent=71 // pred_check
          %p483 = pneg %p201
        $region90: #{tpu_custom_call.1} parent=71 // pred_check_branch
          %485 = sbr.rel (%p483) target = $region92
        $region91: #{tpu_custom_call.1} parent=71 // pred_region
          %486 = dma.done [#allocation9], 4096
        $region92: #{tpu_custom_call.1} parent=71 // pred_fallthru
          _
        // Predicated region
        $region93: #{tpu_custom_call.1} parent=71 // pred_check
          %p487 = pneg %p243
        $region94: #{tpu_custom_call.1} parent=71 // pred_check_branch
          %489 = sbr.rel (%p487) target = $region96
        $region95: #{tpu_custom_call.1} parent=71 // pred_region
          %490 = dma.done [#allocation12], 4096
        $region96: #{tpu_custom_call.1} parent=71 // pred_fallthru
          _
        %s491 = sand.u32 %s41, 1
        %s492 = scalar_lea.sflag [#allocation3], %s491
        %s493 = sand.u32 %s41, 1
        %s494 = smul.addr %s493, 8
        %s495 = scalar_lea.vmem [#allocation2], %s494
        %p496 = pneg %p54
        %p497 = pneg %p51
        %p498 = pneg %p75
        %p499 = pneg %p72
        %p500 = pneg %p96
        %p501 = pneg %p93
        %p502 = pneg %p117
        %p503 = pneg %p114
        %p504 = pneg %p138
        %p505 = pneg %p135
        %p506 = pneg %p159
        %p507 = pneg %p156
        %p508 = pneg %p180
        %p509 = pneg %p177
        %p510 = pneg %p201
        %p511 = pneg %p198
        %p512 = pneg %p222
        %p513 = pneg %p219
        %p514 = pneg %p243
        %p515 = pneg %p240
        %p516 = pneg %p264
        %p517 = pneg %p261
        %p518 = pneg %p285
        %p519 = pneg %p282
        %p520 = pneg %p306
        %p521 = pneg %p303
        %p522 = pneg %p332
        %p523 = pneg %p329
        %s524 = sand.u32 %s319, 1
        %s525 = scalar_lea.sflag [#allocation4], %s524
        %s526 = sand.u32 %s319, 1
        %s527 = smul.addr %s526, 4
        %s528 = scalar_lea.vmem [#allocation13], %s527
        %v530 = vld [vmem:[%s466] sm:$0xff]
        %v531 = vld [vmem:[#allocation5] sm:$0xff]
        %v532 = vld [vmem:[#allocation5 + $0x8] sm:$0xf]
        %v533 = vld [vmem:[#allocation5 + $0xc] sm:$0xff]
        %v534 = vld [vmem:[#allocation5 + $0x14] sm:$0xf]
        %v535 = vld [vmem:[#allocation5 + $0x18] sm:$0xff]
        %v536 = vld [vmem:[#allocation5 + $0x20] sm:$0xf]
        %v537 = vld [vmem:[#allocation5 + $0x24] sm:$0xff]
        %v538 = vld [vmem:[#allocation5 + $0x2c] sm:$0xf]
        %v539 = vld [vmem:[#allocation5 + $0x30] sm:$0xff]
        %v540 = vld [vmem:[#allocation5 + $0x38] sm:$0xf]
        %v541 = vld [vmem:[#allocation5 + $0x3c] sm:$0xff]
        %v542 = vld [vmem:[#allocation5 + $0x44] sm:$0xf]
        %v543 = vld [vmem:[#allocation5 + $0x48] sm:$0xff]
        %v544 = vld [vmem:[#allocation5 + $0x50] sm:$0xf]
        %v545 = vld [vmem:[#allocation5 + $0x54] sm:$0xff]
        %v546 = vld [vmem:[#allocation5 + $0x5c] sm:$0xf]
        %v547 = vld [vmem:[#allocation5 + $0x60] sm:$0xff]
        %v548 = vld [vmem:[#allocation5 + $0x68] sm:$0xf]
        %v549 = vld [vmem:[#allocation5 + $0x6c] sm:$0xff]
        %v550 = vld [vmem:[#allocation5 + $0x74] sm:$0xf]
        %v551 = vld [vmem:[#allocation5 + $0x78] sm:$0xff]
        %v552 = vld [vmem:[#allocation5 + $0x80] sm:$0xf]
        %v553 = vld [vmem:[#allocation5 + $0x84] sm:$0xff]
        %v554 = vld [vmem:[#allocation5 + $0x8c] sm:$0xf]
        %v555 = vld [vmem:[#allocation5 + $0x90] sm:$0xff]
        %v556 = vld [vmem:[#allocation5 + $0x98] sm:$0xf]
        %v557 = vld [vmem:[#allocation5 + $0x9c] sm:$0xff]
        %v558 = vld [vmem:[#allocation5 + $0xa4] sm:$0xf]
        %v559 = vld [vmem:[#allocation5 + $0xa8] sm:$0xff]
        %v560 = vld [vmem:[#allocation5 + $0xb0] sm:$0xf]
        %v561 = vld [vmem:[#allocation5 + $0xb4] sm:$0xff]
        %v562 = vld [vmem:[#allocation5 + $0xbc] sm:$0xf]
        %v563 = vld [vmem:[#allocation8] sm:$0xf]
        %v564 = vld [vmem:[#allocation8 + $0x4] sm:$0xf]
        %v565 = vld [vmem:[#allocation8 + $0x8] sm:$0xf]
        %v566 = vld [vmem:[#allocation8 + $0xc] sm:$0xf]
        %v567 = vld [vmem:[#allocation8 + $0x10] sm:$0xf]
        %v568 = vld [vmem:[#allocation8 + $0x14] sm:$0xf]
        %v569 = vld [vmem:[#allocation8 + $0x18] sm:$0xf]
        %v570 = vld [vmem:[#allocation8 + $0x1c] sm:$0xf]
        %v571 = vld [vmem:[#allocation8 + $0x20] sm:$0xf]
        %v572 = vld [vmem:[#allocation8 + $0x24] sm:$0xf]
        %v573 = vld [vmem:[#allocation8 + $0x28] sm:$0xf]
        %v574 = vld [vmem:[#allocation8 + $0x2c] sm:$0xf]
        %v575 = vld [vmem:[#allocation8 + $0x30] sm:$0xf]
        %v576 = vld [vmem:[#allocation8 + $0x34] sm:$0xf]
        %v577 = vld [vmem:[#allocation8 + $0x38] sm:$0xf]
        %v578 = vld [vmem:[#allocation8 + $0x3c] sm:$0xf]
        %v579 = vpack.c.bf16 %v530, %v530
        %v580 = vld [vmem:[#allocation7] sm:$0x7]
        %v582 = vlaneseq
        %v583 = vshrl.u32 %v582, 7
        %v584 = vsub.s32 0, %v583
        %v585 = vrot.slane %v580, %v584
        %v586 = vlaneseq
        %v587 = vshrl.u32 %v586, 7
        %v588 = vsub.s32 1, %v587
        %v589 = vrot.slane %v580, %v588
        %v590 = vlaneseq
        %v591 = vshrl.u32 %v590, 7
        %v592 = vsub.s32 2, %v591
        %v593 = vrot.slane %v580, %v592
        %v629 = vunpack.c.l.b16 %v531
        %v630 = vunpack.c.h.b16 %v531
        %v631 = vunpack.c.l.b16 %v532
        %v632 = vunpack.c.l.b16 %v533
        %v633 = vunpack.c.h.b16 %v533
        %v634 = vunpack.c.l.b16 %v534
        %v635 = vunpack.c.l.b16 %v535
        %v636 = vunpack.c.h.b16 %v535
        %v637 = vunpack.c.l.b16 %v536
        %v638 = vunpack.c.l.b16 %v537
        %v639 = vunpack.c.h.b16 %v537
        %v640 = vunpack.c.l.b16 %v538
        %v641 = vunpack.c.l.b16 %v539
        %v642 = vunpack.c.h.b16 %v539
        %v643 = vunpack.c.l.b16 %v540
        %v644 = vunpack.c.l.b16 %v541
        %v645 = vunpack.c.h.b16 %v541
        %v646 = vunpack.c.l.b16 %v542
        %v647 = vunpack.c.l.b16 %v543
        %v648 = vunpack.c.h.b16 %v543
        %v649 = vunpack.c.l.b16 %v544
        %v650 = vunpack.c.l.b16 %v545
        %v651 = vunpack.c.h.b16 %v545
        %v652 = vunpack.c.l.b16 %v546
        %v653 = vunpack.c.l.b16 %v547
        %v654 = vunpack.c.h.b16 %v547
        %v655 = vunpack.c.l.b16 %v548
        %v656 = vunpack.c.l.b16 %v549
        %v657 = vunpack.c.h.b16 %v549
        %v658 = vunpack.c.l.b16 %v550
        %v659 = vunpack.c.l.b16 %v551
        %v660 = vunpack.c.h.b16 %v551
        %v661 = vunpack.c.l.b16 %v552
        %v662 = vunpack.c.l.b16 %v553
        %v663 = vunpack.c.h.b16 %v553
        %v664 = vunpack.c.l.b16 %v554
        %v665 = vunpack.c.l.b16 %v555
        %v666 = vunpack.c.h.b16 %v555
        %v667 = vunpack.c.l.b16 %v556
        %v668 = vunpack.c.l.b16 %v557
        %v669 = vunpack.c.h.b16 %v557
        %v670 = vunpack.c.l.b16 %v558
        %v671 = vunpack.c.l.b16 %v559
        %v672 = vunpack.c.h.b16 %v559
        %v673 = vunpack.c.l.b16 %v560
        %v674 = vunpack.c.l.b16 %v561
        %v675 = vunpack.c.h.b16 %v561
        %v676 = vunpack.c.l.b16 %v562
        %v677 = vpack.c.b16 %v632, %v629
        %v678 = vpack.c.b16 %v633, %v630
        %v679 = vpack.c.b16 %v634, %v631
        %v680 = vpack.c.b16 %v638, %v635
        %v681 = vpack.c.b16 %v639, %v636
        %v682 = vpack.c.b16 %v640, %v637
        %v683 = vpack.c.b16 %v644, %v641
        %v684 = vpack.c.b16 %v645, %v642
        %v685 = vpack.c.b16 %v646, %v643
        %v686 = vpack.c.b16 %v650, %v647
        %v687 = vpack.c.b16 %v651, %v648
        %v688 = vpack.c.b16 %v652, %v649
        %v689 = vpack.c.b16 %v656, %v653
        %v690 = vpack.c.b16 %v657, %v654
        %v691 = vpack.c.b16 %v658, %v655
        %v692 = vpack.c.b16 %v662, %v659
        %v693 = vpack.c.b16 %v663, %v660
        %v694 = vpack.c.b16 %v664, %v661
        %v695 = vpack.c.b16 %v668, %v665
        %v696 = vpack.c.b16 %v669, %v666
        %v697 = vpack.c.b16 %v670, %v667
        %v698 = vpack.c.b16 %v674, %v671
        %v699 = vpack.c.b16 %v675, %v672
        %v700 = vpack.c.b16 %v676, %v673
        %725 = vmatprep.subr.bf16.mxu0 %v699
        %726 = vmatpush1.bf16.msra.mxu0 %v698
        %727 = vmatprep.subr.bf16.mxu0 %v696
        %728 = vmatpush1.bf16.msra.mxu0 %v695
        %729 = vmatprep.subr.bf16.mxu0 %v693
        %730 = vmatpush1.bf16.msra.mxu0 %v692
        %731 = vmatprep.subr.bf16.mxu0 %v690
        %732 = vmatpush1.bf16.msra.mxu0 %v689
        %733 = vmatprep.subr.bf16.mxu0 %v687
        %734 = vmatpush1.bf16.msra.mxu0 %v686
        %735 = vmatprep.subr.bf16.mxu0 %v684
        %736 = vmatpush1.bf16.msra.mxu0 %v683
        %737 = vmatprep.subr.bf16.mxu0 %v681
        %738 = vmatpush1.bf16.msra.mxu0 %v680
        %739 = vmatprep.subr.bf16.mxu0 %v678
        %740 = vmatpush1.bf16.msra.mxu0 %v677
        %741 = vmatprep.subr.bf16.mxu0 0
        %742 = vmatpush2.bf16.msra.mxu0 0
        %743 = vmatprep.subr.bf16.mxu0 0
        %744 = vmatpush2.bf16.msra.mxu0 0
        %745 = vmatprep.subr.bf16.mxu0 0
        %746 = vmatpush2.bf16.msra.mxu0 0
        %747 = vmatprep.subr.bf16.mxu0 0
        %748 = vmatpush2.bf16.msra.mxu0 0
        %749 = vmatprep.subr.bf16.mxu0 0
        %750 = vmatpush2.bf16.msra.mxu0 0
        %751 = vmatprep.subr.bf16.mxu0 0
        %752 = vmatpush2.bf16.msra.mxu0 0
        %753 = vmatprep.subr.bf16.mxu0 0
        %754 = vmatpush2.bf16.msra.mxu0 0
        %755 = vmatprep.subr.bf16.mxu0 0
        %756 = vmatpush2.bf16.msra.mxu0 0
        %757 = vmatprep.mubr.bf16.mxu0 0
        %758 = vmatmul.mubr.bf16.gmra.mxu0 %v579
        %v759 = vpop.f32.mrf.mxu0
        %v760 = vadd.f32 %v585, %v759
        %v761 = vpop.f32.mrf.mxu0
        %v762 = vadd.f32 %v589, %v761
        %v763 = vpop.f32.mrf.mxu0
        %v764 = vpop.f32.mrf.mxu0
        %765 = vdwg.mxu0
        %766 = vmatprep.subr.bf16.mxu0 0
        %767 = vmatpush1.bf16.msra.mxu0 %v700
        %768 = vmatprep.subr.bf16.mxu0 0
        %769 = vmatpush1.bf16.msra.mxu0 %v697
        %770 = vmatprep.subr.bf16.mxu0 0
        %771 = vmatpush1.bf16.msra.mxu0 %v694
        %772 = vmatprep.subr.bf16.mxu0 0
        %773 = vmatpush1.bf16.msra.mxu0 %v691
        %774 = vmatprep.subr.bf16.mxu0 0
        %775 = vmatpush1.bf16.msra.mxu0 %v688
        %776 = vmatprep.subr.bf16.mxu0 0
        %777 = vmatpush1.bf16.msra.mxu0 %v685
        %778 = vmatprep.subr.bf16.mxu0 0
        %779 = vmatpush1.bf16.msra.mxu0 %v682
        %780 = vmatprep.subr.bf16.mxu0 0
        %781 = vmatpush1.bf16.msra.mxu0 %v679
        %782 = vmatprep.subr.bf16.mxu0 0
        %783 = vmatpush2.bf16.msra.mxu0 0
        %784 = vmatprep.subr.bf16.mxu0 0
        %785 = vmatpush2.bf16.msra.mxu0 0
        %786 = vmatprep.subr.bf16.mxu0 0
        %787 = vmatpush2.bf16.msra.mxu0 0
        %788 = vmatprep.subr.bf16.mxu0 0
        %789 = vmatpush2.bf16.msra.mxu0 0
        %790 = vmatprep.subr.bf16.mxu0 0
        %791 = vmatpush2.bf16.msra.mxu0 0
        %792 = vmatprep.subr.bf16.mxu0 0
        %793 = vmatpush2.bf16.msra.mxu0 0
        %794 = vmatprep.subr.bf16.mxu0 0
        %795 = vmatpush2.bf16.msra.mxu0 0
        %796 = vmatprep.subr.bf16.mxu0 0
        %797 = vmatpush2.bf16.msra.mxu0 0
        %798 = vmatprep.mubr.bf16.mxu0 0
        %799 = vmatmul.mubr.bf16.gmra.mxu0 %v579
        %v800 = vpop.f32.mrf.mxu0
        %v801 = vadd.f32 %v593, %v800
        %v802 = vpop.f32.mrf.mxu0
        %v803 = vpop.f32.mrf.mxu0
        %v804 = vpop.f32.mrf.mxu0
        %805 = vdwg.mxu0
        %v806 = vpack.c.bf16 %v760, %v760
        %v807 = vpack.c.bf16 %v762, %v762
        %v808 = vpack.c.bf16 %v801, %v801
        %vm809 = vcmask 261120
        %v811 = vsel %vm809, %v806, 0
        %v814 = vsel %vm809, %v807, 0
        %816 = vmatprep.subr.bf16.mxu0 0
        %817 = vmatpush1.bf16.xpose.msra.mxu0 0
        %818 = vmatprep.subr.bf16.mxu0 0
        %819 = vmatpush1.bf16.xpose.msra.mxu0 0
        %820 = vmatprep.subr.bf16.mxu0 0
        %821 = vmatpush1.bf16.xpose.msra.mxu0 0
        %822 = vmatprep.subr.bf16.mxu0 0
        %823 = vmatpush1.bf16.xpose.msra.mxu0 0
        %824 = vmatprep.subr.bf16.mxu0 0
        %825 = vmatpush1.bf16.xpose.msra.mxu0 0
        %826 = vmatprep.subr.bf16.mxu0 0
        %827 = vmatpush1.bf16.xpose.msra.mxu0 0
        %828 = vmatprep.subr.bf16.mxu0 0
        %829 = vmatpush1.bf16.xpose.msra.mxu0 0
        %830 = vmatprep.subr.bf16.mxu0 0
        %831 = vmatpush1.bf16.xpose.msra.mxu0 %v814
        %832 = vmatprep.subr.bf16.mxu0 0
        %833 = vmatpush2.bf16.xpose.msra.mxu0 0
        %834 = vmatprep.subr.bf16.mxu0 0
        %835 = vmatpush2.bf16.xpose.msra.mxu0 0
        %836 = vmatprep.subr.bf16.mxu0 0
        %837 = vmatpush2.bf16.xpose.msra.mxu0 0
        %838 = vmatprep.subr.bf16.mxu0 0
        %839 = vmatpush2.bf16.xpose.msra.mxu0 0
        %840 = vmatprep.subr.bf16.mxu0 0
        %841 = vmatpush2.bf16.xpose.msra.mxu0 0
        %842 = vmatprep.subr.bf16.mxu0 0
        %843 = vmatpush2.bf16.xpose.msra.mxu0 0
        %844 = vmatprep.subr.bf16.mxu0 0
        %845 = vmatpush2.bf16.xpose.msra.mxu0 0
        %846 = vmatprep.subr.bf16.mxu0 0
        %847 = vmatpush2.bf16.xpose.msra.mxu0 0
        %848 = vmatprep.mubr.bf16.mxu0 0
        %849 = vmatmul.mubr.bf16.gmra.mxu0 %v811
        %v850 = vpop.f32.mrf.mxu0
        %v851 = vadd.f32 0.0, %v850
        %v852 = vpop.f32.mrf.mxu0
        %v853 = vpop.f32.mrf.mxu0
        %v854 = vpop.f32.mrf.mxu0
        %855 = vdwg.mxu0
        %vm856 = vcmask 64512
        %v857 = vsel %vm856, %v851, -inf
        %858 = vmax.xlane.f32.xlu0 %v857
        %v859 = vpop.xlane.xlu0 %858
        %v860 = vsub.f32 %v851, %v859
        %v861 = vmul.f32 %v860, 1.442695
        %v862 = vpow.pop %v861
        %v863 = vsel %vm856, %v862, 0.0
        %864 = vadd.xlane.f32.xlu0 %v863
        %v865 = vpop.xlane.xlu0 %864
        %v866 = vrcp.pop %v865
        %v867 = vmul.f32 %v862, %v866
        %v868 = vpack.c.bf16 %v867, %v867
        %v870 = vsel %vm856, %v868, 0
        %vm872 = vcmask 1043456
        %v874 = vsel %vm872, %v808, 0
        %876 = vmatprep.subr.bf16.mxu0 0
        %877 = vmatpush1.bf16.msra.mxu0 0
        %878 = vmatprep.subr.bf16.mxu0 0
        %879 = vmatpush1.bf16.msra.mxu0 0
        %880 = vmatprep.subr.bf16.mxu0 0
        %881 = vmatpush1.bf16.msra.mxu0 0
        %882 = vmatprep.subr.bf16.mxu0 0
        %883 = vmatpush1.bf16.msra.mxu0 0
        %884 = vmatprep.subr.bf16.mxu0 0
        %885 = vmatpush1.bf16.msra.mxu0 0
        %886 = vmatprep.subr.bf16.mxu0 0
        %887 = vmatpush1.bf16.msra.mxu0 0
        %888 = vmatprep.subr.bf16.mxu0 0
        %889 = vmatpush1.bf16.msra.mxu0 0
        %890 = vmatprep.subr.bf16.mxu0 0
        %891 = vmatpush1.bf16.msra.mxu0 %v874
        %892 = vmatprep.subr.bf16.mxu0 0
        %893 = vmatpush2.bf16.msra.mxu0 0
        %894 = vmatprep.subr.bf16.mxu0 0
        %895 = vmatpush2.bf16.msra.mxu0 0
        %896 = vmatprep.subr.bf16.mxu0 0
        %897 = vmatpush2.bf16.msra.mxu0 0
        %898 = vmatprep.subr.bf16.mxu0 0
        %899 = vmatpush2.bf16.msra.mxu0 0
        %900 = vmatprep.subr.bf16.mxu0 0
        %901 = vmatpush2.bf16.msra.mxu0 0
        %902 = vmatprep.subr.bf16.mxu0 0
        %903 = vmatpush2.bf16.msra.mxu0 0
        %904 = vmatprep.subr.bf16.mxu0 0
        %905 = vmatpush2.bf16.msra.mxu0 0
        %906 = vmatprep.subr.bf16.mxu0 0
        %907 = vmatpush2.bf16.msra.mxu0 0
        %908 = vmatprep.mubr.bf16.mxu0 0
        %909 = vmatmul.mubr.bf16.gmra.mxu0 %v870
        %v910 = vpop.f32.mrf.mxu0
        %v911 = vadd.f32 0.0, %v910
        %v912 = vpop.f32.mrf.mxu0
        %v913 = vpop.f32.mrf.mxu0
        %v914 = vpop.f32.mrf.mxu0
        %915 = vdwg.mxu0
        %v916 = vpack.c.bf16 %v911, %v911
        %918 = vrot.lane.b32.xlu0 %v806, 96
        %v919 = vpop.permute.xlu0 %918
        %921 = vrot.lane.b32.xlu0 %v807, 96
        %v922 = vpop.permute.xlu0 %921
        %v924 = vsel %vm809, %v919, 0
        %v927 = vsel %vm809, %v922, 0
        %929 = vmatprep.subr.bf16.mxu0 0
        %930 = vmatpush1.bf16.xpose.msra.mxu0 0
        %931 = vmatprep.subr.bf16.mxu0 0
        %932 = vmatpush1.bf16.xpose.msra.mxu0 0
        %933 = vmatprep.subr.bf16.mxu0 0
        %934 = vmatpush1.bf16.xpose.msra.mxu0 0
        %935 = vmatprep.subr.bf16.mxu0 0
        %936 = vmatpush1.bf16.xpose.msra.mxu0 0
        %937 = vmatprep.subr.bf16.mxu0 0
        %938 = vmatpush1.bf16.xpose.msra.mxu0 0
        %939 = vmatprep.subr.bf16.mxu0 0
        %940 = vmatpush1.bf16.xpose.msra.mxu0 0
        %941 = vmatprep.subr.bf16.mxu0 0
        %942 = vmatpush1.bf16.xpose.msra.mxu0 0
        %943 = vmatprep.subr.bf16.mxu0 0
        %944 = vmatpush1.bf16.xpose.msra.mxu0 %v927
        %945 = vmatprep.subr.bf16.mxu0 0
        %946 = vmatpush2.bf16.xpose.msra.mxu0 0
        %947 = vmatprep.subr.bf16.mxu0 0
        %948 = vmatpush2.bf16.xpose.msra.mxu0 0
        %949 = vmatprep.subr.bf16.mxu0 0
        %950 = vmatpush2.bf16.xpose.msra.mxu0 0
        %951 = vmatprep.subr.bf16.mxu0 0
        %952 = vmatpush2.bf16.xpose.msra.mxu0 0
        %953 = vmatprep.subr.bf16.mxu0 0
        %954 = vmatpush2.bf16.xpose.msra.mxu0 0
        %955 = vmatprep.subr.bf16.mxu0 0
        %956 = vmatpush2.bf16.xpose.msra.mxu0 0
        %957 = vmatprep.subr.bf16.mxu0 0
        %958 = vmatpush2.bf16.xpose.msra.mxu0 0
        %959 = vmatprep.subr.bf16.mxu0 0
        %960 = vmatpush2.bf16.xpose.msra.mxu0 0
        %961 = vmatprep.mubr.bf16.mxu0 0
        %962 = vmatmul.mubr.bf16.gmra.mxu0 %v924
        %v963 = vpop.f32.mrf.mxu0
        %v964 = vadd.f32 0.0, %v963
        %v965 = vpop.f32.mrf.mxu0
        %v966 = vpop.f32.mrf.mxu0
        %v967 = vpop.f32.mrf.mxu0
        %968 = vdwg.mxu0
        %v969 = vsel %vm856, %v964, -inf
        %970 = vmax.xlane.f32.xlu0 %v969
        %v971 = vpop.xlane.xlu0 %970
        %v972 = vsub.f32 %v964, %v971
        %v973 = vmul.f32 %v972, 1.442695
        %v974 = vpow.pop %v973
        %v975 = vsel %vm856, %v974, 0.0
        %976 = vadd.xlane.f32.xlu0 %v975
        %v977 = vpop.xlane.xlu0 %976
        %v978 = vrcp.pop %v977
        %v979 = vmul.f32 %v974, %v978
        %v980 = vpack.c.bf16 %v979, %v979
        %982 = vrot.lane.b32.xlu0 %v808, 96
        %v983 = vpop.permute.xlu0 %982
        %v985 = vsel %vm856, %v980, 0
        %v988 = vsel %vm872, %v983, 0
        %990 = vmatprep.subr.bf16.mxu0 0
        %991 = vmatpush1.bf16.msra.mxu0 0
        %992 = vmatprep.subr.bf16.mxu0 0
        %993 = vmatpush1.bf16.msra.mxu0 0
        %994 = vmatprep.subr.bf16.mxu0 0
        %995 = vmatpush1.bf16.msra.mxu0 0
        %996 = vmatprep.subr.bf16.mxu0 0
        %997 = vmatpush1.bf16.msra.mxu0 0
        %998 = vmatprep.subr.bf16.mxu0 0
        %999 = vmatpush1.bf16.msra.mxu0 0
        %1000 = vmatprep.subr.bf16.mxu0 0
        %1001 = vmatpush1.bf16.msra.mxu0 0
        %1002 = vmatprep.subr.bf16.mxu0 0
        %1003 = vmatpush1.bf16.msra.mxu0 0
        %1004 = vmatprep.subr.bf16.mxu0 0
        %1005 = vmatpush1.bf16.msra.mxu0 %v988
        %1006 = vmatprep.subr.bf16.mxu0 0
        %1007 = vmatpush2.bf16.msra.mxu0 0
        %1008 = vmatprep.subr.bf16.mxu0 0
        %1009 = vmatpush2.bf16.msra.mxu0 0
        %1010 = vmatprep.subr.bf16.mxu0 0
        %1011 = vmatpush2.bf16.msra.mxu0 0
        %1012 = vmatprep.subr.bf16.mxu0 0
        %1013 = vmatpush2.bf16.msra.mxu0 0
        %1014 = vmatprep.subr.bf16.mxu0 0
        %1015 = vmatpush2.bf16.msra.mxu0 0
        %1016 = vmatprep.subr.bf16.mxu0 0
        %1017 = vmatpush2.bf16.msra.mxu0 0
        %1018 = vmatprep.subr.bf16.mxu0 0
        %1019 = vmatpush2.bf16.msra.mxu0 0
        %1020 = vmatprep.subr.bf16.mxu0 0
        %1021 = vmatpush2.bf16.msra.mxu0 0
        %1022 = vmatprep.mubr.bf16.mxu0 0
        %1023 = vmatmul.mubr.bf16.gmra.mxu0 %v985
        %v1024 = vpop.f32.mrf.mxu0
        %v1025 = vadd.f32 0.0, %v1024
        %v1026 = vpop.f32.mrf.mxu0
        %v1027 = vpop.f32.mrf.mxu0
        %v1028 = vpop.f32.mrf.mxu0
        %1029 = vdwg.mxu0
        %v1030 = vpack.c.bf16 %v1025, %v1025
        %v1035 = vunpack.c.l.b16 %v567
        %v1036 = vunpack.c.l.b16 %v568
        %v1037 = vunpack.c.l.b16 %v569
        %v1038 = vunpack.c.l.b16 %v570
        %v1039 = vpack.c.b16 %v1036, %v1035
        %v1040 = vpack.c.b16 %v1038, %v1037
        %v1044 = vsel %vm809, %v1030, 0
        %1046 = vmatprep.subr.bf16.mxu0 0
        %1047 = vmatpush1.bf16.msra.mxu0 0
        %1048 = vmatprep.subr.bf16.mxu0 0
        %1049 = vmatpush1.bf16.msra.mxu0 0
        %1050 = vmatprep.subr.bf16.mxu0 0
        %1051 = vmatpush1.bf16.msra.mxu0 0
        %1052 = vmatprep.subr.bf16.mxu0 0
        %1053 = vmatpush1.bf16.msra.mxu0 0
        %1054 = vmatprep.subr.bf16.mxu0 0
        %1055 = vmatpush1.bf16.msra.mxu0 0
        %1056 = vmatprep.subr.bf16.mxu0 0
        %1057 = vmatpush1.bf16.msra.mxu0 0
        %1058 = vmatprep.subr.bf16.mxu0 0
        %1059 = vmatpush1.bf16.msra.mxu0 %v1040
        %1060 = vmatprep.subr.bf16.mxu0 0
        %1061 = vmatpush1.bf16.msra.mxu0 %v1039
        %1062 = vmatprep.subr.bf16.mxu0 0
        %1063 = vmatpush2.bf16.msra.mxu0 0
        %1064 = vmatprep.subr.bf16.mxu0 0
        %1065 = vmatpush2.bf16.msra.mxu0 0
        %1066 = vmatprep.subr.bf16.mxu0 0
        %1067 = vmatpush2.bf16.msra.mxu0 0
        %1068 = vmatprep.subr.bf16.mxu0 0
        %1069 = vmatpush2.bf16.msra.mxu0 0
        %1070 = vmatprep.subr.bf16.mxu0 0
        %1071 = vmatpush2.bf16.msra.mxu0 0
        %1072 = vmatprep.subr.bf16.mxu0 0
        %1073 = vmatpush2.bf16.msra.mxu0 0
        %1074 = vmatprep.subr.bf16.mxu0 0
        %1075 = vmatpush2.bf16.msra.mxu0 0
        %1076 = vmatprep.subr.bf16.mxu0 0
        %1077 = vmatpush2.bf16.msra.mxu0 0
        %1078 = vmatprep.mubr.bf16.mxu0 0
        %1079 = vmatmul.mubr.bf16.gmra.mxu0 %v1044
        %v1080 = vpop.f32.mrf.mxu0
        %v1081 = vadd.f32 0.0, %v1080
        %v1082 = vpop.f32.mrf.mxu0
        %v1083 = vpop.f32.mrf.mxu0
        %v1084 = vpop.f32.mrf.mxu0
        %1085 = vdwg.mxu0
        %v1090 = vunpack.c.l.b16 %v563
        %v1091 = vunpack.c.l.b16 %v564
        %v1092 = vunpack.c.l.b16 %v565
        %v1093 = vunpack.c.l.b16 %v566
        %v1094 = vpack.c.b16 %v1091, %v1090
        %v1095 = vpack.c.b16 %v1093, %v1092
        %v1099 = vsel %vm809, %v916, 0
        %1101 = vmatprep.subr.bf16.mxu0 0
        %1102 = vmatpush1.bf16.msra.mxu0 0
        %1103 = vmatprep.subr.bf16.mxu0 0
        %1104 = vmatpush1.bf16.msra.mxu0 0
        %1105 = vmatprep.subr.bf16.mxu0 0
        %1106 = vmatpush1.bf16.msra.mxu0 0
        %1107 = vmatprep.subr.bf16.mxu0 0
        %1108 = vmatpush1.bf16.msra.mxu0 0
        %1109 = vmatprep.subr.bf16.mxu0 0
        %1110 = vmatpush1.bf16.msra.mxu0 0
        %1111 = vmatprep.subr.bf16.mxu0 0
        %1112 = vmatpush1.bf16.msra.mxu0 0
        %1113 = vmatprep.subr.bf16.mxu0 0
        %1114 = vmatpush1.bf16.msra.mxu0 %v1095
        %1115 = vmatprep.subr.bf16.mxu0 0
        %1116 = vmatpush1.bf16.msra.mxu0 %v1094
        %1117 = vmatprep.subr.bf16.mxu0 0
        %1118 = vmatpush2.bf16.msra.mxu0 0
        %1119 = vmatprep.subr.bf16.mxu0 0
        %1120 = vmatpush2.bf16.msra.mxu0 0
        %1121 = vmatprep.subr.bf16.mxu0 0
        %1122 = vmatpush2.bf16.msra.mxu0 0
        %1123 = vmatprep.subr.bf16.mxu0 0
        %1124 = vmatpush2.bf16.msra.mxu0 0
        %1125 = vmatprep.subr.bf16.mxu0 0
        %1126 = vmatpush2.bf16.msra.mxu0 0
        %1127 = vmatprep.subr.bf16.mxu0 0
        %1128 = vmatpush2.bf16.msra.mxu0 0
        %1129 = vmatprep.subr.bf16.mxu0 0
        %1130 = vmatpush2.bf16.msra.mxu0 0
        %1131 = vmatprep.subr.bf16.mxu0 0
        %1132 = vmatpush2.bf16.msra.mxu0 0
        %1133 = vmatprep.mubr.bf16.mxu0 0
        %1134 = vmatmul.mubr.bf16.gmra.mxu0 %v1099
        %v1135 = vpop.f32.mrf.mxu0
        %v1136 = vadd.f32 %v1081, %v1135
        %v1137 = vpop.f32.mrf.mxu0
        %v1138 = vpop.f32.mrf.mxu0
        %v1139 = vpop.f32.mrf.mxu0
        %1140 = vdwg.mxu0
        %1141 = vrot.lane.b32.xlu0 %v806, 64
        %v1142 = vpop.permute.xlu0 %1141
        %1143 = vrot.lane.b32.xlu0 %v807, 64
        %v1144 = vpop.permute.xlu0 %1143
        %v1146 = vsel %vm809, %v1142, 0
        %v1149 = vsel %vm809, %v1144, 0
        %1151 = vmatprep.subr.bf16.mxu0 0
        %1152 = vmatpush1.bf16.xpose.msra.mxu0 0
        %1153 = vmatprep.subr.bf16.mxu0 0
        %1154 = vmatpush1.bf16.xpose.msra.mxu0 0
        %1155 = vmatprep.subr.bf16.mxu0 0
        %1156 = vmatpush1.bf16.xpose.msra.mxu0 0
        %1157 = vmatprep.subr.bf16.mxu0 0
        %1158 = vmatpush1.bf16.xpose.msra.mxu0 0
        %1159 = vmatprep.subr.bf16.mxu0 0
        %1160 = vmatpush1.bf16.xpose.msra.mxu0 0
        %1161 = vmatprep.subr.bf16.mxu0 0
        %1162 = vmatpush1.bf16.xpose.msra.mxu0 0
        %1163 = vmatprep.subr.bf16.mxu0 0
        %1164 = vmatpush1.bf16.xpose.msra.mxu0 0
        %1165 = vmatprep.subr.bf16.mxu0 0
        %1166 = vmatpush1.bf16.xpose.msra.mxu0 %v1149
        %1167 = vmatprep.subr.bf16.mxu0 0
        %1168 = vmatpush2.bf16.xpose.msra.mxu0 0
        %1169 = vmatprep.subr.bf16.mxu0 0
        %1170 = vmatpush2.bf16.xpose.msra.mxu0 0
        %1171 = vmatprep.subr.bf16.mxu0 0
        %1172 = vmatpush2.bf16.xpose.msra.mxu0 0
        %1173 = vmatprep.subr.bf16.mxu0 0
        %1174 = vmatpush2.bf16.xpose.msra.mxu0 0
        %1175 = vmatprep.subr.bf16.mxu0 0
        %1176 = vmatpush2.bf16.xpose.msra.mxu0 0
        %1177 = vmatprep.subr.bf16.mxu0 0
        %1178 = vmatpush2.bf16.xpose.msra.mxu0 0
        %1179 = vmatprep.subr.bf16.mxu0 0
        %1180 = vmatpush2.bf16.xpose.msra.mxu0 0
        %1181 = vmatprep.subr.bf16.mxu0 0
        %1182 = vmatpush2.bf16.xpose.msra.mxu0 0
        %1183 = vmatprep.mubr.bf16.mxu0 0
        %1184 = vmatmul.mubr.bf16.gmra.mxu0 %v1146
        %v1185 = vpop.f32.mrf.mxu0
        %v1186 = vadd.f32 0.0, %v1185
        %v1187 = vpop.f32.mrf.mxu0
        %v1188 = vpop.f32.mrf.mxu0
        %v1189 = vpop.f32.mrf.mxu0
        %1190 = vdwg.mxu0
        %v1191 = vsel %vm856, %v1186, -inf
        %1192 = vmax.xlane.f32.xlu0 %v1191
        %v1193 = vpop.xlane.xlu0 %1192
        %v1194 = vsub.f32 %v1186, %v1193
        %v1195 = vmul.f32 %v1194, 1.442695
        %v1196 = vpow.pop %v1195
        %v1197 = vsel %vm856, %v1196, 0.0
        %1198 = vadd.xlane.f32.xlu0 %v1197
        %v1199 = vpop.xlane.xlu0 %1198
        %v1200 = vrcp.pop %v1199
        %v1201 = vmul.f32 %v1196, %v1200
        %v1202 = vpack.c.bf16 %v1201, %v1201
        %1203 = vrot.lane.b32.xlu0 %v808, 64
        %v1204 = vpop.permute.xlu0 %1203
        %v1206 = vsel %vm856, %v1202, 0
        %v1209 = vsel %vm872, %v1204, 0
        %1211 = vmatprep.subr.bf16.mxu0 0
        %1212 = vmatpush1.bf16.msra.mxu0 0
        %1213 = vmatprep.subr.bf16.mxu0 0
        %1214 = vmatpush1.bf16.msra.mxu0 0
        %1215 = vmatprep.subr.bf16.mxu0 0
        %1216 = vmatpush1.bf16.msra.mxu0 0
        %1217 = vmatprep.subr.bf16.mxu0 0
        %1218 = vmatpush1.bf16.msra.mxu0 0
        %1219 = vmatprep.subr.bf16.mxu0 0
        %1220 = vmatpush1.bf16.msra.mxu0 0
        %1221 = vmatprep.subr.bf16.mxu0 0
        %1222 = vmatpush1.bf16.msra.mxu0 0
        %1223 = vmatprep.subr.bf16.mxu0 0
        %1224 = vmatpush1.bf16.msra.mxu0 0
        %1225 = vmatprep.subr.bf16.mxu0 0
        %1226 = vmatpush1.bf16.msra.mxu0 %v1209
        %1227 = vmatprep.subr.bf16.mxu0 0
        %1228 = vmatpush2.bf16.msra.mxu0 0
        %1229 = vmatprep.subr.bf16.mxu0 0
        %1230 = vmatpush2.bf16.msra.mxu0 0
        %1231 = vmatprep.subr.bf16.mxu0 0
        %1232 = vmatpush2.bf16.msra.mxu0 0
        %1233 = vmatprep.subr.bf16.mxu0 0
        %1234 = vmatpush2.bf16.msra.mxu0 0
        %1235 = vmatprep.subr.bf16.mxu0 0
        %1236 = vmatpush2.bf16.msra.mxu0 0
        %1237 = vmatprep.subr.bf16.mxu0 0
        %1238 = vmatpush2.bf16.msra.mxu0 0
        %1239 = vmatprep.subr.bf16.mxu0 0
        %1240 = vmatpush2.bf16.msra.mxu0 0
        %1241 = vmatprep.subr.bf16.mxu0 0
        %1242 = vmatpush2.bf16.msra.mxu0 0
        %1243 = vmatprep.mubr.bf16.mxu0 0
        %1244 = vmatmul.mubr.bf16.gmra.mxu0 %v1206
        %v1245 = vpop.f32.mrf.mxu0
        %v1246 = vadd.f32 0.0, %v1245
        %v1247 = vpop.f32.mrf.mxu0
        %v1248 = vpop.f32.mrf.mxu0
        %v1249 = vpop.f32.mrf.mxu0
        %1250 = vdwg.mxu0
        %v1251 = vpack.c.bf16 %v1246, %v1246
        %v1256 = vunpack.c.l.b16 %v571
        %v1257 = vunpack.c.l.b16 %v572
        %v1258 = vunpack.c.l.b16 %v573
        %v1259 = vunpack.c.l.b16 %v574
        %v1260 = vpack.c.b16 %v1257, %v1256
        %v1261 = vpack.c.b16 %v1259, %v1258
        %v1265 = vsel %vm809, %v1251, 0
        %1267 = vmatprep.subr.bf16.mxu0 0
        %1268 = vmatpush1.bf16.msra.mxu0 0
        %1269 = vmatprep.subr.bf16.mxu0 0
        %1270 = vmatpush1.bf16.msra.mxu0 0
        %1271 = vmatprep.subr.bf16.mxu0 0
        %1272 = vmatpush1.bf16.msra.mxu0 0
        %1273 = vmatprep.subr.bf16.mxu0 0
        %1274 = vmatpush1.bf16.msra.mxu0 0
        %1275 = vmatprep.subr.bf16.mxu0 0
        %1276 = vmatpush1.bf16.msra.mxu0 0
        %1277 = vmatprep.subr.bf16.mxu0 0
        %1278 = vmatpush1.bf16.msra.mxu0 0
        %1279 = vmatprep.subr.bf16.mxu0 0
        %1280 = vmatpush1.bf16.msra.mxu0 %v1261
        %1281 = vmatprep.subr.bf16.mxu0 0
        %1282 = vmatpush1.bf16.msra.mxu0 %v1260
        %1283 = vmatprep.subr.bf16.mxu0 0
        %1284 = vmatpush2.bf16.msra.mxu0 0
        %1285 = vmatprep.subr.bf16.mxu0 0
        %1286 = vmatpush2.bf16.msra.mxu0 0
        %1287 = vmatprep.subr.bf16.mxu0 0
        %1288 = vmatpush2.bf16.msra.mxu0 0
        %1289 = vmatprep.subr.bf16.mxu0 0
        %1290 = vmatpush2.bf16.msra.mxu0 0
        %1291 = vmatprep.subr.bf16.mxu0 0
        %1292 = vmatpush2.bf16.msra.mxu0 0
        %1293 = vmatprep.subr.bf16.mxu0 0
        %1294 = vmatpush2.bf16.msra.mxu0 0
        %1295 = vmatprep.subr.bf16.mxu0 0
        %1296 = vmatpush2.bf16.msra.mxu0 0
        %1297 = vmatprep.subr.bf16.mxu0 0
        %1298 = vmatpush2.bf16.msra.mxu0 0
        %1299 = vmatprep.mubr.bf16.mxu0 0
        %1300 = vmatmul.mubr.bf16.gmra.mxu0 %v1265
        %v1301 = vpop.f32.mrf.mxu0
        %v1302 = vadd.f32 0.0, %v1301
        %v1303 = vpop.f32.mrf.mxu0
        %v1304 = vpop.f32.mrf.mxu0
        %v1305 = vpop.f32.mrf.mxu0
        %1306 = vdwg.mxu0
        %v1307 = vadd.f32 %v1136, %v1302
        %1308 = vrot.lane.b32.xlu0 %v806, 32
        %v1309 = vpop.permute.xlu0 %1308
        %1310 = vrot.lane.b32.xlu0 %v807, 32
        %v1311 = vpop.permute.xlu0 %1310
        %v1313 = vsel %vm809, %v1309, 0
        %v1316 = vsel %vm809, %v1311, 0
        %1318 = vmatprep.subr.bf16.mxu0 0
        %1319 = vmatpush1.bf16.xpose.msra.mxu0 0
        %1320 = vmatprep.subr.bf16.mxu0 0
        %1321 = vmatpush1.bf16.xpose.msra.mxu0 0
        %1322 = vmatprep.subr.bf16.mxu0 0
        %1323 = vmatpush1.bf16.xpose.msra.mxu0 0
        %1324 = vmatprep.subr.bf16.mxu0 0
        %1325 = vmatpush1.bf16.xpose.msra.mxu0 0
        %1326 = vmatprep.subr.bf16.mxu0 0
        %1327 = vmatpush1.bf16.xpose.msra.mxu0 0
        %1328 = vmatprep.subr.bf16.mxu0 0
        %1329 = vmatpush1.bf16.xpose.msra.mxu0 0
        %1330 = vmatprep.subr.bf16.mxu0 0
        %1331 = vmatpush1.bf16.xpose.msra.mxu0 0
        %1332 = vmatprep.subr.bf16.mxu0 0
        %1333 = vmatpush1.bf16.xpose.msra.mxu0 %v1316
        %1334 = vmatprep.subr.bf16.mxu0 0
        %1335 = vmatpush2.bf16.xpose.msra.mxu0 0
        %1336 = vmatprep.subr.bf16.mxu0 0
        %1337 = vmatpush2.bf16.xpose.msra.mxu0 0
        %1338 = vmatprep.subr.bf16.mxu0 0
        %1339 = vmatpush2.bf16.xpose.msra.mxu0 0
        %1340 = vmatprep.subr.bf16.mxu0 0
        %1341 = vmatpush2.bf16.xpose.msra.mxu0 0
        %1342 = vmatprep.subr.bf16.mxu0 0
        %1343 = vmatpush2.bf16.xpose.msra.mxu0 0
        %1344 = vmatprep.subr.bf16.mxu0 0
        %1345 = vmatpush2.bf16.xpose.msra.mxu0 0
        %1346 = vmatprep.subr.bf16.mxu0 0
        %1347 = vmatpush2.bf16.xpose.msra.mxu0 0
        %1348 = vmatprep.subr.bf16.mxu0 0
        %1349 = vmatpush2.bf16.xpose.msra.mxu0 0
        %1350 = vmatprep.mubr.bf16.mxu0 0
        %1351 = vmatmul.mubr.bf16.gmra.mxu0 %v1313
        %v1352 = vpop.f32.mrf.mxu0
        %v1353 = vadd.f32 0.0, %v1352
        %v1354 = vpop.f32.mrf.mxu0
        %v1355 = vpop.f32.mrf.mxu0
        %v1356 = vpop.f32.mrf.mxu0
        %1357 = vdwg.mxu0
        %v1358 = vsel %vm856, %v1353, -inf
        %1359 = vmax.xlane.f32.xlu0 %v1358
        %v1360 = vpop.xlane.xlu0 %1359
        %v1361 = vsub.f32 %v1353, %v1360
        %v1362 = vmul.f32 %v1361, 1.442695
        %v1363 = vpow.pop %v1362
        %v1364 = vsel %vm856, %v1363, 0.0
        %1365 = vadd.xlane.f32.xlu0 %v1364
        %v1366 = vpop.xlane.xlu0 %1365
        %v1367 = vrcp.pop %v1366
        %v1368 = vmul.f32 %v1363, %v1367
        %v1369 = vpack.c.bf16 %v1368, %v1368
        %1370 = vrot.lane.b32.xlu0 %v808, 32
        %v1371 = vpop.permute.xlu0 %1370
        %v1373 = vsel %vm856, %v1369, 0
        %v1376 = vsel %vm872, %v1371, 0
        %1378 = vmatprep.subr.bf16.mxu0 0
        %1379 = vmatpush1.bf16.msra.mxu0 0
        %1380 = vmatprep.subr.bf16.mxu0 0
        %1381 = vmatpush1.bf16.msra.mxu0 0
        %1382 = vmatprep.subr.bf16.mxu0 0
        %1383 = vmatpush1.bf16.msra.mxu0 0
        %1384 = vmatprep.subr.bf16.mxu0 0
        %1385 = vmatpush1.bf16.msra.mxu0 0
        %1386 = vmatprep.subr.bf16.mxu0 0
        %1387 = vmatpush1.bf16.msra.mxu0 0
        %1388 = vmatprep.subr.bf16.mxu0 0
        %1389 = vmatpush1.bf16.msra.mxu0 0
        %1390 = vmatprep.subr.bf16.mxu0 0
        %1391 = vmatpush1.bf16.msra.mxu0 0
        %1392 = vmatprep.subr.bf16.mxu0 0
        %1393 = vmatpush1.bf16.msra.mxu0 %v1376
        %1394 = vmatprep.subr.bf16.mxu0 0
        %1395 = vmatpush2.bf16.msra.mxu0 0
        %1396 = vmatprep.subr.bf16.mxu0 0
        %1397 = vmatpush2.bf16.msra.mxu0 0
        %1398 = vmatprep.subr.bf16.mxu0 0
        %1399 = vmatpush2.bf16.msra.mxu0 0
        %1400 = vmatprep.subr.bf16.mxu0 0
        %1401 = vmatpush2.bf16.msra.mxu0 0
        %1402 = vmatprep.subr.bf16.mxu0 0
        %1403 = vmatpush2.bf16.msra.mxu0 0
        %1404 = vmatprep.subr.bf16.mxu0 0
        %1405 = vmatpush2.bf16.msra.mxu0 0
        %1406 = vmatprep.subr.bf16.mxu0 0
        %1407 = vmatpush2.bf16.msra.mxu0 0
        %1408 = vmatprep.subr.bf16.mxu0 0
        %1409 = vmatpush2.bf16.msra.mxu0 0
        %1410 = vmatprep.mubr.bf16.mxu0 0
        %1411 = vmatmul.mubr.bf16.gmra.mxu0 %v1373
        %v1412 = vpop.f32.mrf.mxu0
        %v1413 = vadd.f32 0.0, %v1412
        %v1414 = vpop.f32.mrf.mxu0
        %v1415 = vpop.f32.mrf.mxu0
        %v1416 = vpop.f32.mrf.mxu0
        %1417 = vdwg.mxu0
        %v1418 = vpack.c.bf16 %v1413, %v1413
        %v1423 = vunpack.c.l.b16 %v575
        %v1424 = vunpack.c.l.b16 %v576
        %v1425 = vunpack.c.l.b16 %v577
        %v1426 = vunpack.c.l.b16 %v578
        %v1427 = vpack.c.b16 %v1424, %v1423
        %v1428 = vpack.c.b16 %v1426, %v1425
        %v1432 = vsel %vm809, %v1418, 0
        %1434 = vmatprep.subr.bf16.mxu0 0
        %1435 = vmatpush1.bf16.msra.mxu0 0
        %1436 = vmatprep.subr.bf16.mxu0 0
        %1437 = vmatpush1.bf16.msra.mxu0 0
        %1438 = vmatprep.subr.bf16.mxu0 0
        %1439 = vmatpush1.bf16.msra.mxu0 0
        %1440 = vmatprep.subr.bf16.mxu0 0
        %1441 = vmatpush1.bf16.msra.mxu0 0
        %1442 = vmatprep.subr.bf16.mxu0 0
        %1443 = vmatpush1.bf16.msra.mxu0 0
        %1444 = vmatprep.subr.bf16.mxu0 0
        %1445 = vmatpush1.bf16.msra.mxu0 0
        %1446 = vmatprep.subr.bf16.mxu0 0
        %1447 = vmatpush1.bf16.msra.mxu0 %v1428
        %1448 = vmatprep.subr.bf16.mxu0 0
        %1449 = vmatpush1.bf16.msra.mxu0 %v1427
        %1450 = vmatprep.subr.bf16.mxu0 0
        %1451 = vmatpush2.bf16.msra.mxu0 0
        %1452 = vmatprep.subr.bf16.mxu0 0
        %1453 = vmatpush2.bf16.msra.mxu0 0
        %1454 = vmatprep.subr.bf16.mxu0 0
        %1455 = vmatpush2.bf16.msra.mxu0 0
        %1456 = vmatprep.subr.bf16.mxu0 0
        %1457 = vmatpush2.bf16.msra.mxu0 0
        %1458 = vmatprep.subr.bf16.mxu0 0
        %1459 = vmatpush2.bf16.msra.mxu0 0
        %1460 = vmatprep.subr.bf16.mxu0 0
        %1461 = vmatpush2.bf16.msra.mxu0 0
        %1462 = vmatprep.subr.bf16.mxu0 0
        %1463 = vmatpush2.bf16.msra.mxu0 0
        %1464 = vmatprep.subr.bf16.mxu0 0
        %1465 = vmatpush2.bf16.msra.mxu0 0
        %1466 = vmatprep.mubr.bf16.mxu0 0
        %1467 = vmatmul.mubr.bf16.gmra.mxu0 %v1432
        %v1468 = vpop.f32.mrf.mxu0
        %v1469 = vadd.f32 0.0, %v1468
        %v1470 = vpop.f32.mrf.mxu0
        %v1471 = vpop.f32.mrf.mxu0
        %v1472 = vpop.f32.mrf.mxu0
        %1473 = vdwg.mxu0
        %v1474 = vadd.f32 %v1307, %v1469
        %v1475 = vld [vmem:[%s4] sm:$0x1]
        %v1477 = vlaneseq
        %v1478 = vshrl.u32 %v1477, 7
        %v1479 = vsub.s32 0, %v1478
        %v1480 = vrot.slane %v1475, %v1479
        %v1482 = vadd.f32 %v1474, %v1480
        %v1483 = vadd.f32 %v530, %v1482
        %v1484 = vld [vmem:[%s5] sm:$0x1]
        %v1485 = vld [vmem:[%s6] sm:$0x1]
        %1486 = vadd.xlane.f32.xlu0 %v1483
        %v1487 = vpop.xlane.xlu0 %1486
        %v1488 = vrcp.pop 128.0
        %v1489 = vmul.f32 %v1487, %v1488
        %v1490 = vsub.f32 %v1483, %v1489
        %v1491 = vmul.f32 %v1490, %v1490
        %1492 = vadd.xlane.f32.xlu0 %v1491
        %v1493 = vpop.xlane.xlu0 %1492
        %v1494 = vmul.f32 %v1493, %v1488
        %v1495 = vadd.f32 %v1494, 1e-05
        %v1496 = vrsqrt.pop %v1495
        %v1497 = vmul.f32 %v1490, %v1496
        %v1499 = vlaneseq
        %v1500 = vshrl.u32 %v1499, 7
        %v1501 = vsub.s32 0, %v1500
        %v1502 = vrot.slane %v1484, %v1501
        %v1504 = vmul.f32 %v1497, %v1502
        %v1506 = vlaneseq
        %v1507 = vshrl.u32 %v1506, 7
        %v1508 = vsub.s32 0, %v1507
        %v1509 = vrot.slane %v1485, %v1508
        %v1511 = vadd.f32 %v1504, %v1509
        %v1512 = vpack.c.bf16 %v1511, %v1511
        %v1513 = vld [vmem:[#allocation10] sm:$0xff]
        %v1514 = vld [vmem:[#allocation10 + $0x8] sm:$0xff]
        %v1515 = vld [vmem:[#allocation10 + $0x10] sm:$0xff]
        %v1516 = vld [vmem:[#allocation10 + $0x18] sm:$0xff]
        %v1517 = vld [vmem:[#allocation10 + $0x20] sm:$0xff]
        %v1518 = vld [vmem:[#allocation10 + $0x28] sm:$0xff]
        %v1519 = vld [vmem:[#allocation10 + $0x30] sm:$0xff]
        %v1520 = vld [vmem:[#allocation10 + $0x38] sm:$0xff]
        %v1521 = vld [vmem:[#allocation10 + $0x40] sm:$0xff]
        %v1522 = vld [vmem:[#allocation10 + $0x48] sm:$0xff]
        %v1523 = vld [vmem:[#allocation10 + $0x50] sm:$0xff]
        %v1524 = vld [vmem:[#allocation10 + $0x58] sm:$0xff]
        %v1525 = vld [vmem:[#allocation10 + $0x60] sm:$0xff]
        %v1526 = vld [vmem:[#allocation10 + $0x68] sm:$0xff]
        %v1527 = vld [vmem:[#allocation10 + $0x70] sm:$0xff]
        %v1528 = vld [vmem:[#allocation10 + $0x78] sm:$0xff]
        %v1529 = vld [vmem:[%s8] sm:$0x3]
        %v1531 = vlaneseq
        %v1532 = vshrl.u32 %v1531, 7
        %v1533 = vsub.s32 0, %v1532
        %v1534 = vrot.slane %v1529, %v1533
        %v1535 = vlaneseq
        %v1536 = vshrl.u32 %v1535, 7
        %v1537 = vsub.s32 1, %v1536
        %v1538 = vrot.slane %v1529, %v1537
        %v1557 = vunpack.c.l.b16 %v1513
        %v1558 = vunpack.c.h.b16 %v1513
        %v1559 = vunpack.c.l.b16 %v1514
        %v1560 = vunpack.c.h.b16 %v1514
        %v1561 = vunpack.c.l.b16 %v1515
        %v1562 = vunpack.c.h.b16 %v1515
        %v1563 = vunpack.c.l.b16 %v1516
        %v1564 = vunpack.c.h.b16 %v1516
        %v1565 = vunpack.c.l.b16 %v1517
        %v1566 = vunpack.c.h.b16 %v1517
        %v1567 = vunpack.c.l.b16 %v1518
        %v1568 = vunpack.c.h.b16 %v1518
        %v1569 = vunpack.c.l.b16 %v1519
        %v1570 = vunpack.c.h.b16 %v1519
        %v1571 = vunpack.c.l.b16 %v1520
        %v1572 = vunpack.c.h.b16 %v1520
        %v1573 = vunpack.c.l.b16 %v1521
        %v1574 = vunpack.c.h.b16 %v1521
        %v1575 = vunpack.c.l.b16 %v1522
        %v1576 = vunpack.c.h.b16 %v1522
        %v1577 = vunpack.c.l.b16 %v1523
        %v1578 = vunpack.c.h.b16 %v1523
        %v1579 = vunpack.c.l.b16 %v1524
        %v1580 = vunpack.c.h.b16 %v1524
        %v1581 = vunpack.c.l.b16 %v1525
        %v1582 = vunpack.c.h.b16 %v1525
        %v1583 = vunpack.c.l.b16 %v1526
        %v1584 = vunpack.c.h.b16 %v1526
        %v1585 = vunpack.c.l.b16 %v1527
        %v1586 = vunpack.c.h.b16 %v1527
        %v1587 = vunpack.c.l.b16 %v1528
        %v1588 = vunpack.c.h.b16 %v1528
        %v1589 = vpack.c.b16 %v1559, %v1557
        %v1590 = vpack.c.b16 %v1560, %v1558
        %v1591 = vpack.c.b16 %v1563, %v1561
        %v1592 = vpack.c.b16 %v1564, %v1562
        %v1593 = vpack.c.b16 %v1567, %v1565
        %v1594 = vpack.c.b16 %v1568, %v1566
        %v1595 = vpack.c.b16 %v1571, %v1569
        %v1596 = vpack.c.b16 %v1572, %v1570
        %v1597 = vpack.c.b16 %v1575, %v1573
        %v1598 = vpack.c.b16 %v1576, %v1574
        %v1599 = vpack.c.b16 %v1579, %v1577
        %v1600 = vpack.c.b16 %v1580, %v1578
        %v1601 = vpack.c.b16 %v1583, %v1581
        %v1602 = vpack.c.b16 %v1584, %v1582
        %v1603 = vpack.c.b16 %v1587, %v1585
        %v1604 = vpack.c.b16 %v1588, %v1586
        %1621 = vmatprep.subr.bf16.mxu0 %v1604
        %1622 = vmatpush1.bf16.msra.mxu0 %v1603
        %1623 = vmatprep.subr.bf16.mxu0 %v1602
        %1624 = vmatpush1.bf16.msra.mxu0 %v1601
        %1625 = vmatprep.subr.bf16.mxu0 %v1600
        %1626 = vmatpush1.bf16.msra.mxu0 %v1599
        %1627 = vmatprep.subr.bf16.mxu0 %v1598
        %1628 = vmatpush1.bf16.msra.mxu0 %v1597
        %1629 = vmatprep.subr.bf16.mxu0 %v1596
        %1630 = vmatpush1.bf16.msra.mxu0 %v1595
        %1631 = vmatprep.subr.bf16.mxu0 %v1594
        %1632 = vmatpush1.bf16.msra.mxu0 %v1593
        %1633 = vmatprep.subr.bf16.mxu0 %v1592
        %1634 = vmatpush1.bf16.msra.mxu0 %v1591
        %1635 = vmatprep.subr.bf16.mxu0 %v1590
        %1636 = vmatpush1.bf16.msra.mxu0 %v1589
        %1637 = vmatprep.subr.bf16.mxu0 0
        %1638 = vmatpush2.bf16.msra.mxu0 0
        %1639 = vmatprep.subr.bf16.mxu0 0
        %1640 = vmatpush2.bf16.msra.mxu0 0
        %1641 = vmatprep.subr.bf16.mxu0 0
        %1642 = vmatpush2.bf16.msra.mxu0 0
        %1643 = vmatprep.subr.bf16.mxu0 0
        %1644 = vmatpush2.bf16.msra.mxu0 0
        %1645 = vmatprep.subr.bf16.mxu0 0
        %1646 = vmatpush2.bf16.msra.mxu0 0
        %1647 = vmatprep.subr.bf16.mxu0 0
        %1648 = vmatpush2.bf16.msra.mxu0 0
        %1649 = vmatprep.subr.bf16.mxu0 0
        %1650 = vmatpush2.bf16.msra.mxu0 0
        %1651 = vmatprep.subr.bf16.mxu0 0
        %1652 = vmatpush2.bf16.msra.mxu0 0
        %1653 = vmatprep.mubr.bf16.mxu0 0
        %1654 = vmatmul.mubr.bf16.gmra.mxu0 %v1512
        %v1655 = vpop.f32.mrf.mxu0
        %v1656 = vadd.f32 %v1534, %v1655
        %v1657 = vpop.f32.mrf.mxu0
        %v1658 = vadd.f32 %v1538, %v1657
        %v1659 = vpop.f32.mrf.mxu0
        %v1660 = vpop.f32.mrf.mxu0
        %1661 = vdwg.mxu0
        %v1662 = vmax.f32 %v1656, 0.0
        %v1663 = vmax.f32 %v1658, 0.0
        %v1664 = vpack.c.bf16 %v1662, %v1662
        %v1665 = vpack.c.bf16 %v1663, %v1663
        %v1666 = vld [vmem:[#allocation11] sm:$0xf]
        %v1667 = vld [vmem:[#allocation11 + $0x4] sm:$0xf]
        %v1668 = vld [vmem:[#allocation11 + $0x8] sm:$0xf]
        %v1669 = vld [vmem:[#allocation11 + $0xc] sm:$0xf]
        %v1670 = vld [vmem:[#allocation11 + $0x10] sm:$0xf]
        %v1671 = vld [vmem:[#allocation11 + $0x14] sm:$0xf]
        %v1672 = vld [vmem:[#allocation11 + $0x18] sm:$0xf]
        %v1673 = vld [vmem:[#allocation11 + $0x1c] sm:$0xf]
        %v1674 = vld [vmem:[#allocation11 + $0x20] sm:$0xf]
        %v1675 = vld [vmem:[#allocation11 + $0x24] sm:$0xf]
        %v1676 = vld [vmem:[#allocation11 + $0x28] sm:$0xf]
        %v1677 = vld [vmem:[#allocation11 + $0x2c] sm:$0xf]
        %v1678 = vld [vmem:[#allocation11 + $0x30] sm:$0xf]
        %v1679 = vld [vmem:[#allocation11 + $0x34] sm:$0xf]
        %v1680 = vld [vmem:[#allocation11 + $0x38] sm:$0xf]
        %v1681 = vld [vmem:[#allocation11 + $0x3c] sm:$0xf]
        %v1682 = vld [vmem:[#allocation11 + $0x40] sm:$0xf]
        %v1683 = vld [vmem:[#allocation11 + $0x44] sm:$0xf]
        %v1684 = vld [vmem:[#allocation11 + $0x48] sm:$0xf]
        %v1685 = vld [vmem:[#allocation11 + $0x4c] sm:$0xf]
        %v1686 = vld [vmem:[#allocation11 + $0x50] sm:$0xf]
        %v1687 = vld [vmem:[#allocation11 + $0x54] sm:$0xf]
        %v1688 = vld [vmem:[#allocation11 + $0x58] sm:$0xf]
        %v1689 = vld [vmem:[#allocation11 + $0x5c] sm:$0xf]
        %v1690 = vld [vmem:[#allocation11 + $0x60] sm:$0xf]
        %v1691 = vld [vmem:[#allocation11 + $0x64] sm:$0xf]
        %v1692 = vld [vmem:[#allocation11 + $0x68] sm:$0xf]
        %v1693 = vld [vmem:[#allocation11 + $0x6c] sm:$0xf]
        %v1694 = vld [vmem:[#allocation11 + $0x70] sm:$0xf]
        %v1695 = vld [vmem:[#allocation11 + $0x74] sm:$0xf]
        %v1696 = vld [vmem:[#allocation11 + $0x78] sm:$0xf]
        %v1697 = vld [vmem:[#allocation11 + $0x7c] sm:$0xf]
        %v1698 = vld [vmem:[%s10] sm:$0x1]
        %v1700 = vlaneseq
        %v1701 = vshrl.u32 %v1700, 7
        %v1702 = vsub.s32 0, %v1701
        %v1703 = vrot.slane %v1698, %v1702
        %v1737 = vunpack.c.l.b16 %v1666
        %v1738 = vunpack.c.l.b16 %v1667
        %v1739 = vunpack.c.l.b16 %v1668
        %v1740 = vunpack.c.l.b16 %v1669
        %v1741 = vunpack.c.l.b16 %v1670
        %v1742 = vunpack.c.l.b16 %v1671
        %v1743 = vunpack.c.l.b16 %v1672
        %v1744 = vunpack.c.l.b16 %v1673
        %v1745 = vunpack.c.l.b16 %v1674
        %v1746 = vunpack.c.l.b16 %v1675
        %v1747 = vunpack.c.l.b16 %v1676
        %v1748 = vunpack.c.l.b16 %v1677
        %v1749 = vunpack.c.l.b16 %v1678
        %v1750 = vunpack.c.l.b16 %v1679
        %v1751 = vunpack.c.l.b16 %v1680
        %v1752 = vunpack.c.l.b16 %v1681
        %v1753 = vunpack.c.l.b16 %v1682
        %v1754 = vunpack.c.l.b16 %v1683
        %v1755 = vunpack.c.l.b16 %v1684
        %v1756 = vunpack.c.l.b16 %v1685
        %v1757 = vunpack.c.l.b16 %v1686
        %v1758 = vunpack.c.l.b16 %v1687
        %v1759 = vunpack.c.l.b16 %v1688
        %v1760 = vunpack.c.l.b16 %v1689
        %v1761 = vunpack.c.l.b16 %v1690
        %v1762 = vunpack.c.l.b16 %v1691
        %v1763 = vunpack.c.l.b16 %v1692
        %v1764 = vunpack.c.l.b16 %v1693
        %v1765 = vunpack.c.l.b16 %v1694
        %v1766 = vunpack.c.l.b16 %v1695
        %v1767 = vunpack.c.l.b16 %v1696
        %v1768 = vunpack.c.l.b16 %v1697
        %v1769 = vpack.c.b16 %v1738, %v1737
        %v1770 = vpack.c.b16 %v1740, %v1739
        %v1771 = vpack.c.b16 %v1742, %v1741
        %v1772 = vpack.c.b16 %v1744, %v1743
        %v1773 = vpack.c.b16 %v1746, %v1745
        %v1774 = vpack.c.b16 %v1748, %v1747
        %v1775 = vpack.c.b16 %v1750, %v1749
        %v1776 = vpack.c.b16 %v1752, %v1751
        %v1777 = vpack.c.b16 %v1754, %v1753
        %v1778 = vpack.c.b16 %v1756, %v1755
        %v1779 = vpack.c.b16 %v1758, %v1757
        %v1780 = vpack.c.b16 %v1760, %v1759
        %v1781 = vpack.c.b16 %v1762, %v1761
        %v1782 = vpack.c.b16 %v1764, %v1763
        %v1783 = vpack.c.b16 %v1766, %v1765
        %v1784 = vpack.c.b16 %v1768, %v1767
        %1801 = vmatprep.subr.bf16.mxu0 0
        %1802 = vmatpush1.bf16.msra.mxu0 %v1776
        %1803 = vmatprep.subr.bf16.mxu0 0
        %1804 = vmatpush1.bf16.msra.mxu0 %v1775
        %1805 = vmatprep.subr.bf16.mxu0 0
        %1806 = vmatpush1.bf16.msra.mxu0 %v1774
        %1807 = vmatprep.subr.bf16.mxu0 0
        %1808 = vmatpush1.bf16.msra.mxu0 %v1773
        %1809 = vmatprep.subr.bf16.mxu0 0
        %1810 = vmatpush1.bf16.msra.mxu0 %v1772
        %1811 = vmatprep.subr.bf16.mxu0 0
        %1812 = vmatpush1.bf16.msra.mxu0 %v1771
        %1813 = vmatprep.subr.bf16.mxu0 0
        %1814 = vmatpush1.bf16.msra.mxu0 %v1770
        %1815 = vmatprep.subr.bf16.mxu0 0
        %1816 = vmatpush1.bf16.msra.mxu0 %v1769
        %1817 = vmatprep.subr.bf16.mxu0 0
        %1818 = vmatpush2.bf16.msra.mxu0 %v1784
        %1819 = vmatprep.subr.bf16.mxu0 0
        %1820 = vmatpush2.bf16.msra.mxu0 %v1783
        %1821 = vmatprep.subr.bf16.mxu0 0
        %1822 = vmatpush2.bf16.msra.mxu0 %v1782
        %1823 = vmatprep.subr.bf16.mxu0 0
        %1824 = vmatpush2.bf16.msra.mxu0 %v1781
        %1825 = vmatprep.subr.bf16.mxu0 0
        %1826 = vmatpush2.bf16.msra.mxu0 %v1780
        %1827 = vmatprep.subr.bf16.mxu0 0
        %1828 = vmatpush2.bf16.msra.mxu0 %v1779
        %1829 = vmatprep.subr.bf16.mxu0 0
        %1830 = vmatpush2.bf16.msra.mxu0 %v1778
        %1831 = vmatprep.subr.bf16.mxu0 0
        %1832 = vmatpush2.bf16.msra.mxu0 %v1777
        %1833 = vmatprep.mubr.bf16.mxu0 %v1665
        %1834 = vmatmul.mubr.bf16.gmra.mxu0 %v1664
        %v1835 = vpop.f32.mrf.mxu0
        %v1836 = vadd.f32 %v1703, %v1835
        %v1837 = vpop.f32.mrf.mxu0
        %v1838 = vpop.f32.mrf.mxu0
        %v1839 = vpop.f32.mrf.mxu0
        %1840 = vdwg.mxu0
        %v1841 = vadd.f32 %v1511, %v1836
        %v1842 = vld [vmem:[%s11] sm:$0x1]
        %v1843 = vld [vmem:[%s12] sm:$0x1]
        %1844 = vadd.xlane.f32.xlu0 %v1841
        %v1845 = vpop.xlane.xlu0 %1844
        %v1846 = vmul.f32 %v1845, %v1488
        %v1847 = vsub.f32 %v1841, %v1846
        %v1848 = vmul.f32 %v1847, %v1847
        %1849 = vadd.xlane.f32.xlu0 %v1848
        %v1850 = vpop.xlane.xlu0 %1849
        %v1851 = vmul.f32 %v1850, %v1488
        %v1852 = vadd.f32 %v1851, 1e-05
        %v1853 = vrsqrt.pop %v1852
        %v1854 = vmul.f32 %v1847, %v1853
        %v1856 = vlaneseq
        %v1857 = vshrl.u32 %v1856, 7
        %v1858 = vsub.s32 0, %v1857
        %v1859 = vrot.slane %v1842, %v1858
        %v1861 = vmul.f32 %v1854, %v1859
        %v1863 = vlaneseq
        %v1864 = vshrl.u32 %v1863, 7
        %v1865 = vsub.s32 0, %v1864
        %v1866 = vrot.slane %v1843, %v1865
        %v1868 = vadd.f32 %v1861, %v1866
        %s1869 = scalar_lea.vmem [#allocation5], 192
        %v1870 = vld [vmem:[%s1869] sm:$0xff]
        %v1871 = vld [vmem:[%s1869 + $0x8] sm:$0xf]
        %v1872 = vld [vmem:[%s1869 + $0xc] sm:$0xff]
        %v1873 = vld [vmem:[%s1869 + $0x14] sm:$0xf]
        %v1874 = vld [vmem:[%s1869 + $0x18] sm:$0xff]
        %v1875 = vld [vmem:[%s1869 + $0x20] sm:$0xf]
        %v1876 = vld [vmem:[%s1869 + $0x24] sm:$0xff]
        %v1877 = vld [vmem:[%s1869 + $0x2c] sm:$0xf]
        %v1878 = vld [vmem:[%s1869 + $0x30] sm:$0xff]
        %v1879 = vld [vmem:[%s1869 + $0x38] sm:$0xf]
        %v1880 = vld [vmem:[%s1869 + $0x3c] sm:$0xff]
        %v1881 = vld [vmem:[%s1869 + $0x44] sm:$0xf]
        %v1882 = vld [vmem:[%s1869 + $0x48] sm:$0xff]
        %v1883 = vld [vmem:[%s1869 + $0x50] sm:$0xf]
        %v1884 = vld [vmem:[%s1869 + $0x54] sm:$0xff]
        %v1885 = vld [vmem:[%s1869 + $0x5c] sm:$0xf]
        %v1886 = vld [vmem:[%s1869 + $0x60] sm:$0xff]
        %v1887 = vld [vmem:[%s1869 + $0x68] sm:$0xf]
        %v1888 = vld [vmem:[%s1869 + $0x6c] sm:$0xff]
        %v1889 = vld [vmem:[%s1869 + $0x74] sm:$0xf]
        %v1890 = vld [vmem:[%s1869 + $0x78] sm:$0xff]
        %v1891 = vld [vmem:[%s1869 + $0x80] sm:$0xf]
        %v1892 = vld [vmem:[%s1869 + $0x84] sm:$0xff]
        %v1893 = vld [vmem:[%s1869 + $0x8c] sm:$0xf]
        %v1894 = vld [vmem:[%s1869 + $0x90] sm:$0xff]
        %v1895 = vld [vmem:[%s1869 + $0x98] sm:$0xf]
        %v1896 = vld [vmem:[%s1869 + $0x9c] sm:$0xff]
        %v1897 = vld [vmem:[%s1869 + $0xa4] sm:$0xf]
        %v1898 = vld [vmem:[%s1869 + $0xa8] sm:$0xff]
        %v1899 = vld [vmem:[%s1869 + $0xb0] sm:$0xf]
        %v1900 = vld [vmem:[%s1869 + $0xb4] sm:$0xff]
        %v1901 = vld [vmem:[%s1869 + $0xbc] sm:$0xf]
        %s1902 = scalar_lea.vmem [#allocation8], 64
        %v1903 = vld [vmem:[%s1902] sm:$0xf]
        %v1904 = vld [vmem:[%s1902 + $0x4] sm:$0xf]
        %v1905 = vld [vmem:[%s1902 + $0x8] sm:$0xf]
        %v1906 = vld [vmem:[%s1902 + $0xc] sm:$0xf]
        %v1907 = vld [vmem:[%s1902 + $0x10] sm:$0xf]
        %v1908 = vld [vmem:[%s1902 + $0x14] sm:$0xf]
        %v1909 = vld [vmem:[%s1902 + $0x18] sm:$0xf]
        %v1910 = vld [vmem:[%s1902 + $0x1c] sm:$0xf]
        %v1911 = vld [vmem:[%s1902 + $0x20] sm:$0xf]
        %v1912 = vld [vmem:[%s1902 + $0x24] sm:$0xf]
        %v1913 = vld [vmem:[%s1902 + $0x28] sm:$0xf]
        %v1914 = vld [vmem:[%s1902 + $0x2c] sm:$0xf]
        %v1915 = vld [vmem:[%s1902 + $0x30] sm:$0xf]
        %v1916 = vld [vmem:[%s1902 + $0x34] sm:$0xf]
        %v1917 = vld [vmem:[%s1902 + $0x38] sm:$0xf]
        %v1918 = vld [vmem:[%s1902 + $0x3c] sm:$0xf]
        %v1919 = vpack.c.bf16 %v1868, %v1868
        %s1920 = scalar_lea.vmem [#allocation7], 3
        %v1921 = vld [vmem:[%s1920] sm:$0x7]
        %v1923 = vlaneseq
        %v1924 = vshrl.u32 %v1923, 7
        %v1925 = vsub.s32 0, %v1924
        %v1926 = vrot.slane %v1921, %v1925
        %v1927 = vlaneseq
        %v1928 = vshrl.u32 %v1927, 7
        %v1929 = vsub.s32 1, %v1928
        %v1930 = vrot.slane %v1921, %v1929
        %v1931 = vlaneseq
        %v1932 = vshrl.u32 %v1931, 7
        %v1933 = vsub.s32 2, %v1932
        %v1934 = vrot.slane %v1921, %v1933
        %v1970 = vunpack.c.l.b16 %v1870
        %v1971 = vunpack.c.h.b16 %v1870
        %v1972 = vunpack.c.l.b16 %v1871
        %v1973 = vunpack.c.l.b16 %v1872
        %v1974 = vunpack.c.h.b16 %v1872
        %v1975 = vunpack.c.l.b16 %v1873
        %v1976 = vunpack.c.l.b16 %v1874
        %v1977 = vunpack.c.h.b16 %v1874
        %v1978 = vunpack.c.l.b16 %v1875
        %v1979 = vunpack.c.l.b16 %v1876
        %v1980 = vunpack.c.h.b16 %v1876
        %v1981 = vunpack.c.l.b16 %v1877
        %v1982 = vunpack.c.l.b16 %v1878
        %v1983 = vunpack.c.h.b16 %v1878
        %v1984 = vunpack.c.l.b16 %v1879
        %v1985 = vunpack.c.l.b16 %v1880
        %v1986 = vunpack.c.h.b16 %v1880
        %v1987 = vunpack.c.l.b16 %v1881
        %v1988 = vunpack.c.l.b16 %v1882
        %v1989 = vunpack.c.h.b16 %v1882
        %v1990 = vunpack.c.l.b16 %v1883
        %v1991 = vunpack.c.l.b16 %v1884
        %v1992 = vunpack.c.h.b16 %v1884
        %v1993 = vunpack.c.l.b16 %v1885
        %v1994 = vunpack.c.l.b16 %v1886
        %v1995 = vunpack.c.h.b16 %v1886
        %v1996 = vunpack.c.l.b16 %v1887
        %v1997 = vunpack.c.l.b16 %v1888
        %v1998 = vunpack.c.h.b16 %v1888
        %v1999 = vunpack.c.l.b16 %v1889
        %v2000 = vunpack.c.l.b16 %v1890
        %v2001 = vunpack.c.h.b16 %v1890
        %v2002 = vunpack.c.l.b16 %v1891
        %v2003 = vunpack.c.l.b16 %v1892
        %v2004 = vunpack.c.h.b16 %v1892
        %v2005 = vunpack.c.l.b16 %v1893
        %v2006 = vunpack.c.l.b16 %v1894
        %v2007 = vunpack.c.h.b16 %v1894
        %v2008 = vunpack.c.l.b16 %v1895
        %v2009 = vunpack.c.l.b16 %v1896
        %v2010 = vunpack.c.h.b16 %v1896
        %v2011 = vunpack.c.l.b16 %v1897
        %v2012 = vunpack.c.l.b16 %v1898
        %v2013 = vunpack.c.h.b16 %v1898
        %v2014 = vunpack.c.l.b16 %v1899
        %v2015 = vunpack.c.l.b16 %v1900
        %v2016 = vunpack.c.h.b16 %v1900
        %v2017 = vunpack.c.l.b16 %v1901
        %v2018 = vpack.c.b16 %v1973, %v1970
        %v2019 = vpack.c.b16 %v1974, %v1971
        %v2020 = vpack.c.b16 %v1975, %v1972
        %v2021 = vpack.c.b16 %v1979, %v1976
        %v2022 = vpack.c.b16 %v1980, %v1977
        %v2023 = vpack.c.b16 %v1981, %v1978
        %v2024 = vpack.c.b16 %v1985, %v1982
        %v2025 = vpack.c.b16 %v1986, %v1983
        %v2026 = vpack.c.b16 %v1987, %v1984
        %v2027 = vpack.c.b16 %v1991, %v1988
        %v2028 = vpack.c.b16 %v1992, %v1989
        %v2029 = vpack.c.b16 %v1993, %v1990
        %v2030 = vpack.c.b16 %v1997, %v1994
        %v2031 = vpack.c.b16 %v1998, %v1995
        %v2032 = vpack.c.b16 %v1999, %v1996
        %v2033 = vpack.c.b16 %v2003, %v2000
        %v2034 = vpack.c.b16 %v2004, %v2001
        %v2035 = vpack.c.b16 %v2005, %v2002
        %v2036 = vpack.c.b16 %v2009, %v2006
        %v2037 = vpack.c.b16 %v2010, %v2007
        %v2038 = vpack.c.b16 %v2011, %v2008
        %v2039 = vpack.c.b16 %v2015, %v2012
        %v2040 = vpack.c.b16 %v2016, %v2013
        %v2041 = vpack.c.b16 %v2017, %v2014
        %2066 = vmatprep.subr.bf16.mxu0 %v2040
        %2067 = vmatpush1.bf16.msra.mxu0 %v2039
        %2068 = vmatprep.subr.bf16.mxu0 %v2037
        %2069 = vmatpush1.bf16.msra.mxu0 %v2036
        %2070 = vmatprep.subr.bf16.mxu0 %v2034
        %2071 = vmatpush1.bf16.msra.mxu0 %v2033
        %2072 = vmatprep.subr.bf16.mxu0 %v2031
        %2073 = vmatpush1.bf16.msra.mxu0 %v2030
        %2074 = vmatprep.subr.bf16.mxu0 %v2028
        %2075 = vmatpush1.bf16.msra.mxu0 %v2027
        %2076 = vmatprep.subr.bf16.mxu0 %v2025
        %2077 = vmatpush1.bf16.msra.mxu0 %v2024
        %2078 = vmatprep.subr.bf16.mxu0 %v2022
        %2079 = vmatpush1.bf16.msra.mxu0 %v2021
        %2080 = vmatprep.subr.bf16.mxu0 %v2019
        %2081 = vmatpush1.bf16.msra.mxu0 %v2018
        %2082 = vmatprep.subr.bf16.mxu0 0
        %2083 = vmatpush2.bf16.msra.mxu0 0
        %2084 = vmatprep.subr.bf16.mxu0 0
        %2085 = vmatpush2.bf16.msra.mxu0 0
        %2086 = vmatprep.subr.bf16.mxu0 0
        %2087 = vmatpush2.bf16.msra.mxu0 0
        %2088 = vmatprep.subr.bf16.mxu0 0
        %2089 = vmatpush2.bf16.msra.mxu0 0
        %2090 = vmatprep.subr.bf16.mxu0 0
        %2091 = vmatpush2.bf16.msra.mxu0 0
        %2092 = vmatprep.subr.bf16.mxu0 0
        %2093 = vmatpush2.bf16.msra.mxu0 0
        %2094 = vmatprep.subr.bf16.mxu0 0
        %2095 = vmatpush2.bf16.msra.mxu0 0
        %2096 = vmatprep.subr.bf16.mxu0 0
        %2097 = vmatpush2.bf16.msra.mxu0 0
        %2098 = vmatprep.mubr.bf16.mxu0 0
        %2099 = vmatmul.mubr.bf16.gmra.mxu0 %v1919
        %v2100 = vpop.f32.mrf.mxu0
        %v2101 = vadd.f32 %v1926, %v2100
        %v2102 = vpop.f32.mrf.mxu0
        %v2103 = vadd.f32 %v1930, %v2102
        %v2104 = vpop.f32.mrf.mxu0
        %v2105 = vpop.f32.mrf.mxu0
        %2106 = vdwg.mxu0
        %2107 = vmatprep.subr.bf16.mxu0 0
        %2108 = vmatpush1.bf16.msra.mxu0 %v2041
        %2109 = vmatprep.subr.bf16.mxu0 0
        %2110 = vmatpush1.bf16.msra.mxu0 %v2038
        %2111 = vmatprep.subr.bf16.mxu0 0
        %2112 = vmatpush1.bf16.msra.mxu0 %v2035
        %2113 = vmatprep.subr.bf16.mxu0 0
        %2114 = vmatpush1.bf16.msra.mxu0 %v2032
        %2115 = vmatprep.subr.bf16.mxu0 0
        %2116 = vmatpush1.bf16.msra.mxu0 %v2029
        %2117 = vmatprep.subr.bf16.mxu0 0
        %2118 = vmatpush1.bf16.msra.mxu0 %v2026
        %2119 = vmatprep.subr.bf16.mxu0 0
        %2120 = vmatpush1.bf16.msra.mxu0 %v2023
        %2121 = vmatprep.subr.bf16.mxu0 0
        %2122 = vmatpush1.bf16.msra.mxu0 %v2020
        %2123 = vmatprep.subr.bf16.mxu0 0
        %2124 = vmatpush2.bf16.msra.mxu0 0
        %2125 = vmatprep.subr.bf16.mxu0 0
        %2126 = vmatpush2.bf16.msra.mxu0 0
        %2127 = vmatprep.subr.bf16.mxu0 0
        %2128 = vmatpush2.bf16.msra.mxu0 0
        %2129 = vmatprep.subr.bf16.mxu0 0
        %2130 = vmatpush2.bf16.msra.mxu0 0
        %2131 = vmatprep.subr.bf16.mxu0 0
        %2132 = vmatpush2.bf16.msra.mxu0 0
        %2133 = vmatprep.subr.bf16.mxu0 0
        %2134 = vmatpush2.bf16.msra.mxu0 0
        %2135 = vmatprep.subr.bf16.mxu0 0
        %2136 = vmatpush2.bf16.msra.mxu0 0
        %2137 = vmatprep.subr.bf16.mxu0 0
        %2138 = vmatpush2.bf16.msra.mxu0 0
        %2139 = vmatprep.mubr.bf16.mxu0 0
        %2140 = vmatmul.mubr.bf16.gmra.mxu0 %v1919
        %v2141 = vpop.f32.mrf.mxu0
        %v2142 = vadd.f32 %v1934, %v2141
        %v2143 = vpop.f32.mrf.mxu0
        %v2144 = vpop.f32.mrf.mxu0
        %v2145 = vpop.f32.mrf.mxu0
        %2146 = vdwg.mxu0
        %v2147 = vpack.c.bf16 %v2101, %v2101
        %v2148 = vpack.c.bf16 %v2103, %v2103
        %v2149 = vpack.c.bf16 %v2142, %v2142
        %v2151 = vsel %vm809, %v2147, 0
        %v2154 = vsel %vm809, %v2148, 0
        %2156 = vmatprep.subr.bf16.mxu0 0
        %2157 = vmatpush1.bf16.xpose.msra.mxu0 0
        %2158 = vmatprep.subr.bf16.mxu0 0
        %2159 = vmatpush1.bf16.xpose.msra.mxu0 0
        %2160 = vmatprep.subr.bf16.mxu0 0
        %2161 = vmatpush1.bf16.xpose.msra.mxu0 0
        %2162 = vmatprep.subr.bf16.mxu0 0
        %2163 = vmatpush1.bf16.xpose.msra.mxu0 0
        %2164 = vmatprep.subr.bf16.mxu0 0
        %2165 = vmatpush1.bf16.xpose.msra.mxu0 0
        %2166 = vmatprep.subr.bf16.mxu0 0
        %2167 = vmatpush1.bf16.xpose.msra.mxu0 0
        %2168 = vmatprep.subr.bf16.mxu0 0
        %2169 = vmatpush1.bf16.xpose.msra.mxu0 0
        %2170 = vmatprep.subr.bf16.mxu0 0
        %2171 = vmatpush1.bf16.xpose.msra.mxu0 %v2154
        %2172 = vmatprep.subr.bf16.mxu0 0
        %2173 = vmatpush2.bf16.xpose.msra.mxu0 0
        %2174 = vmatprep.subr.bf16.mxu0 0
        %2175 = vmatpush2.bf16.xpose.msra.mxu0 0
        %2176 = vmatprep.subr.bf16.mxu0 0
        %2177 = vmatpush2.bf16.xpose.msra.mxu0 0
        %2178 = vmatprep.subr.bf16.mxu0 0
        %2179 = vmatpush2.bf16.xpose.msra.mxu0 0
        %2180 = vmatprep.subr.bf16.mxu0 0
        %2181 = vmatpush2.bf16.xpose.msra.mxu0 0
        %2182 = vmatprep.subr.bf16.mxu0 0
        %2183 = vmatpush2.bf16.xpose.msra.mxu0 0
        %2184 = vmatprep.subr.bf16.mxu0 0
        %2185 = vmatpush2.bf16.xpose.msra.mxu0 0
        %2186 = vmatprep.subr.bf16.mxu0 0
        %2187 = vmatpush2.bf16.xpose.msra.mxu0 0
        %2188 = vmatprep.mubr.bf16.mxu0 0
        %2189 = vmatmul.mubr.bf16.gmra.mxu0 %v2151
        %v2190 = vpop.f32.mrf.mxu0
        %v2191 = vadd.f32 0.0, %v2190
        %v2192 = vpop.f32.mrf.mxu0
        %v2193 = vpop.f32.mrf.mxu0
        %v2194 = vpop.f32.mrf.mxu0
        %2195 = vdwg.mxu0
        %v2196 = vsel %vm856, %v2191, -inf
        %2197 = vmax.xlane.f32.xlu0 %v2196
        %v2198 = vpop.xlane.xlu0 %2197
        %v2199 = vsub.f32 %v2191, %v2198
        %v2200 = vmul.f32 %v2199, 1.442695
        %v2201 = vpow.pop %v2200
        %v2202 = vsel %vm856, %v2201, 0.0
        %2203 = vadd.xlane.f32.xlu0 %v2202
        %v2204 = vpop.xlane.xlu0 %2203
        %v2205 = vrcp.pop %v2204
        %v2206 = vmul.f32 %v2201, %v2205
        %v2207 = vpack.c.bf16 %v2206, %v2206
        %v2209 = vsel %vm856, %v2207, 0
        %v2212 = vsel %vm872, %v2149, 0
        %2214 = vmatprep.subr.bf16.mxu0 0
        %2215 = vmatpush1.bf16.msra.mxu0 0
        %2216 = vmatprep.subr.bf16.mxu0 0
        %2217 = vmatpush1.bf16.msra.mxu0 0
        %2218 = vmatprep.subr.bf16.mxu0 0
        %2219 = vmatpush1.bf16.msra.mxu0 0
        %2220 = vmatprep.subr.bf16.mxu0 0
        %2221 = vmatpush1.bf16.msra.mxu0 0
        %2222 = vmatprep.subr.bf16.mxu0 0
        %2223 = vmatpush1.bf16.msra.mxu0 0
        %2224 = vmatprep.subr.bf16.mxu0 0
        %2225 = vmatpush1.bf16.msra.mxu0 0
        %2226 = vmatprep.subr.bf16.mxu0 0
        %2227 = vmatpush1.bf16.msra.mxu0 0
        %2228 = vmatprep.subr.bf16.mxu0 0
        %2229 = vmatpush1.bf16.msra.mxu0 %v2212
        %2230 = vmatprep.subr.bf16.mxu0 0
        %2231 = vmatpush2.bf16.msra.mxu0 0
        %2232 = vmatprep.subr.bf16.mxu0 0
        %2233 = vmatpush2.bf16.msra.mxu0 0
        %2234 = vmatprep.subr.bf16.mxu0 0
        %2235 = vmatpush2.bf16.msra.mxu0 0
        %2236 = vmatprep.subr.bf16.mxu0 0
        %2237 = vmatpush2.bf16.msra.mxu0 0
        %2238 = vmatprep.subr.bf16.mxu0 0
        %2239 = vmatpush2.bf16.msra.mxu0 0
        %2240 = vmatprep.subr.bf16.mxu0 0
        %2241 = vmatpush2.bf16.msra.mxu0 0
        %2242 = vmatprep.subr.bf16.mxu0 0
        %2243 = vmatpush2.bf16.msra.mxu0 0
        %2244 = vmatprep.subr.bf16.mxu0 0
        %2245 = vmatpush2.bf16.msra.mxu0 0
        %2246 = vmatprep.mubr.bf16.mxu0 0
        %2247 = vmatmul.mubr.bf16.gmra.mxu0 %v2209
        %v2248 = vpop.f32.mrf.mxu0
        %v2249 = vadd.f32 0.0, %v2248
        %v2250 = vpop.f32.mrf.mxu0
        %v2251 = vpop.f32.mrf.mxu0
        %v2252 = vpop.f32.mrf.mxu0
        %2253 = vdwg.mxu0
        %v2254 = vpack.c.bf16 %v2249, %v2249
        %2256 = vrot.lane.b32.xlu0 %v2147, 96
        %v2257 = vpop.permute.xlu0 %2256
        %2259 = vrot.lane.b32.xlu0 %v2148, 96
        %v2260 = vpop.permute.xlu0 %2259
        %v2262 = vsel %vm809, %v2257, 0
        %v2265 = vsel %vm809, %v2260, 0
        %2267 = vmatprep.subr.bf16.mxu0 0
        %2268 = vmatpush1.bf16.xpose.msra.mxu0 0
        %2269 = vmatprep.subr.bf16.mxu0 0
        %2270 = vmatpush1.bf16.xpose.msra.mxu0 0
        %2271 = vmatprep.subr.bf16.mxu0 0
        %2272 = vmatpush1.bf16.xpose.msra.mxu0 0
        %2273 = vmatprep.subr.bf16.mxu0 0
        %2274 = vmatpush1.bf16.xpose.msra.mxu0 0
        %2275 = vmatprep.subr.bf16.mxu0 0
        %2276 = vmatpush1.bf16.xpose.msra.mxu0 0
        %2277 = vmatprep.subr.bf16.mxu0 0
        %2278 = vmatpush1.bf16.xpose.msra.mxu0 0
        %2279 = vmatprep.subr.bf16.mxu0 0
        %2280 = vmatpush1.bf16.xpose.msra.mxu0 0
        %2281 = vmatprep.subr.bf16.mxu0 0
        %2282 = vmatpush1.bf16.xpose.msra.mxu0 %v2265
        %2283 = vmatprep.subr.bf16.mxu0 0
        %2284 = vmatpush2.bf16.xpose.msra.mxu0 0
        %2285 = vmatprep.subr.bf16.mxu0 0
        %2286 = vmatpush2.bf16.xpose.msra.mxu0 0
        %2287 = vmatprep.subr.bf16.mxu0 0
        %2288 = vmatpush2.bf16.xpose.msra.mxu0 0
        %2289 = vmatprep.subr.bf16.mxu0 0
        %2290 = vmatpush2.bf16.xpose.msra.mxu0 0
        %2291 = vmatprep.subr.bf16.mxu0 0
        %2292 = vmatpush2.bf16.xpose.msra.mxu0 0
        %2293 = vmatprep.subr.bf16.mxu0 0
        %2294 = vmatpush2.bf16.xpose.msra.mxu0 0
        %2295 = vmatprep.subr.bf16.mxu0 0
        %2296 = vmatpush2.bf16.xpose.msra.mxu0 0
        %2297 = vmatprep.subr.bf16.mxu0 0
        %2298 = vmatpush2.bf16.xpose.msra.mxu0 0
        %2299 = vmatprep.mubr.bf16.mxu0 0
        %2300 = vmatmul.mubr.bf16.gmra.mxu0 %v2262
        %v2301 = vpop.f32.mrf.mxu0
        %v2302 = vadd.f32 0.0, %v2301
        %v2303 = vpop.f32.mrf.mxu0
        %v2304 = vpop.f32.mrf.mxu0
        %v2305 = vpop.f32.mrf.mxu0
        %2306 = vdwg.mxu0
        %v2307 = vsel %vm856, %v2302, -inf
        %2308 = vmax.xlane.f32.xlu0 %v2307
        %v2309 = vpop.xlane.xlu0 %2308
        %v2310 = vsub.f32 %v2302, %v2309
        %v2311 = vmul.f32 %v2310, 1.442695
        %v2312 = vpow.pop %v2311
        %v2313 = vsel %vm856, %v2312, 0.0
        %2314 = vadd.xlane.f32.xlu0 %v2313
        %v2315 = vpop.xlane.xlu0 %2314
        %v2316 = vrcp.pop %v2315
        %v2317 = vmul.f32 %v2312, %v2316
        %v2318 = vpack.c.bf16 %v2317, %v2317
        %2320 = vrot.lane.b32.xlu0 %v2149, 96
        %v2321 = vpop.permute.xlu0 %2320
        %v2323 = vsel %vm856, %v2318, 0
        %v2326 = vsel %vm872, %v2321, 0
        %2328 = vmatprep.subr.bf16.mxu0 0
        %2329 = vmatpush1.bf16.msra.mxu0 0
        %2330 = vmatprep.subr.bf16.mxu0 0
        %2331 = vmatpush1.bf16.msra.mxu0 0
        %2332 = vmatprep.subr.bf16.mxu0 0
        %2333 = vmatpush1.bf16.msra.mxu0 0
        %2334 = vmatprep.subr.bf16.mxu0 0
        %2335 = vmatpush1.bf16.msra.mxu0 0
        %2336 = vmatprep.subr.bf16.mxu0 0
        %2337 = vmatpush1.bf16.msra.mxu0 0
        %2338 = vmatprep.subr.bf16.mxu0 0
        %2339 = vmatpush1.bf16.msra.mxu0 0
        %2340 = vmatprep.subr.bf16.mxu0 0
        %2341 = vmatpush1.bf16.msra.mxu0 0
        %2342 = vmatprep.subr.bf16.mxu0 0
        %2343 = vmatpush1.bf16.msra.mxu0 %v2326
        %2344 = vmatprep.subr.bf16.mxu0 0
        %2345 = vmatpush2.bf16.msra.mxu0 0
        %2346 = vmatprep.subr.bf16.mxu0 0
        %2347 = vmatpush2.bf16.msra.mxu0 0
        %2348 = vmatprep.subr.bf16.mxu0 0
        %2349 = vmatpush2.bf16.msra.mxu0 0
        %2350 = vmatprep.subr.bf16.mxu0 0
        %2351 = vmatpush2.bf16.msra.mxu0 0
        %2352 = vmatprep.subr.bf16.mxu0 0
        %2353 = vmatpush2.bf16.msra.mxu0 0
        %2354 = vmatprep.subr.bf16.mxu0 0
        %2355 = vmatpush2.bf16.msra.mxu0 0
        %2356 = vmatprep.subr.bf16.mxu0 0
        %2357 = vmatpush2.bf16.msra.mxu0 0
        %2358 = vmatprep.subr.bf16.mxu0 0
        %2359 = vmatpush2.bf16.msra.mxu0 0
        %2360 = vmatprep.mubr.bf16.mxu0 0
        %2361 = vmatmul.mubr.bf16.gmra.mxu0 %v2323
        %v2362 = vpop.f32.mrf.mxu0
        %v2363 = vadd.f32 0.0, %v2362
        %v2364 = vpop.f32.mrf.mxu0
        %v2365 = vpop.f32.mrf.mxu0
        %v2366 = vpop.f32.mrf.mxu0
        %2367 = vdwg.mxu0
        %v2368 = vpack.c.bf16 %v2363, %v2363
        %v2373 = vunpack.c.l.b16 %v1907
        %v2374 = vunpack.c.l.b16 %v1908
        %v2375 = vunpack.c.l.b16 %v1909
        %v2376 = vunpack.c.l.b16 %v1910
        %v2377 = vpack.c.b16 %v2374, %v2373
        %v2378 = vpack.c.b16 %v2376, %v2375
        %v2382 = vsel %vm809, %v2368, 0
        %2384 = vmatprep.subr.bf16.mxu0 0
        %2385 = vmatpush1.bf16.msra.mxu0 0
        %2386 = vmatprep.subr.bf16.mxu0 0
        %2387 = vmatpush1.bf16.msra.mxu0 0
        %2388 = vmatprep.subr.bf16.mxu0 0
        %2389 = vmatpush1.bf16.msra.mxu0 0
        %2390 = vmatprep.subr.bf16.mxu0 0
        %2391 = vmatpush1.bf16.msra.mxu0 0
        %2392 = vmatprep.subr.bf16.mxu0 0
        %2393 = vmatpush1.bf16.msra.mxu0 0
        %2394 = vmatprep.subr.bf16.mxu0 0
        %2395 = vmatpush1.bf16.msra.mxu0 0
        %2396 = vmatprep.subr.bf16.mxu0 0
        %2397 = vmatpush1.bf16.msra.mxu0 %v2378
        %2398 = vmatprep.subr.bf16.mxu0 0
        %2399 = vmatpush1.bf16.msra.mxu0 %v2377
        %2400 = vmatprep.subr.bf16.mxu0 0
        %2401 = vmatpush2.bf16.msra.mxu0 0
        %2402 = vmatprep.subr.bf16.mxu0 0
        %2403 = vmatpush2.bf16.msra.mxu0 0
        %2404 = vmatprep.subr.bf16.mxu0 0
        %2405 = vmatpush2.bf16.msra.mxu0 0
        %2406 = vmatprep.subr.bf16.mxu0 0
        %2407 = vmatpush2.bf16.msra.mxu0 0
        %2408 = vmatprep.subr.bf16.mxu0 0
        %2409 = vmatpush2.bf16.msra.mxu0 0
        %2410 = vmatprep.subr.bf16.mxu0 0
        %2411 = vmatpush2.bf16.msra.mxu0 0
        %2412 = vmatprep.subr.bf16.mxu0 0
        %2413 = vmatpush2.bf16.msra.mxu0 0
        %2414 = vmatprep.subr.bf16.mxu0 0
        %2415 = vmatpush2.bf16.msra.mxu0 0
        %2416 = vmatprep.mubr.bf16.mxu0 0
        %2417 = vmatmul.mubr.bf16.gmra.mxu0 %v2382
        %v2418 = vpop.f32.mrf.mxu0
        %v2419 = vadd.f32 0.0, %v2418
        %v2420 = vpop.f32.mrf.mxu0
        %v2421 = vpop.f32.mrf.mxu0
        %v2422 = vpop.f32.mrf.mxu0
        %2423 = vdwg.mxu0
        %v2428 = vunpack.c.l.b16 %v1903
        %v2429 = vunpack.c.l.b16 %v1904
        %v2430 = vunpack.c.l.b16 %v1905
        %v2431 = vunpack.c.l.b16 %v1906
        %v2432 = vpack.c.b16 %v2429, %v2428
        %v2433 = vpack.c.b16 %v2431, %v2430
        %v2437 = vsel %vm809, %v2254, 0
        %2439 = vmatprep.subr.bf16.mxu0 0
        %2440 = vmatpush1.bf16.msra.mxu0 0
        %2441 = vmatprep.subr.bf16.mxu0 0
        %2442 = vmatpush1.bf16.msra.mxu0 0
        %2443 = vmatprep.subr.bf16.mxu0 0
        %2444 = vmatpush1.bf16.msra.mxu0 0
        %2445 = vmatprep.subr.bf16.mxu0 0
        %2446 = vmatpush1.bf16.msra.mxu0 0
        %2447 = vmatprep.subr.bf16.mxu0 0
        %2448 = vmatpush1.bf16.msra.mxu0 0
        %2449 = vmatprep.subr.bf16.mxu0 0
        %2450 = vmatpush1.bf16.msra.mxu0 0
        %2451 = vmatprep.subr.bf16.mxu0 0
        %2452 = vmatpush1.bf16.msra.mxu0 %v2433
        %2453 = vmatprep.subr.bf16.mxu0 0
        %2454 = vmatpush1.bf16.msra.mxu0 %v2432
        %2455 = vmatprep.subr.bf16.mxu0 0
        %2456 = vmatpush2.bf16.msra.mxu0 0
        %2457 = vmatprep.subr.bf16.mxu0 0
        %2458 = vmatpush2.bf16.msra.mxu0 0
        %2459 = vmatprep.subr.bf16.mxu0 0
        %2460 = vmatpush2.bf16.msra.mxu0 0
        %2461 = vmatprep.subr.bf16.mxu0 0
        %2462 = vmatpush2.bf16.msra.mxu0 0
        %2463 = vmatprep.subr.bf16.mxu0 0
        %2464 = vmatpush2.bf16.msra.mxu0 0
        %2465 = vmatprep.subr.bf16.mxu0 0
        %2466 = vmatpush2.bf16.msra.mxu0 0
        %2467 = vmatprep.subr.bf16.mxu0 0
        %2468 = vmatpush2.bf16.msra.mxu0 0
        %2469 = vmatprep.subr.bf16.mxu0 0
        %2470 = vmatpush2.bf16.msra.mxu0 0
        %2471 = vmatprep.mubr.bf16.mxu0 0
        %2472 = vmatmul.mubr.bf16.gmra.mxu0 %v2437
        %v2473 = vpop.f32.mrf.mxu0
        %v2474 = vadd.f32 %v2419, %v2473
        %v2475 = vpop.f32.mrf.mxu0
        %v2476 = vpop.f32.mrf.mxu0
        %v2477 = vpop.f32.mrf.mxu0
        %2478 = vdwg.mxu0
        %2479 = vrot.lane.b32.xlu0 %v2147, 64
        %v2480 = vpop.permute.xlu0 %2479
        %2481 = vrot.lane.b32.xlu0 %v2148, 64
        %v2482 = vpop.permute.xlu0 %2481
        %v2484 = vsel %vm809, %v2480, 0
        %v2487 = vsel %vm809, %v2482, 0
        %2489 = vmatprep.subr.bf16.mxu0 0
        %2490 = vmatpush1.bf16.xpose.msra.mxu0 0
        %2491 = vmatprep.subr.bf16.mxu0 0
        %2492 = vmatpush1.bf16.xpose.msra.mxu0 0
        %2493 = vmatprep.subr.bf16.mxu0 0
        %2494 = vmatpush1.bf16.xpose.msra.mxu0 0
        %2495 = vmatprep.subr.bf16.mxu0 0
        %2496 = vmatpush1.bf16.xpose.msra.mxu0 0
        %2497 = vmatprep.subr.bf16.mxu0 0
        %2498 = vmatpush1.bf16.xpose.msra.mxu0 0
        %2499 = vmatprep.subr.bf16.mxu0 0
        %2500 = vmatpush1.bf16.xpose.msra.mxu0 0
        %2501 = vmatprep.subr.bf16.mxu0 0
        %2502 = vmatpush1.bf16.xpose.msra.mxu0 0
        %2503 = vmatprep.subr.bf16.mxu0 0
        %2504 = vmatpush1.bf16.xpose.msra.mxu0 %v2487
        %2505 = vmatprep.subr.bf16.mxu0 0
        %2506 = vmatpush2.bf16.xpose.msra.mxu0 0
        %2507 = vmatprep.subr.bf16.mxu0 0
        %2508 = vmatpush2.bf16.xpose.msra.mxu0 0
        %2509 = vmatprep.subr.bf16.mxu0 0
        %2510 = vmatpush2.bf16.xpose.msra.mxu0 0
        %2511 = vmatprep.subr.bf16.mxu0 0
        %2512 = vmatpush2.bf16.xpose.msra.mxu0 0
        %2513 = vmatprep.subr.bf16.mxu0 0
        %2514 = vmatpush2.bf16.xpose.msra.mxu0 0
        %2515 = vmatprep.subr.bf16.mxu0 0
        %2516 = vmatpush2.bf16.xpose.msra.mxu0 0
        %2517 = vmatprep.subr.bf16.mxu0 0
        %2518 = vmatpush2.bf16.xpose.msra.mxu0 0
        %2519 = vmatprep.subr.bf16.mxu0 0
        %2520 = vmatpush2.bf16.xpose.msra.mxu0 0
        %2521 = vmatprep.mubr.bf16.mxu0 0
        %2522 = vmatmul.mubr.bf16.gmra.mxu0 %v2484
        %v2523 = vpop.f32.mrf.mxu0
        %v2524 = vadd.f32 0.0, %v2523
        %v2525 = vpop.f32.mrf.mxu0
        %v2526 = vpop.f32.mrf.mxu0
        %v2527 = vpop.f32.mrf.mxu0
        %2528 = vdwg.mxu0
        %v2529 = vsel %vm856, %v2524, -inf
        %2530 = vmax.xlane.f32.xlu0 %v2529
        %v2531 = vpop.xlane.xlu0 %2530
        %v2532 = vsub.f32 %v2524, %v2531
        %v2533 = vmul.f32 %v2532, 1.442695
        %v2534 = vpow.pop %v2533
        %v2535 = vsel %vm856, %v2534, 0.0
        %2536 = vadd.xlane.f32.xlu0 %v2535
        %v2537 = vpop.xlane.xlu0 %2536
        %v2538 = vrcp.pop %v2537
        %v2539 = vmul.f32 %v2534, %v2538
        %v2540 = vpack.c.bf16 %v2539, %v2539
        %2541 = vrot.lane.b32.xlu0 %v2149, 64
        %v2542 = vpop.permute.xlu0 %2541
        %v2544 = vsel %vm856, %v2540, 0
        %v2547 = vsel %vm872, %v2542, 0
        %2549 = vmatprep.subr.bf16.mxu0 0
        %2550 = vmatpush1.bf16.msra.mxu0 0
        %2551 = vmatprep.subr.bf16.mxu0 0
        %2552 = vmatpush1.bf16.msra.mxu0 0
        %2553 = vmatprep.subr.bf16.mxu0 0
        %2554 = vmatpush1.bf16.msra.mxu0 0
        %2555 = vmatprep.subr.bf16.mxu0 0
        %2556 = vmatpush1.bf16.msra.mxu0 0
        %2557 = vmatprep.subr.bf16.mxu0 0
        %2558 = vmatpush1.bf16.msra.mxu0 0
        %2559 = vmatprep.subr.bf16.mxu0 0
        %2560 = vmatpush1.bf16.msra.mxu0 0
        %2561 = vmatprep.subr.bf16.mxu0 0
        %2562 = vmatpush1.bf16.msra.mxu0 0
        %2563 = vmatprep.subr.bf16.mxu0 0
        %2564 = vmatpush1.bf16.msra.mxu0 %v2547
        %2565 = vmatprep.subr.bf16.mxu0 0
        %2566 = vmatpush2.bf16.msra.mxu0 0
        %2567 = vmatprep.subr.bf16.mxu0 0
        %2568 = vmatpush2.bf16.msra.mxu0 0
        %2569 = vmatprep.subr.bf16.mxu0 0
        %2570 = vmatpush2.bf16.msra.mxu0 0
        %2571 = vmatprep.subr.bf16.mxu0 0
        %2572 = vmatpush2.bf16.msra.mxu0 0
        %2573 = vmatprep.subr.bf16.mxu0 0
        %2574 = vmatpush2.bf16.msra.mxu0 0
        %2575 = vmatprep.subr.bf16.mxu0 0
        %2576 = vmatpush2.bf16.msra.mxu0 0
        %2577 = vmatprep.subr.bf16.mxu0 0
        %2578 = vmatpush2.bf16.msra.mxu0 0
        %2579 = vmatprep.subr.bf16.mxu0 0
        %2580 = vmatpush2.bf16.msra.mxu0 0
        %2581 = vmatprep.mubr.bf16.mxu0 0
        %2582 = vmatmul.mubr.bf16.gmra.mxu0 %v2544
        %v2583 = vpop.f32.mrf.mxu0
        %v2584 = vadd.f32 0.0, %v2583
        %v2585 = vpop.f32.mrf.mxu0
        %v2586 = vpop.f32.mrf.mxu0
        %v2587 = vpop.f32.mrf.mxu0
        %2588 = vdwg.mxu0
        %v2589 = vpack.c.bf16 %v2584, %v2584
        %v2594 = vunpack.c.l.b16 %v1911
        %v2595 = vunpack.c.l.b16 %v1912
        %v2596 = vunpack.c.l.b16 %v1913
        %v2597 = vunpack.c.l.b16 %v1914
        %v2598 = vpack.c.b16 %v2595, %v2594
        %v2599 = vpack.c.b16 %v2597, %v2596
        %v2603 = vsel %vm809, %v2589, 0
        %2605 = vmatprep.subr.bf16.mxu0 0
        %2606 = vmatpush1.bf16.msra.mxu0 0
        %2607 = vmatprep.subr.bf16.mxu0 0
        %2608 = vmatpush1.bf16.msra.mxu0 0
        %2609 = vmatprep.subr.bf16.mxu0 0
        %2610 = vmatpush1.bf16.msra.mxu0 0
        %2611 = vmatprep.subr.bf16.mxu0 0
        %2612 = vmatpush1.bf16.msra.mxu0 0
        %2613 = vmatprep.subr.bf16.mxu0 0
        %2614 = vmatpush1.bf16.msra.mxu0 0
        %2615 = vmatprep.subr.bf16.mxu0 0
        %2616 = vmatpush1.bf16.msra.mxu0 0
        %2617 = vmatprep.subr.bf16.mxu0 0
        %2618 = vmatpush1.bf16.msra.mxu0 %v2599
        %2619 = vmatprep.subr.bf16.mxu0 0
        %2620 = vmatpush1.bf16.msra.mxu0 %v2598
        %2621 = vmatprep.subr.bf16.mxu0 0
        %2622 = vmatpush2.bf16.msra.mxu0 0
        %2623 = vmatprep.subr.bf16.mxu0 0
        %2624 = vmatpush2.bf16.msra.mxu0 0
        %2625 = vmatprep.subr.bf16.mxu0 0
        %2626 = vmatpush2.bf16.msra.mxu0 0
        %2627 = vmatprep.subr.bf16.mxu0 0
        %2628 = vmatpush2.bf16.msra.mxu0 0
        %2629 = vmatprep.subr.bf16.mxu0 0
        %2630 = vmatpush2.bf16.msra.mxu0 0
        %2631 = vmatprep.subr.bf16.mxu0 0
        %2632 = vmatpush2.bf16.msra.mxu0 0
        %2633 = vmatprep.subr.bf16.mxu0 0
        %2634 = vmatpush2.bf16.msra.mxu0 0
        %2635 = vmatprep.subr.bf16.mxu0 0
        %2636 = vmatpush2.bf16.msra.mxu0 0
        %2637 = vmatprep.mubr.bf16.mxu0 0
        %2638 = vmatmul.mubr.bf16.gmra.mxu0 %v2603
        %v2639 = vpop.f32.mrf.mxu0
        %v2640 = vadd.f32 0.0, %v2639
        %v2641 = vpop.f32.mrf.mxu0
        %v2642 = vpop.f32.mrf.mxu0
        %v2643 = vpop.f32.mrf.mxu0
        %2644 = vdwg.mxu0
        %v2645 = vadd.f32 %v2474, %v2640
        %2646 = vrot.lane.b32.xlu0 %v2147, 32
        %v2647 = vpop.permute.xlu0 %2646
        %2648 = vrot.lane.b32.xlu0 %v2148, 32
        %v2649 = vpop.permute.xlu0 %2648
        %v2651 = vsel %vm809, %v2647, 0
        %v2654 = vsel %vm809, %v2649, 0
        %2656 = vmatprep.subr.bf16.mxu0 0
        %2657 = vmatpush1.bf16.xpose.msra.mxu0 0
        %2658 = vmatprep.subr.bf16.mxu0 0
        %2659 = vmatpush1.bf16.xpose.msra.mxu0 0
        %2660 = vmatprep.subr.bf16.mxu0 0
        %2661 = vmatpush1.bf16.xpose.msra.mxu0 0
        %2662 = vmatprep.subr.bf16.mxu0 0
        %2663 = vmatpush1.bf16.xpose.msra.mxu0 0
        %2664 = vmatprep.subr.bf16.mxu0 0
        %2665 = vmatpush1.bf16.xpose.msra.mxu0 0
        %2666 = vmatprep.subr.bf16.mxu0 0
        %2667 = vmatpush1.bf16.xpose.msra.mxu0 0
        %2668 = vmatprep.subr.bf16.mxu0 0
        %2669 = vmatpush1.bf16.xpose.msra.mxu0 0
        %2670 = vmatprep.subr.bf16.mxu0 0
        %2671 = vmatpush1.bf16.xpose.msra.mxu0 %v2654
        %2672 = vmatprep.subr.bf16.mxu0 0
        %2673 = vmatpush2.bf16.xpose.msra.mxu0 0
        %2674 = vmatprep.subr.bf16.mxu0 0
        %2675 = vmatpush2.bf16.xpose.msra.mxu0 0
        %2676 = vmatprep.subr.bf16.mxu0 0
        %2677 = vmatpush2.bf16.xpose.msra.mxu0 0
        %2678 = vmatprep.subr.bf16.mxu0 0
        %2679 = vmatpush2.bf16.xpose.msra.mxu0 0
        %2680 = vmatprep.subr.bf16.mxu0 0
        %2681 = vmatpush2.bf16.xpose.msra.mxu0 0
        %2682 = vmatprep.subr.bf16.mxu0 0
        %2683 = vmatpush2.bf16.xpose.msra.mxu0 0
        %2684 = vmatprep.subr.bf16.mxu0 0
        %2685 = vmatpush2.bf16.xpose.msra.mxu0 0
        %2686 = vmatprep.subr.bf16.mxu0 0
        %2687 = vmatpush2.bf16.xpose.msra.mxu0 0
        %2688 = vmatprep.mubr.bf16.mxu0 0
        %2689 = vmatmul.mubr.bf16.gmra.mxu0 %v2651
        %v2690 = vpop.f32.mrf.mxu0
        %v2691 = vadd.f32 0.0, %v2690
        %v2692 = vpop.f32.mrf.mxu0
        %v2693 = vpop.f32.mrf.mxu0
        %v2694 = vpop.f32.mrf.mxu0
        %2695 = vdwg.mxu0
        %v2696 = vsel %vm856, %v2691, -inf
        %2697 = vmax.xlane.f32.xlu0 %v2696
        %v2698 = vpop.xlane.xlu0 %2697
        %v2699 = vsub.f32 %v2691, %v2698
        %v2700 = vmul.f32 %v2699, 1.442695
        %v2701 = vpow.pop %v2700
        %v2702 = vsel %vm856, %v2701, 0.0
        %2703 = vadd.xlane.f32.xlu0 %v2702
        %v2704 = vpop.xlane.xlu0 %2703
        %v2705 = vrcp.pop %v2704
        %v2706 = vmul.f32 %v2701, %v2705
        %v2707 = vpack.c.bf16 %v2706, %v2706
        %2708 = vrot.lane.b32.xlu0 %v2149, 32
        %v2709 = vpop.permute.xlu0 %2708
        %v2711 = vsel %vm856, %v2707, 0
        %v2714 = vsel %vm872, %v2709, 0
        %2716 = vmatprep.subr.bf16.mxu0 0
        %2717 = vmatpush1.bf16.msra.mxu0 0
        %2718 = vmatprep.subr.bf16.mxu0 0
        %2719 = vmatpush1.bf16.msra.mxu0 0
        %2720 = vmatprep.subr.bf16.mxu0 0
        %2721 = vmatpush1.bf16.msra.mxu0 0
        %2722 = vmatprep.subr.bf16.mxu0 0
        %2723 = vmatpush1.bf16.msra.mxu0 0
        %2724 = vmatprep.subr.bf16.mxu0 0
        %2725 = vmatpush1.bf16.msra.mxu0 0
        %2726 = vmatprep.subr.bf16.mxu0 0
        %2727 = vmatpush1.bf16.msra.mxu0 0
        %2728 = vmatprep.subr.bf16.mxu0 0
        %2729 = vmatpush1.bf16.msra.mxu0 0
        %2730 = vmatprep.subr.bf16.mxu0 0
        %2731 = vmatpush1.bf16.msra.mxu0 %v2714
        %2732 = vmatprep.subr.bf16.mxu0 0
        %2733 = vmatpush2.bf16.msra.mxu0 0
        %2734 = vmatprep.subr.bf16.mxu0 0
        %2735 = vmatpush2.bf16.msra.mxu0 0
        %2736 = vmatprep.subr.bf16.mxu0 0
        %2737 = vmatpush2.bf16.msra.mxu0 0
        %2738 = vmatprep.subr.bf16.mxu0 0
        %2739 = vmatpush2.bf16.msra.mxu0 0
        %2740 = vmatprep.subr.bf16.mxu0 0
        %2741 = vmatpush2.bf16.msra.mxu0 0
        %2742 = vmatprep.subr.bf16.mxu0 0
        %2743 = vmatpush2.bf16.msra.mxu0 0
        %2744 = vmatprep.subr.bf16.mxu0 0
        %2745 = vmatpush2.bf16.msra.mxu0 0
        %2746 = vmatprep.subr.bf16.mxu0 0
        %2747 = vmatpush2.bf16.msra.mxu0 0
        %2748 = vmatprep.mubr.bf16.mxu0 0
        %2749 = vmatmul.mubr.bf16.gmra.mxu0 %v2711
        %v2750 = vpop.f32.mrf.mxu0
        %v2751 = vadd.f32 0.0, %v2750
        %v2752 = vpop.f32.mrf.mxu0
        %v2753 = vpop.f32.mrf.mxu0
        %v2754 = vpop.f32.mrf.mxu0
        %2755 = vdwg.mxu0
        %v2756 = vpack.c.bf16 %v2751, %v2751
        %v2761 = vunpack.c.l.b16 %v1915
        %v2762 = vunpack.c.l.b16 %v1916
        %v2763 = vunpack.c.l.b16 %v1917
        %v2764 = vunpack.c.l.b16 %v1918
        %v2765 = vpack.c.b16 %v2762, %v2761
        %v2766 = vpack.c.b16 %v2764, %v2763
        %v2770 = vsel %vm809, %v2756, 0
        %2772 = vmatprep.subr.bf16.mxu0 0
        %2773 = vmatpush1.bf16.msra.mxu0 0
        %2774 = vmatprep.subr.bf16.mxu0 0
        %2775 = vmatpush1.bf16.msra.mxu0 0
        %2776 = vmatprep.subr.bf16.mxu0 0
        %2777 = vmatpush1.bf16.msra.mxu0 0
        %2778 = vmatprep.subr.bf16.mxu0 0
        %2779 = vmatpush1.bf16.msra.mxu0 0
        %2780 = vmatprep.subr.bf16.mxu0 0
        %2781 = vmatpush1.bf16.msra.mxu0 0
        %2782 = vmatprep.subr.bf16.mxu0 0
        %2783 = vmatpush1.bf16.msra.mxu0 0
        %2784 = vmatprep.subr.bf16.mxu0 0
        %2785 = vmatpush1.bf16.msra.mxu0 %v2766
        %2786 = vmatprep.subr.bf16.mxu0 0
        %2787 = vmatpush1.bf16.msra.mxu0 %v2765
        %2788 = vmatprep.subr.bf16.mxu0 0
        %2789 = vmatpush2.bf16.msra.mxu0 0
        %2790 = vmatprep.subr.bf16.mxu0 0
        %2791 = vmatpush2.bf16.msra.mxu0 0
        %2792 = vmatprep.subr.bf16.mxu0 0
        %2793 = vmatpush2.bf16.msra.mxu0 0
        %2794 = vmatprep.subr.bf16.mxu0 0
        %2795 = vmatpush2.bf16.msra.mxu0 0
        %2796 = vmatprep.subr.bf16.mxu0 0
        %2797 = vmatpush2.bf16.msra.mxu0 0
        %2798 = vmatprep.subr.bf16.mxu0 0
        %2799 = vmatpush2.bf16.msra.mxu0 0
        %2800 = vmatprep.subr.bf16.mxu0 0
        %2801 = vmatpush2.bf16.msra.mxu0 0
        %2802 = vmatprep.subr.bf16.mxu0 0
        %2803 = vmatpush2.bf16.msra.mxu0 0
        %2804 = vmatprep.mubr.bf16.mxu0 0
        %2805 = vmatmul.mubr.bf16.gmra.mxu0 %v2770
        %v2806 = vpop.f32.mrf.mxu0
        %v2807 = vadd.f32 0.0, %v2806
        %v2808 = vpop.f32.mrf.mxu0
        %v2809 = vpop.f32.mrf.mxu0
        %v2810 = vpop.f32.mrf.mxu0
        %2811 = vdwg.mxu0
        %v2812 = vadd.f32 %v2645, %v2807
        %s2813 = scalar_lea.vmem %s4, 1
        %v2814 = vld [vmem:[%s2813] sm:$0x1]
        %v2816 = vlaneseq
        %v2817 = vshrl.u32 %v2816, 7
        %v2818 = vsub.s32 0, %v2817
        %v2819 = vrot.slane %v2814, %v2818
        %v2821 = vadd.f32 %v2812, %v2819
        %v2822 = vadd.f32 %v1868, %v2821
        %s2823 = scalar_lea.vmem %s5, 1
        %v2824 = vld [vmem:[%s2823] sm:$0x1]
        %s2825 = scalar_lea.vmem %s6, 1
        %v2826 = vld [vmem:[%s2825] sm:$0x1]
        %2827 = vadd.xlane.f32.xlu0 %v2822
        %v2828 = vpop.xlane.xlu0 %2827
        %v2829 = vmul.f32 %v2828, %v1488
        %v2830 = vsub.f32 %v2822, %v2829
        %v2831 = vmul.f32 %v2830, %v2830
        %2832 = vadd.xlane.f32.xlu0 %v2831
        %v2833 = vpop.xlane.xlu0 %2832
        %v2834 = vmul.f32 %v2833, %v1488
        %v2835 = vadd.f32 %v2834, 1e-05
        %v2836 = vrsqrt.pop %v2835
        %v2837 = vmul.f32 %v2830, %v2836
        %v2839 = vlaneseq
        %v2840 = vshrl.u32 %v2839, 7
        %v2841 = vsub.s32 0, %v2840
        %v2842 = vrot.slane %v2824, %v2841
        %v2844 = vmul.f32 %v2837, %v2842
        %v2846 = vlaneseq
        %v2847 = vshrl.u32 %v2846, 7
        %v2848 = vsub.s32 0, %v2847
        %v2849 = vrot.slane %v2826, %v2848
        %v2851 = vadd.f32 %v2844, %v2849
        %v2852 = vpack.c.bf16 %v2851, %v2851
        %s2853 = scalar_lea.vmem [#allocation10], 128
        %v2854 = vld [vmem:[%s2853] sm:$0xff]
        %v2855 = vld [vmem:[%s2853 + $0x8] sm:$0xff]
        %v2856 = vld [vmem:[%s2853 + $0x10] sm:$0xff]
        %v2857 = vld [vmem:[%s2853 + $0x18] sm:$0xff]
        %v2858 = vld [vmem:[%s2853 + $0x20] sm:$0xff]
        %v2859 = vld [vmem:[%s2853 + $0x28] sm:$0xff]
        %v2860 = vld [vmem:[%s2853 + $0x30] sm:$0xff]
        %v2861 = vld [vmem:[%s2853 + $0x38] sm:$0xff]
        %v2862 = vld [vmem:[%s2853 + $0x40] sm:$0xff]
        %v2863 = vld [vmem:[%s2853 + $0x48] sm:$0xff]
        %v2864 = vld [vmem:[%s2853 + $0x50] sm:$0xff]
        %v2865 = vld [vmem:[%s2853 + $0x58] sm:$0xff]
        %v2866 = vld [vmem:[%s2853 + $0x60] sm:$0xff]
        %v2867 = vld [vmem:[%s2853 + $0x68] sm:$0xff]
        %v2868 = vld [vmem:[%s2853 + $0x70] sm:$0xff]
        %v2869 = vld [vmem:[%s2853 + $0x78] sm:$0xff]
        %s2870 = scalar_lea.vmem %s8, 2
        %v2871 = vld [vmem:[%s2870] sm:$0x3]
        %v2873 = vlaneseq
        %v2874 = vshrl.u32 %v2873, 7
        %v2875 = vsub.s32 0, %v2874
        %v2876 = vrot.slane %v2871, %v2875
        %v2877 = vlaneseq
        %v2878 = vshrl.u32 %v2877, 7
        %v2879 = vsub.s32 1, %v2878
        %v2880 = vrot.slane %v2871, %v2879
        %v2899 = vunpack.c.l.b16 %v2854
        %v2900 = vunpack.c.h.b16 %v2854
        %v2901 = vunpack.c.l.b16 %v2855
        %v2902 = vunpack.c.h.b16 %v2855
        %v2903 = vunpack.c.l.b16 %v2856
        %v2904 = vunpack.c.h.b16 %v2856
        %v2905 = vunpack.c.l.b16 %v2857
        %v2906 = vunpack.c.h.b16 %v2857
        %v2907 = vunpack.c.l.b16 %v2858
        %v2908 = vunpack.c.h.b16 %v2858
        %v2909 = vunpack.c.l.b16 %v2859
        %v2910 = vunpack.c.h.b16 %v2859
        %v2911 = vunpack.c.l.b16 %v2860
        %v2912 = vunpack.c.h.b16 %v2860
        %v2913 = vunpack.c.l.b16 %v2861
        %v2914 = vunpack.c.h.b16 %v2861
        %v2915 = vunpack.c.l.b16 %v2862
        %v2916 = vunpack.c.h.b16 %v2862
        %v2917 = vunpack.c.l.b16 %v2863
        %v2918 = vunpack.c.h.b16 %v2863
        %v2919 = vunpack.c.l.b16 %v2864
        %v2920 = vunpack.c.h.b16 %v2864
        %v2921 = vunpack.c.l.b16 %v2865
        %v2922 = vunpack.c.h.b16 %v2865
        %v2923 = vunpack.c.l.b16 %v2866
        %v2924 = vunpack.c.h.b16 %v2866
        %v2925 = vunpack.c.l.b16 %v2867
        %v2926 = vunpack.c.h.b16 %v2867
        %v2927 = vunpack.c.l.b16 %v2868
        %v2928 = vunpack.c.h.b16 %v2868
        %v2929 = vunpack.c.l.b16 %v2869
        %v2930 = vunpack.c.h.b16 %v2869
        %v2931 = vpack.c.b16 %v2901, %v2899
        %v2932 = vpack.c.b16 %v2902, %v2900
        %v2933 = vpack.c.b16 %v2905, %v2903
        %v2934 = vpack.c.b16 %v2906, %v2904
        %v2935 = vpack.c.b16 %v2909, %v2907
        %v2936 = vpack.c.b16 %v2910, %v2908
        %v2937 = vpack.c.b16 %v2913, %v2911
        %v2938 = vpack.c.b16 %v2914, %v2912
        %v2939 = vpack.c.b16 %v2917, %v2915
        %v2940 = vpack.c.b16 %v2918, %v2916
        %v2941 = vpack.c.b16 %v2921, %v2919
        %v2942 = vpack.c.b16 %v2922, %v2920
        %v2943 = vpack.c.b16 %v2925, %v2923
        %v2944 = vpack.c.b16 %v2926, %v2924
        %v2945 = vpack.c.b16 %v2929, %v2927
        %v2946 = vpack.c.b16 %v2930, %v2928
        %2963 = vmatprep.subr.bf16.mxu0 %v2946
        %2964 = vmatpush1.bf16.msra.mxu0 %v2945
        %2965 = vmatprep.subr.bf16.mxu0 %v2944
        %2966 = vmatpush1.bf16.msra.mxu0 %v2943
        %2967 = vmatprep.subr.bf16.mxu0 %v2942
        %2968 = vmatpush1.bf16.msra.mxu0 %v2941
        %2969 = vmatprep.subr.bf16.mxu0 %v2940
        %2970 = vmatpush1.bf16.msra.mxu0 %v2939
        %2971 = vmatprep.subr.bf16.mxu0 %v2938
        %2972 = vmatpush1.bf16.msra.mxu0 %v2937
        %2973 = vmatprep.subr.bf16.mxu0 %v2936
        %2974 = vmatpush1.bf16.msra.mxu0 %v2935
        %2975 = vmatprep.subr.bf16.mxu0 %v2934
        %2976 = vmatpush1.bf16.msra.mxu0 %v2933
        %2977 = vmatprep.subr.bf16.mxu0 %v2932
        %2978 = vmatpush1.bf16.msra.mxu0 %v2931
        %2979 = vmatprep.subr.bf16.mxu0 0
        %2980 = vmatpush2.bf16.msra.mxu0 0
        %2981 = vmatprep.subr.bf16.mxu0 0
        %2982 = vmatpush2.bf16.msra.mxu0 0
        %2983 = vmatprep.subr.bf16.mxu0 0
        %2984 = vmatpush2.bf16.msra.mxu0 0
        %2985 = vmatprep.subr.bf16.mxu0 0
        %2986 = vmatpush2.bf16.msra.mxu0 0
        %2987 = vmatprep.subr.bf16.mxu0 0
        %2988 = vmatpush2.bf16.msra.mxu0 0
        %2989 = vmatprep.subr.bf16.mxu0 0
        %2990 = vmatpush2.bf16.msra.mxu0 0
        %2991 = vmatprep.subr.bf16.mxu0 0
        %2992 = vmatpush2.bf16.msra.mxu0 0
        %2993 = vmatprep.subr.bf16.mxu0 0
        %2994 = vmatpush2.bf16.msra.mxu0 0
        %2995 = vmatprep.mubr.bf16.mxu0 0
        %2996 = vmatmul.mubr.bf16.gmra.mxu0 %v2852
        %v2997 = vpop.f32.mrf.mxu0
        %v2998 = vadd.f32 %v2876, %v2997
        %v2999 = vpop.f32.mrf.mxu0
        %v3000 = vadd.f32 %v2880, %v2999
        %v3001 = vpop.f32.mrf.mxu0
        %v3002 = vpop.f32.mrf.mxu0
        %3003 = vdwg.mxu0
        %v3004 = vmax.f32 %v2998, 0.0
        %v3005 = vmax.f32 %v3000, 0.0
        %v3006 = vpack.c.bf16 %v3004, %v3004
        %v3007 = vpack.c.bf16 %v3005, %v3005
        %s3008 = scalar_lea.vmem [#allocation11], 128
        %v3009 = vld [vmem:[%s3008] sm:$0xf]
        %v3010 = vld [vmem:[%s3008 + $0x4] sm:$0xf]
        %v3011 = vld [vmem:[%s3008 + $0x8] sm:$0xf]
        %v3012 = vld [vmem:[%s3008 + $0xc] sm:$0xf]
        %v3013 = vld [vmem:[%s3008 + $0x10] sm:$0xf]
        %v3014 = vld [vmem:[%s3008 + $0x14] sm:$0xf]
        %v3015 = vld [vmem:[%s3008 + $0x18] sm:$0xf]
        %v3016 = vld [vmem:[%s3008 + $0x1c] sm:$0xf]
        %v3017 = vld [vmem:[%s3008 + $0x20] sm:$0xf]
        %v3018 = vld [vmem:[%s3008 + $0x24] sm:$0xf]
        %v3019 = vld [vmem:[%s3008 + $0x28] sm:$0xf]
        %v3020 = vld [vmem:[%s3008 + $0x2c] sm:$0xf]
        %v3021 = vld [vmem:[%s3008 + $0x30] sm:$0xf]
        %v3022 = vld [vmem:[%s3008 + $0x34] sm:$0xf]
        %v3023 = vld [vmem:[%s3008 + $0x38] sm:$0xf]
        %v3024 = vld [vmem:[%s3008 + $0x3c] sm:$0xf]
        %v3025 = vld [vmem:[%s3008 + $0x40] sm:$0xf]
        %v3026 = vld [vmem:[%s3008 + $0x44] sm:$0xf]
        %v3027 = vld [vmem:[%s3008 + $0x48] sm:$0xf]
        %v3028 = vld [vmem:[%s3008 + $0x4c] sm:$0xf]
        %v3029 = vld [vmem:[%s3008 + $0x50] sm:$0xf]
        %v3030 = vld [vmem:[%s3008 + $0x54] sm:$0xf]
        %v3031 = vld [vmem:[%s3008 + $0x58] sm:$0xf]
        %v3032 = vld [vmem:[%s3008 + $0x5c] sm:$0xf]
        %v3033 = vld [vmem:[%s3008 + $0x60] sm:$0xf]
        %v3034 = vld [vmem:[%s3008 + $0x64] sm:$0xf]
        %v3035 = vld [vmem:[%s3008 + $0x68] sm:$0xf]
        %v3036 = vld [vmem:[%s3008 + $0x6c] sm:$0xf]
        %v3037 = vld [vmem:[%s3008 + $0x70] sm:$0xf]
        %v3038 = vld [vmem:[%s3008 + $0x74] sm:$0xf]
        %v3039 = vld [vmem:[%s3008 + $0x78] sm:$0xf]
        %v3040 = vld [vmem:[%s3008 + $0x7c] sm:$0xf]
        %s3041 = scalar_lea.vmem %s10, 1
        %v3042 = vld [vmem:[%s3041] sm:$0x1]
        %v3044 = vlaneseq
        %v3045 = vshrl.u32 %v3044, 7
        %v3046 = vsub.s32 0, %v3045
        %v3047 = vrot.slane %v3042, %v3046
        %v3081 = vunpack.c.l.b16 %v3009
        %v3082 = vunpack.c.l.b16 %v3010
        %v3083 = vunpack.c.l.b16 %v3011
        %v3084 = vunpack.c.l.b16 %v3012
        %v3085 = vunpack.c.l.b16 %v3013
        %v3086 = vunpack.c.l.b16 %v3014
        %v3087 = vunpack.c.l.b16 %v3015
        %v3088 = vunpack.c.l.b16 %v3016
        %v3089 = vunpack.c.l.b16 %v3017
        %v3090 = vunpack.c.l.b16 %v3018
        %v3091 = vunpack.c.l.b16 %v3019
        %v3092 = vunpack.c.l.b16 %v3020
        %v3093 = vunpack.c.l.b16 %v3021
        %v3094 = vunpack.c.l.b16 %v3022
        %v3095 = vunpack.c.l.b16 %v3023
        %v3096 = vunpack.c.l.b16 %v3024
        %v3097 = vunpack.c.l.b16 %v3025
        %v3098 = vunpack.c.l.b16 %v3026
        %v3099 = vunpack.c.l.b16 %v3027
        %v3100 = vunpack.c.l.b16 %v3028
        %v3101 = vunpack.c.l.b16 %v3029
        %v3102 = vunpack.c.l.b16 %v3030
        %v3103 = vunpack.c.l.b16 %v3031
        %v3104 = vunpack.c.l.b16 %v3032
        %v3105 = vunpack.c.l.b16 %v3033
        %v3106 = vunpack.c.l.b16 %v3034
        %v3107 = vunpack.c.l.b16 %v3035
        %v3108 = vunpack.c.l.b16 %v3036
        %v3109 = vunpack.c.l.b16 %v3037
        %v3110 = vunpack.c.l.b16 %v3038
        %v3111 = vunpack.c.l.b16 %v3039
        %v3112 = vunpack.c.l.b16 %v3040
        %v3113 = vpack.c.b16 %v3082, %v3081
        %v3114 = vpack.c.b16 %v3084, %v3083
        %v3115 = vpack.c.b16 %v3086, %v3085
        %v3116 = vpack.c.b16 %v3088, %v3087
        %v3117 = vpack.c.b16 %v3090, %v3089
        %v3118 = vpack.c.b16 %v3092, %v3091
        %v3119 = vpack.c.b16 %v3094, %v3093
        %v3120 = vpack.c.b16 %v3096, %v3095
        %v3121 = vpack.c.b16 %v3098, %v3097
        %v3122 = vpack.c.b16 %v3100, %v3099
        %v3123 = vpack.c.b16 %v3102, %v3101
        %v3124 = vpack.c.b16 %v3104, %v3103
        %v3125 = vpack.c.b16 %v3106, %v3105
        %v3126 = vpack.c.b16 %v3108, %v3107
        %v3127 = vpack.c.b16 %v3110, %v3109
        %v3128 = vpack.c.b16 %v3112, %v3111
        %3145 = vmatprep.subr.bf16.mxu0 0
        %3146 = vmatpush1.bf16.msra.mxu0 %v3120
        %3147 = vmatprep.subr.bf16.mxu0 0
        %3148 = vmatpush1.bf16.msra.mxu0 %v3119
        %3149 = vmatprep.subr.bf16.mxu0 0
        %3150 = vmatpush1.bf16.msra.mxu0 %v3118
        %3151 = vmatprep.subr.bf16.mxu0 0
        %3152 = vmatpush1.bf16.msra.mxu0 %v3117
        %3153 = vmatprep.subr.bf16.mxu0 0
        %3154 = vmatpush1.bf16.msra.mxu0 %v3116
        %3155 = vmatprep.subr.bf16.mxu0 0
        %3156 = vmatpush1.bf16.msra.mxu0 %v3115
        %3157 = vmatprep.subr.bf16.mxu0 0
        %3158 = vmatpush1.bf16.msra.mxu0 %v3114
        %3159 = vmatprep.subr.bf16.mxu0 0
        %3160 = vmatpush1.bf16.msra.mxu0 %v3113
        %3161 = vmatprep.subr.bf16.mxu0 0
        %3162 = vmatpush2.bf16.msra.mxu0 %v3128
        %3163 = vmatprep.subr.bf16.mxu0 0
        %3164 = vmatpush2.bf16.msra.mxu0 %v3127
        %3165 = vmatprep.subr.bf16.mxu0 0
        %3166 = vmatpush2.bf16.msra.mxu0 %v3126
        %3167 = vmatprep.subr.bf16.mxu0 0
        %3168 = vmatpush2.bf16.msra.mxu0 %v3125
        %3169 = vmatprep.subr.bf16.mxu0 0
        %3170 = vmatpush2.bf16.msra.mxu0 %v3124
        %3171 = vmatprep.subr.bf16.mxu0 0
        %3172 = vmatpush2.bf16.msra.mxu0 %v3123
        %3173 = vmatprep.subr.bf16.mxu0 0
        %3174 = vmatpush2.bf16.msra.mxu0 %v3122
        %3175 = vmatprep.subr.bf16.mxu0 0
        %3176 = vmatpush2.bf16.msra.mxu0 %v3121
        %3177 = vmatprep.mubr.bf16.mxu0 %v3007
        %3178 = vmatmul.mubr.bf16.gmra.mxu0 %v3006
        %v3179 = vpop.f32.mrf.mxu0
        %v3180 = vadd.f32 %v3047, %v3179
        %v3181 = vpop.f32.mrf.mxu0
        %v3182 = vpop.f32.mrf.mxu0
        %v3183 = vpop.f32.mrf.mxu0
        %3184 = vdwg.mxu0
        %v3185 = vadd.f32 %v2851, %v3180
        %s3186 = scalar_lea.vmem %s11, 1
        %v3187 = vld [vmem:[%s3186] sm:$0x1]
        %s3188 = scalar_lea.vmem %s12, 1
        %v3189 = vld [vmem:[%s3188] sm:$0x1]
        %3190 = vadd.xlane.f32.xlu0 %v3185
        %v3191 = vpop.xlane.xlu0 %3190
        %v3192 = vmul.f32 %v3191, %v1488
        %v3193 = vsub.f32 %v3185, %v3192
        %v3194 = vmul.f32 %v3193, %v3193
        %3195 = vadd.xlane.f32.xlu0 %v3194
        %v3196 = vpop.xlane.xlu0 %3195
        %v3197 = vmul.f32 %v3196, %v1488
        %v3198 = vadd.f32 %v3197, 1e-05
        %v3199 = vrsqrt.pop %v3198
        %v3200 = vmul.f32 %v3193, %v3199
        %v3202 = vlaneseq
        %v3203 = vshrl.u32 %v3202, 7
        %v3204 = vsub.s32 0, %v3203
        %v3205 = vrot.slane %v3187, %v3204
        %v3207 = vmul.f32 %v3200, %v3205
        %v3209 = vlaneseq
        %v3210 = vshrl.u32 %v3209, 7
        %v3211 = vsub.s32 0, %v3210
        %v3212 = vrot.slane %v3189, %v3211
        %v3214 = vadd.f32 %v3207, %v3212
        %v3215 = vpack.c.bf16 %v3214, %v3214
        %3216 = vst [vmem:[%s528] sm:$0xf] %v3215
        %s3217 = sand.u32 %s319, 1
        %s3218 = scalar_lea.sflag [#allocation4], %s3217
        %s3219 = sand.u32 %s319, 1
        %s3220 = smul.addr %s3219, 4
        %s3221 = scalar_lea.vmem [#allocation13], %s3220
        // Predicated region
        $region97: #{tpu_custom_call.1} parent=71 // pred_check
          %p3222 = pneg %p329
        $region98: #{tpu_custom_call.1} parent=71 // pred_check_branch
          %3224 = sbr.rel (%p3222) target = $region100
        $region99: #{tpu_custom_call.1} parent=71 // pred_region
          %s3226 = ssub.s32 64, 64
          %3227 = vsyncadd %s3218, %s3226
          %s3228 = smul.addr %s33, 64
          %s3229 = scalar_lea.hbm %s13, %s3228
          %s3231 = sshll.u32 %s3221, 4
          %s3232 = int_to_ptr.vmem [resolvable:$true] %s3231
          %3234 = dma.vmem_to_hbm [thread:$0]  %s3232, 64, %s3229, %s3218
        $region100: #{tpu_custom_call.1} parent=71 // pred_fallthru
          _
      $region72: #{tpu_custom_call.1} parent=5 // pred_fallthru
        _
      %p3235 = scmp.le.s32.totalorder 2, %s28
      // Predicated region
      $region101: #{tpu_custom_call.1} parent=5 // pred_check
        %p3236 = pneg %p3235
      $region102: #{tpu_custom_call.1} parent=5 // pred_check_branch
        %3238 = sbr.rel (%p3236) target = $region104
      $region103: #{tpu_custom_call.1} parent=5 // pred_region
        %s3239 = ssub.s32 %s28, 2
        // Predicated region
        $region105: #{tpu_custom_call.1} parent=103 // pred_check
          %p3240 = pneg %p335
        $region106: #{tpu_custom_call.1} parent=103 // pred_check_branch
          %3242 = sbr.rel (%p3240) target = $region108
        $region107: #{tpu_custom_call.1} parent=103 // pred_region
          %s3243 = sand.u32 %s320, 1
          %s3244 = scalar_lea.sflag [#allocation4], %s3243
          %s3245 = sand.u32 %s320, 1
          %s3246 = smul.addr %s3245, 4
          %s3247 = scalar_lea.vmem [#allocation13], %s3246
          %3248 = dma.done %s3244, 64
        $region108: #{tpu_custom_call.1} parent=103 // pred_fallthru
          _
      $region104: #{tpu_custom_call.1} parent=5 // pred_fallthru
        _
    $region6: #{tpu_custom_call.1} parent=1 // loop_footer
      %s32 = sadd.s32 1, %s28
    $region7: #{tpu_custom_call.1} parent=1 // loop_footer_branch
      %27 = sbr.rel target = $region3
    $region8: #{tpu_custom_call.1} parent=1 // loop_exit
      _
    %3249 = vsyncpa [#allocation3], 1
    %s3250 = scalar_lea.sflag [#allocation3], 1
    %3251 = vsyncpa %s3250, 1
    %3252 = vsyncpa [#allocation6], 1
    %3253 = vsyncpa [#allocation9], 1
    %3254 = vsyncpa [#allocation12], 1
    %3255 = vsyncpa [#allocation4], 1
    %s3256 = scalar_lea.sflag [#allocation4], 1
    %3257 = vsyncpa %s3256, 1

</llo_original>
